<compile_context>
chip_gen: v5e
topology: v5e:2x2
jax: 0.10.0
libtpu: 0.0.40
codegen_flags: <defaults>
</compile_context>

<pallas_src>
import functools
import math

import jax
import jax.numpy as jnp
from jax.experimental import pallas as pl
from jax.experimental.pallas import tpu as pltpu


# ---------------------------------------------------------------------------
# Fused per-batch-chunk kernel
# ---------------------------------------------------------------------------

def fused_forward_kernel(feats_ref, valid_ref,
                         ee_w1_ref, ee_b1_ref, ee_w2_ref, ee_b2_ref, pad_ref,
                         c1w_ref, c1b_ref, c2w_ref, c2b_ref,
                         conn_ref, mqk_ref, wv_ref,
                         f1w_ref, f1b_ref, f2w_ref, f2b_ref,
                         lng_ref, lnb_ref, ow_ref, ob_ref,
                         out_ref,
                         *, num_heads, hidden, max_entries, cb, agents,
                         message_steps):
    f32 = jnp.float32
    bf16 = jnp.bfloat16
    H = hidden
    cba = cb * agents            # rows of agent state processed per grid step

    # ---- EntryEncoder MLP over all (entry, batch-in-chunk, agent) rows -----
    feats = feats_ref[...]                                        # bf16 (ME*cba, F)
    h1 = jnp.dot(feats, ee_w1_ref[...],
                 preferred_element_type=f32) + ee_b1_ref[...]
    h1 = h1 * jax.nn.sigmoid(h1)                                  # Swish (f32)
    h2 = jnp.dot(h1.astype(bf16), ee_w2_ref[...],
                 preferred_element_type=f32) + ee_b2_ref[...]
    # pad_token substitution for missing entries (post-MLP, like PyTorch)
    h2 = jnp.where(valid_ref[...] > 0.0, h2, pad_ref[...])        # (ME*cba, H)

    # ---- entry_embed_compression: accumulation of per-entry dots -----------
    # (sublane-aligned row blocks; replaces the non-lane-aligned concat)
    acc_c = jnp.zeros((cba, 2 * H), f32)
    for e in range(max_entries):                                  # static unroll
        blk = h2[e * cba:(e + 1) * cba, :].astype(bf16)           # (cba, H)
        acc_c = acc_c + jnp.dot(blk, c1w_ref[e * H:(e + 1) * H, :],
                                preferred_element_type=f32)
    c1 = acc_c + c1b_ref[...]
    c1 = c1 * jax.nn.sigmoid(c1)                                  # Swish
    h = jnp.dot(c1.astype(bf16), c2w_ref[...],
                preferred_element_type=f32) + c2b_ref[...]        # (cba, H) f32

    # ---- message passing: num_heads DotGAT layers, averaged, x steps -------
    conn2 = conn_ref[...]                                         # (A, A) f32
    inv_nh = 1.0 / num_heads

    for _ in range(message_steps):                                # static unroll
        hb = h.astype(bf16)                                       # (cba, H)
        acc_h = jnp.zeros((cba, H), f32)
        for hd in range(num_heads):                               # static unroll
            # Q/K pre-folded: scores = (h @ M_h) @ h^T + conn  (scale folded in)
            hM = jnp.dot(hb, mqk_ref[hd], preferred_element_type=f32)   # (cba, H)
            v = jnp.dot(hb, wv_ref[hd], preferred_element_type=f32)     # (cba, H)

            if cb == 1:
                s = jax.lax.dot_general(
                    hM.astype(bf16), hb, (((1,), (1,)), ((), ())),
                    preferred_element_type=f32) + conn2                  # (A, A)
                m = jnp.max(s, axis=-1, keepdims=True)
                p = jnp.exp(s - m)
                denom = jnp.sum(p, axis=-1, keepdims=True)
                alpha = p * pl.reciprocal(denom, approx=True)
                # dropout on alpha is a no-op at inference
                o = jnp.dot(alpha.astype(bf16), v.astype(bf16),
                            preferred_element_type=f32)                  # (cba, H)
            else:
                hM3 = hM.astype(bf16).reshape(cb, agents, H)
                h3 = hb.reshape(cb, agents, H)
                s = jnp.einsum('bik,bjk->bij', hM3, h3,
                               preferred_element_type=f32) + conn2[None]
                m = jnp.max(s, axis=-1, keepdims=True)
                p = jnp.exp(s - m)
                denom = jnp.sum(p, axis=-1, keepdims=True)
                alpha = p * pl.reciprocal(denom, approx=True)
                o = jnp.einsum('bij,bjk->bik', alpha.astype(bf16),
                               v.astype(bf16).reshape(cb, agents, H),
                               preferred_element_type=f32).reshape(cba, H)

            # forward_proj: Swish -> Linear -> Swish -> Linear (per head)
            t = o * jax.nn.sigmoid(o)
            t = jnp.dot(t.astype(bf16), f1w_ref[hd],
                        preferred_element_type=f32) + f1b_ref[hd]
            t = t * jax.nn.sigmoid(t)
            t = jnp.dot(t.astype(bf16), f2w_ref[hd],
                        preferred_element_type=f32) + f2b_ref[hd]

            # LayerNorm (eps=1e-5), contiguous H lanes, no slab slicing
            mu = jnp.mean(t, axis=-1, keepdims=True)
            var = jnp.mean((t - mu) ** 2, axis=-1, keepdims=True)
            y = (t - mu) * jax.lax.rsqrt(var + 1e-5) * lng_ref[hd] + lnb_ref[hd]
            acc_h = acc_h + y
        h = acc_h * inv_nh

    # ---- output projection (lane-dense, padded to 128 lanes) ---------------
    y = jnp.dot(h.astype(bf16), ow_ref[...],
                preferred_element_type=f32) + ob_ref[...]
    out_ref[...] = y.astype(out_ref.dtype)


# ---------------------------------------------------------------------------
# Glue: data-dependent nonzero-entry extraction + Fourier positional features
# ---------------------------------------------------------------------------
# TODO(synk): the dynamic-shape nonzero gather + per-agent Python grouping of
# the PyTorch module has no clean Pallas equivalent; it is replaced by a
# fixed-size sort+gather (first `max_entries` nonzero flat indices per agent,
# padded) in plain JAX, which reproduces the truncation / pad semantics.

def extract_entries(x, max_entries, fourier_B):
    B, A, D = x.shape
    s = int(math.sqrt(D))
    idx = jnp.where(x != 0, jnp.arange(D, dtype=jnp.int32)[None, None, :], D)
    sorted_idx = jnp.sort(idx, axis=-1)[:, :, :max_entries]        # (B, A, ME)
    valid = sorted_idx < D
    safe = jnp.where(valid, sorted_idx, 0)
    values = jnp.take_along_axis(x, safe, axis=-1)                 # (B, A, ME)
    values = jnp.where(valid, values, 0.0)
    row = (safe // s).astype(jnp.float32)
    col = (safe % s).astype(jnp.float32)
    coords = jnp.stack([row, col], axis=-1)                        # (B, A, ME, 2)
    proj = 2.0 * math.pi * jnp.einsum('bamc,fc->bamf', coords, fourier_B)
    feats = jnp.concatenate(
        [values[..., None], jnp.sin(proj), jnp.cos(proj)], axis=-1)
    return feats, valid.astype(jnp.float32)


# ---------------------------------------------------------------------------
# Static weight repacking (run ONCE, outside the per-call jit path)
# ---------------------------------------------------------------------------

def prep_params(params, *, out_pad=128):
    bf16 = jnp.bfloat16
    H = params['ee_w1'].shape[1]
    O = params['out_w'].shape[1]
    inv_scale = 1.0 / math.sqrt(H)
    # Pre-fold Q/K:  M_h = Wq_h @ Wk_h^T / sqrt(H)   (scores = (h M_h) h^T)
    m_qk = jnp.einsum('hik,hjk->hij', params['wq'], params['wk']) * inv_scale
    ow = jnp.zeros((H, out_pad), jnp.float32).at[:, :O].set(params['out_w'])
    ob = jnp.zeros((1, out_pad), jnp.float32).at[:, :O].set(params['out_b'])
    return {
        'fourier_B': params['fourier_B'],
        'ee_w1': params['ee_w1'].astype(bf16), 'ee_b1': params['ee_b1'],
        'ee_w2': params['ee_w2'].astype(bf16), 'ee_b2': params['ee_b2'],
        'pad': params['pad'],
        'cmp_w1': params['cmp_w1'].astype(bf16), 'cmp_b1': params['cmp_b1'],
        'cmp_w2': params['cmp_w2'].astype(bf16), 'cmp_b2': params['cmp_b2'],
        'conn': params['conn'],
        'm_qk': m_qk.astype(bf16),
        'wv': params['wv'].astype(bf16),
        'f1w': params['f1w'].astype(bf16), 'f1b': params['f1b'],
        'f2w': params['f2w'].astype(bf16), 'f2b': params['f2b'],
        'lng': params['lng'], 'lnb': params['lnb'],
        'ow': ow.astype(bf16), 'ob': ob,
    }


# ---------------------------------------------------------------------------
# pallas_call wrapper
# ---------------------------------------------------------------------------

def _const_spec(arr):
    nd = arr.ndim
    return pl.BlockSpec(arr.shape, lambda i, nd=nd: (0,) * nd)


def distributed_dot_gat_forward(x, pp, *, max_entries, message_steps,
                                output_dim, chunk_batches=1):
    B, A, D = x.shape
    ME = max_entries
    cb = chunk_batches
    assert B % cb == 0
    nchunks = B // cb
    cba = cb * A
    H = pp['ee_w1'].shape[1]
    nh = pp['wv'].shape[0]
    OP = pp['ow'].shape[1]

    feats, valid = extract_entries(x, ME, pp['fourier_B'])   # (B,A,ME,F),(B,A,ME)
    F = feats.shape[-1]
    # row ordering per chunk: entry-major, then (batch-in-chunk, agent)
    feats2 = jnp.transpose(feats.reshape(nchunks, cb, A, ME, F),
                           (0, 3, 1, 2, 4)).reshape(nchunks * ME * cba, F)
    feats2 = feats2.astype(jnp.bfloat16)      # halve the dominant HBM->VMEM DMA
    valid2 = jnp.transpose(valid.reshape(nchunks, cb, A, ME),
                           (0, 3, 1, 2)).reshape(nchunks * ME * cba, 1)

    weights = (pp['ee_w1'], pp['ee_b1'], pp['ee_w2'], pp['ee_b2'], pp['pad'],
               pp['cmp_w1'], pp['cmp_b1'], pp['cmp_w2'], pp['cmp_b2'],
               pp['conn'], pp['m_qk'], pp['wv'],
               pp['f1w'], pp['f1b'], pp['f2w'], pp['f2b'],
               pp['lng'], pp['lnb'], pp['ow'], pp['ob'])

    kernel = functools.partial(
        fused_forward_kernel, num_heads=nh, hidden=H, max_entries=ME,
        cb=cb, agents=A, message_steps=message_steps)

    in_specs = ([pl.BlockSpec((ME * cba, F), lambda i: (i, 0)),
                 pl.BlockSpec((ME * cba, 1), lambda i: (i, 0))]
                + [_const_spec(w) for w in weights])

    out = pl.pallas_call(
        kernel,
        out_shape=jax.ShapeDtypeStruct((B * A, OP), jnp.float32),
        grid=(nchunks,),
        in_specs=in_specs,
        out_specs=pl.BlockSpec((cba, OP), lambda i: (i, 0)),
        compiler_params=pltpu.CompilerParams(
            dimension_semantics=("parallel",)),
    )(feats2, valid2, *weights)

    return out[:, :output_dim].reshape(B, A, output_dim)


# ---------------------------------------------------------------------------
# Deterministic parameter init (matching module __init__ shapes)
# ---------------------------------------------------------------------------

def init_params(key, *, hidden, output_dim, num_agents, num_heads,
                max_entries, pos_dim=16):
    ks = iter(jax.random.split(key, 32))

    def lin(k, fan_in, shape):
        lim = 1.0 / math.sqrt(fan_in)
        return jax.random.uniform(k, shape, jnp.float32, -lim, lim)

    p = {}
    p['fourier_B'] = jax.random.normal(next(ks), (pos_dim, 2), jnp.float32)
    fin = 1 + 2 * pos_dim
    # EntryEncoder (weights stored transposed: (in, out))
    p['ee_w1'] = lin(next(ks), fin, (fin, hidden))
    p['ee_b1'] = lin(next(ks), fin, (1, hidden))
    p['ee_w2'] = lin(next(ks), hidden, (hidden, hidden))
    p['ee_b2'] = lin(next(ks), hidden, (1, hidden))
    p['pad'] = jnp.zeros((1, hidden), jnp.float32)   # nn.Parameter(torch.zeros(hidden))
    # entry_embed_compression (first weight: (ME*H, 2H), row index = e*H + d)
    cin = max_entries * hidden
    p['cmp_w1'] = lin(next(ks), cin, (cin, 2 * hidden))
    p['cmp_b1'] = lin(next(ks), cin, (1, 2 * hidden))
    p['cmp_w2'] = lin(next(ks), 2 * hidden, (2 * hidden, hidden))
    p['cmp_b2'] = lin(next(ks), 2 * hidden, (1, hidden))
    # connectivity (stands in for watts_strogatz init; only values matter in fwd)
    adj = (jax.random.uniform(next(ks), (num_agents, num_agents)) < 0.5)
    adj = jnp.maximum(adj, adj.T).astype(jnp.float32)
    p['conn'] = adj + 0.01 * jax.random.normal(
        next(ks), (num_agents, num_agents), jnp.float32)
    # GAT heads (stacked over heads; projection weights transposed to (in, out))
    p['wq'] = lin(next(ks), hidden, (num_heads, hidden, hidden))
    p['wk'] = lin(next(ks), hidden, (num_heads, hidden, hidden))
    p['wv'] = lin(next(ks), hidden, (num_heads, hidden, hidden))
    p['f1w'] = lin(next(ks), hidden, (num_heads, hidden, hidden))
    p['f1b'] = lin(next(ks), hidden, (num_heads, 1, hidden))
    p['f2w'] = lin(next(ks), hidden, (num_heads, hidden, hidden))
    p['f2b'] = lin(next(ks), hidden, (num_heads, 1, hidden))
    p['lng'] = jnp.ones((num_heads, 1, hidden), jnp.float32)   # LayerNorm defaults
    p['lnb'] = jnp.zeros((num_heads, 1, hidden), jnp.float32)
    # output projection
    p['out_w'] = lin(next(ks), hidden, (hidden, output_dim))
    p['out_b'] = lin(next(ks), hidden, (1, output_dim))
    return p


# ---------------------------------------------------------------------------

if __name__ == "__main__":
    B, num_agents, D = 2, 8, 16          # D = 4x4 flattened matrix
    hidden, output_dim = 32, 64
    num_heads, message_steps = 2, 3
    max_entries = round(output_dim * 0.5 / (num_agents / 2))   # = 8

    key = jax.random.PRNGKey(0)
    kx, km, kp = jax.random.split(key, 3)
    vals = jax.random.normal(kx, (B, num_agents, D), jnp.float32)
    mask = (jax.random.uniform(km, (B, num_agents, D)) < 0.6).astype(jnp.float32)
    x = vals * mask                       # sparse input, exercises pad_token path

    params = init_params(kp, hidden=hidden, output_dim=output_dim,
                         num_agents=num_agents, num_heads=num_heads,
                         max_entries=max_entries)
    prepped = prep_params(params)         # static repack, once, outside jit

    fwd = jax.jit(functools.partial(distributed_dot_gat_forward,
                                    max_entries=max_entries,
                                    message_steps=message_steps,
                                    output_dim=output_dim,
                                    chunk_batches=1))
    out = fwd(x, prepped)
    out = jax.block_until_ready(out)
    assert out.shape == (B, num_agents, output_dim)
    assert bool(jnp.all(jnp.isfinite(out)))
    print("KERNEL_OK")
</pallas_src>

<mosaic_0001>
module attributes {stable_mosaic.version = 11 : i64} {
  func.func @fused_forward_kernel(%arg0: i32, %arg1: memref<64x33xbf16, #tpu.memory_space<vmem>>, %arg2: memref<64x1xf32, #tpu.memory_space<vmem>>, %arg3: memref<33x32xbf16, #tpu.memory_space<vmem>>, %arg4: memref<1x32xf32, #tpu.memory_space<vmem>>, %arg5: memref<32x32xbf16, #tpu.memory_space<vmem>>, %arg6: memref<1x32xf32, #tpu.memory_space<vmem>>, %arg7: memref<1x32xf32, #tpu.memory_space<vmem>>, %arg8: memref<256x64xbf16, #tpu.memory_space<vmem>>, %arg9: memref<1x64xf32, #tpu.memory_space<vmem>>, %arg10: memref<64x32xbf16, #tpu.memory_space<vmem>>, %arg11: memref<1x32xf32, #tpu.memory_space<vmem>>, %arg12: memref<8x8xf32, #tpu.memory_space<vmem>>, %arg13: memref<2x32x32xbf16, #tpu.memory_space<vmem>>, %arg14: memref<2x32x32xbf16, #tpu.memory_space<vmem>>, %arg15: memref<2x32x32xbf16, #tpu.memory_space<vmem>>, %arg16: memref<2x1x32xf32, #tpu.memory_space<vmem>>, %arg17: memref<2x32x32xbf16, #tpu.memory_space<vmem>>, %arg18: memref<2x1x32xf32, #tpu.memory_space<vmem>>, %arg19: memref<2x1x32xf32, #tpu.memory_space<vmem>>, %arg20: memref<2x1x32xf32, #tpu.memory_space<vmem>>, %arg21: memref<32x128xbf16, #tpu.memory_space<vmem>>, %arg22: memref<1x128xf32, #tpu.memory_space<vmem>>, %arg23: memref<8x128xf32, #tpu.memory_space<vmem>>) attributes {dimension_semantics = [#tpu.dimension_semantics<parallel>], iteration_bounds = array<i64: 2>, scalar_prefetch = 0 : i64, scratch_operands = 0 : i64, tpu.core_type = #tpu.core_type<tc>, window_params = [{transform_indices = @transform_0, window_bounds = array<i64: 64, 33>}, {transform_indices = @transform_1, window_bounds = array<i64: 64, 1>}, {pipeline_mode = #tpu.pipeline_mode<synchronous>, transform_indices = @transform_2, window_bounds = array<i64: 33, 32>}, {pipeline_mode = #tpu.pipeline_mode<synchronous>, transform_indices = @transform_3, window_bounds = array<i64: 1, 32>}, {pipeline_mode = #tpu.pipeline_mode<synchronous>, transform_indices = @transform_4, window_bounds = array<i64: 32, 32>}, {pipeline_mode = #tpu.pipeline_mode<synchronous>, transform_indices = @transform_5, window_bounds = array<i64: 1, 32>}, {pipeline_mode = #tpu.pipeline_mode<synchronous>, transform_indices = @transform_6, window_bounds = array<i64: 1, 32>}, {pipeline_mode = #tpu.pipeline_mode<synchronous>, transform_indices = @transform_7, window_bounds = array<i64: 256, 64>}, {pipeline_mode = #tpu.pipeline_mode<synchronous>, transform_indices = @transform_8, window_bounds = array<i64: 1, 64>}, {pipeline_mode = #tpu.pipeline_mode<synchronous>, transform_indices = @transform_9, window_bounds = array<i64: 64, 32>}, {pipeline_mode = #tpu.pipeline_mode<synchronous>, transform_indices = @transform_10, window_bounds = array<i64: 1, 32>}, {pipeline_mode = #tpu.pipeline_mode<synchronous>, transform_indices = @transform_11, window_bounds = array<i64: 8, 8>}, {pipeline_mode = #tpu.pipeline_mode<synchronous>, transform_indices = @transform_12, window_bounds = array<i64: 2, 32, 32>}, {pipeline_mode = #tpu.pipeline_mode<synchronous>, transform_indices = @transform_13, window_bounds = array<i64: 2, 32, 32>}, {pipeline_mode = #tpu.pipeline_mode<synchronous>, transform_indices = @transform_14, window_bounds = array<i64: 2, 32, 32>}, {pipeline_mode = #tpu.pipeline_mode<synchronous>, transform_indices = @transform_15, window_bounds = array<i64: 2, 1, 32>}, {pipeline_mode = #tpu.pipeline_mode<synchronous>, transform_indices = @transform_16, window_bounds = array<i64: 2, 32, 32>}, {pipeline_mode = #tpu.pipeline_mode<synchronous>, transform_indices = @transform_17, window_bounds = array<i64: 2, 1, 32>}, {pipeline_mode = #tpu.pipeline_mode<synchronous>, transform_indices = @transform_18, window_bounds = array<i64: 2, 1, 32>}, {pipeline_mode = #tpu.pipeline_mode<synchronous>, transform_indices = @transform_19, window_bounds = array<i64: 2, 1, 32>}, {pipeline_mode = #tpu.pipeline_mode<synchronous>, transform_indices = @transform_20, window_bounds = array<i64: 32, 128>}, {pipeline_mode = #tpu.pipeline_mode<synchronous>, transform_indices = @transform_21, window_bounds = array<i64: 1, 128>}, {transform_indices = @transform_22, window_bounds = array<i64: 8, 128>}]} {
    %c0 = arith.constant 0 : index
    %c0_0 = arith.constant 0 : index
    %0 = vector.load %arg1[%c0, %c0_0] : memref<64x33xbf16, #tpu.memory_space<vmem>>, vector<64x33xbf16>
    %c0_1 = arith.constant 0 : index
    %c0_2 = arith.constant 0 : index
    %1 = vector.load %arg3[%c0_1, %c0_2] : memref<33x32xbf16, #tpu.memory_space<vmem>>, vector<33x32xbf16>
    %cst = arith.constant dense<0.000000e+00> : vector<64x32xf32>
    %2 = tpu.matmul %0, %1, %cst {dimension_numbers = #tpu.dot_dimension_numbers<[1], [0], [0], [1], [0, 0, 1, 1], [], []>} : vector<64x33xbf16>, vector<33x32xbf16>, vector<64x32xf32> -> vector<64x32xf32>
    %c0_3 = arith.constant 0 : index
    %c0_4 = arith.constant 0 : index
    %3 = vector.load %arg4[%c0_3, %c0_4] : memref<1x32xf32, #tpu.memory_space<vmem>>, vector<1x32xf32>
    %4 = vector.broadcast %3 : vector<1x32xf32> to vector<64x32xf32>
    %5 = arith.addf %2, %4 : vector<64x32xf32>
    %6 = arith.negf %5 : vector<64x32xf32>
    %7 = math.exp %6 : vector<64x32xf32>
    %cst_5 = arith.constant 1.000000e+00 : f32
    %8 = vector.broadcast %cst_5 : f32 to vector<64x32xf32>
    %9 = arith.addf %8, %7 : vector<64x32xf32>
    %10 = arith.divf %8, %9 : vector<64x32xf32>
    %11 = arith.mulf %5, %10 : vector<64x32xf32>
    %12 = arith.truncf %11 : vector<64x32xf32> to vector<64x32xbf16>
    %c0_6 = arith.constant 0 : index
    %c0_7 = arith.constant 0 : index
    %13 = vector.load %arg5[%c0_6, %c0_7] : memref<32x32xbf16, #tpu.memory_space<vmem>>, vector<32x32xbf16>
    %cst_8 = arith.constant dense<0.000000e+00> : vector<64x32xf32>
    %14 = tpu.matmul %12, %13, %cst_8 {dimension_numbers = #tpu.dot_dimension_numbers<[1], [0], [0], [1], [0, 0, 1, 1], [], []>} : vector<64x32xbf16>, vector<32x32xbf16>, vector<64x32xf32> -> vector<64x32xf32>
    %c0_9 = arith.constant 0 : index
    %c0_10 = arith.constant 0 : index
    %15 = vector.load %arg6[%c0_9, %c0_10] : memref<1x32xf32, #tpu.memory_space<vmem>>, vector<1x32xf32>
    %16 = vector.broadcast %15 : vector<1x32xf32> to vector<64x32xf32>
    %17 = arith.addf %14, %16 : vector<64x32xf32>
    %c0_11 = arith.constant 0 : index
    %c0_12 = arith.constant 0 : index
    %18 = vector.load %arg2[%c0_11, %c0_12] : memref<64x1xf32, #tpu.memory_space<vmem>>, vector<64x1xf32>
    %cst_13 = arith.constant 0.000000e+00 : f32
    %19 = vector.broadcast %cst_13 : f32 to vector<64x1xf32>
    %20 = arith.cmpf ogt, %18, %19 : vector<64x1xf32>
    %c0_14 = arith.constant 0 : index
    %c0_15 = arith.constant 0 : index
    %21 = vector.load %arg7[%c0_14, %c0_15] : memref<1x32xf32, #tpu.memory_space<vmem>>, vector<1x32xf32>
    %22 = vector.shape_cast %20 : vector<64x1xi1> to vector<64x1xi1>
    %23 = vector.broadcast %22 : vector<64x1xi1> to vector<64x32xi1>
    %24 = vector.shape_cast %21 : vector<1x32xf32> to vector<1x32xf32>
    %25 = vector.broadcast %24 : vector<1x32xf32> to vector<64x32xf32>
    %26 = arith.select %23, %17, %25 : vector<64x32xi1>, vector<64x32xf32>
    %cst_16 = arith.constant 0.000000e+00 : f32
    %27 = vector.broadcast %cst_16 : f32 to vector<8x64xf32>
    %28 = vector.extract_strided_slice %26 {offsets = [0, 0], sizes = [8, 32], strides = [1, 1]} : vector<64x32xf32> to vector<8x32xf32>
    %29 = arith.truncf %28 : vector<8x32xf32> to vector<8x32xbf16>
    %c0_17 = arith.constant 0 : index
    %c0_18 = arith.constant 0 : index
    %30 = vector.load %arg8[%c0_17, %c0_18] : memref<256x64xbf16, #tpu.memory_space<vmem>>, vector<32x64xbf16>
    %cst_19 = arith.constant dense<0.000000e+00> : vector<8x64xf32>
    %31 = tpu.matmul %29, %30, %cst_19 {dimension_numbers = #tpu.dot_dimension_numbers<[1], [0], [0], [1], [0, 0, 1, 1], [], []>} : vector<8x32xbf16>, vector<32x64xbf16>, vector<8x64xf32> -> vector<8x64xf32>
    %32 = arith.addf %27, %31 : vector<8x64xf32>
    %33 = vector.extract_strided_slice %26 {offsets = [8, 0], sizes = [8, 32], strides = [1, 1]} : vector<64x32xf32> to vector<8x32xf32>
    %34 = arith.truncf %33 : vector<8x32xf32> to vector<8x32xbf16>
    %c32 = arith.constant 32 : index
    %c0_20 = arith.constant 0 : index
    %35 = vector.load %arg8[%c32, %c0_20] : memref<256x64xbf16, #tpu.memory_space<vmem>>, vector<32x64xbf16>
    %cst_21 = arith.constant dense<0.000000e+00> : vector<8x64xf32>
    %36 = tpu.matmul %34, %35, %cst_21 {dimension_numbers = #tpu.dot_dimension_numbers<[1], [0], [0], [1], [0, 0, 1, 1], [], []>} : vector<8x32xbf16>, vector<32x64xbf16>, vector<8x64xf32> -> vector<8x64xf32>
    %37 = arith.addf %32, %36 : vector<8x64xf32>
    %38 = vector.extract_strided_slice %26 {offsets = [16, 0], sizes = [8, 32], strides = [1, 1]} : vector<64x32xf32> to vector<8x32xf32>
    %39 = arith.truncf %38 : vector<8x32xf32> to vector<8x32xbf16>
    %c64 = arith.constant 64 : index
    %c0_22 = arith.constant 0 : index
    %40 = vector.load %arg8[%c64, %c0_22] : memref<256x64xbf16, #tpu.memory_space<vmem>>, vector<32x64xbf16>
    %cst_23 = arith.constant dense<0.000000e+00> : vector<8x64xf32>
    %41 = tpu.matmul %39, %40, %cst_23 {dimension_numbers = #tpu.dot_dimension_numbers<[1], [0], [0], [1], [0, 0, 1, 1], [], []>} : vector<8x32xbf16>, vector<32x64xbf16>, vector<8x64xf32> -> vector<8x64xf32>
    %42 = arith.addf %37, %41 : vector<8x64xf32>
    %43 = vector.extract_strided_slice %26 {offsets = [24, 0], sizes = [8, 32], strides = [1, 1]} : vector<64x32xf32> to vector<8x32xf32>
    %44 = arith.truncf %43 : vector<8x32xf32> to vector<8x32xbf16>
    %c96 = arith.constant 96 : index
    %c0_24 = arith.constant 0 : index
    %45 = vector.load %arg8[%c96, %c0_24] : memref<256x64xbf16, #tpu.memory_space<vmem>>, vector<32x64xbf16>
    %cst_25 = arith.constant dense<0.000000e+00> : vector<8x64xf32>
    %46 = tpu.matmul %44, %45, %cst_25 {dimension_numbers = #tpu.dot_dimension_numbers<[1], [0], [0], [1], [0, 0, 1, 1], [], []>} : vector<8x32xbf16>, vector<32x64xbf16>, vector<8x64xf32> -> vector<8x64xf32>
    %47 = arith.addf %42, %46 : vector<8x64xf32>
    %48 = vector.extract_strided_slice %26 {offsets = [32, 0], sizes = [8, 32], strides = [1, 1]} : vector<64x32xf32> to vector<8x32xf32>
    %49 = arith.truncf %48 : vector<8x32xf32> to vector<8x32xbf16>
    %c128 = arith.constant 128 : index
    %c0_26 = arith.constant 0 : index
    %50 = vector.load %arg8[%c128, %c0_26] : memref<256x64xbf16, #tpu.memory_space<vmem>>, vector<32x64xbf16>
    %cst_27 = arith.constant dense<0.000000e+00> : vector<8x64xf32>
    %51 = tpu.matmul %49, %50, %cst_27 {dimension_numbers = #tpu.dot_dimension_numbers<[1], [0], [0], [1], [0, 0, 1, 1], [], []>} : vector<8x32xbf16>, vector<32x64xbf16>, vector<8x64xf32> -> vector<8x64xf32>
    %52 = arith.addf %47, %51 : vector<8x64xf32>
    %53 = vector.extract_strided_slice %26 {offsets = [40, 0], sizes = [8, 32], strides = [1, 1]} : vector<64x32xf32> to vector<8x32xf32>
    %54 = arith.truncf %53 : vector<8x32xf32> to vector<8x32xbf16>
    %c160 = arith.constant 160 : index
    %c0_28 = arith.constant 0 : index
    %55 = vector.load %arg8[%c160, %c0_28] : memref<256x64xbf16, #tpu.memory_space<vmem>>, vector<32x64xbf16>
    %cst_29 = arith.constant dense<0.000000e+00> : vector<8x64xf32>
    %56 = tpu.matmul %54, %55, %cst_29 {dimension_numbers = #tpu.dot_dimension_numbers<[1], [0], [0], [1], [0, 0, 1, 1], [], []>} : vector<8x32xbf16>, vector<32x64xbf16>, vector<8x64xf32> -> vector<8x64xf32>
    %57 = arith.addf %52, %56 : vector<8x64xf32>
    %58 = vector.extract_strided_slice %26 {offsets = [48, 0], sizes = [8, 32], strides = [1, 1]} : vector<64x32xf32> to vector<8x32xf32>
    %59 = arith.truncf %58 : vector<8x32xf32> to vector<8x32xbf16>
    %c192 = arith.constant 192 : index
    %c0_30 = arith.constant 0 : index
    %60 = vector.load %arg8[%c192, %c0_30] : memref<256x64xbf16, #tpu.memory_space<vmem>>, vector<32x64xbf16>
    %cst_31 = arith.constant dense<0.000000e+00> : vector<8x64xf32>
    %61 = tpu.matmul %59, %60, %cst_31 {dimension_numbers = #tpu.dot_dimension_numbers<[1], [0], [0], [1], [0, 0, 1, 1], [], []>} : vector<8x32xbf16>, vector<32x64xbf16>, vector<8x64xf32> -> vector<8x64xf32>
    %62 = arith.addf %57, %61 : vector<8x64xf32>
    %63 = vector.extract_strided_slice %26 {offsets = [56, 0], sizes = [8, 32], strides = [1, 1]} : vector<64x32xf32> to vector<8x32xf32>
    %64 = arith.truncf %63 : vector<8x32xf32> to vector<8x32xbf16>
    %c224 = arith.constant 224 : index
    %c0_32 = arith.constant 0 : index
    %65 = vector.load %arg8[%c224, %c0_32] : memref<256x64xbf16, #tpu.memory_space<vmem>>, vector<32x64xbf16>
    %cst_33 = arith.constant dense<0.000000e+00> : vector<8x64xf32>
    %66 = tpu.matmul %64, %65, %cst_33 {dimension_numbers = #tpu.dot_dimension_numbers<[1], [0], [0], [1], [0, 0, 1, 1], [], []>} : vector<8x32xbf16>, vector<32x64xbf16>, vector<8x64xf32> -> vector<8x64xf32>
    %67 = arith.addf %62, %66 : vector<8x64xf32>
    %c0_34 = arith.constant 0 : index
    %c0_35 = arith.constant 0 : index
    %68 = vector.load %arg9[%c0_34, %c0_35] : memref<1x64xf32, #tpu.memory_space<vmem>>, vector<1x64xf32>
    %69 = vector.broadcast %68 : vector<1x64xf32> to vector<8x64xf32>
    %70 = arith.addf %67, %69 : vector<8x64xf32>
    %71 = arith.negf %70 : vector<8x64xf32>
    %72 = math.exp %71 : vector<8x64xf32>
    %cst_36 = arith.constant 1.000000e+00 : f32
    %73 = vector.broadcast %cst_36 : f32 to vector<8x64xf32>
    %74 = arith.addf %73, %72 : vector<8x64xf32>
    %75 = arith.divf %73, %74 : vector<8x64xf32>
    %76 = arith.mulf %70, %75 : vector<8x64xf32>
    %77 = arith.truncf %76 : vector<8x64xf32> to vector<8x64xbf16>
    %c0_37 = arith.constant 0 : index
    %c0_38 = arith.constant 0 : index
    %78 = vector.load %arg10[%c0_37, %c0_38] : memref<64x32xbf16, #tpu.memory_space<vmem>>, vector<64x32xbf16>
    %cst_39 = arith.constant dense<0.000000e+00> : vector<8x32xf32>
    %79 = tpu.matmul %77, %78, %cst_39 {dimension_numbers = #tpu.dot_dimension_numbers<[1], [0], [0], [1], [0, 0, 1, 1], [], []>} : vector<8x64xbf16>, vector<64x32xbf16>, vector<8x32xf32> -> vector<8x32xf32>
    %c0_40 = arith.constant 0 : index
    %c0_41 = arith.constant 0 : index
    %80 = vector.load %arg11[%c0_40, %c0_41] : memref<1x32xf32, #tpu.memory_space<vmem>>, vector<1x32xf32>
    %81 = vector.broadcast %80 : vector<1x32xf32> to vector<8x32xf32>
    %82 = arith.addf %79, %81 : vector<8x32xf32>
    %c0_42 = arith.constant 0 : index
    %c0_43 = arith.constant 0 : index
    %83 = vector.load %arg12[%c0_42, %c0_43] : memref<8x8xf32, #tpu.memory_space<vmem>>, vector<8x8xf32>
    %84 = arith.truncf %82 : vector<8x32xf32> to vector<8x32xbf16>
    %cst_44 = arith.constant 0.000000e+00 : f32
    %85 = vector.broadcast %cst_44 : f32 to vector<8x32xf32>
    %c0_45 = arith.constant 0 : index
    %c0_46 = arith.constant 0 : index
    %c0_47 = arith.constant 0 : index
    %86 = vector.load %arg13[%c0_45, %c0_46, %c0_47] : memref<2x32x32xbf16, #tpu.memory_space<vmem>>, vector<1x32x32xbf16>
    %87 = vector.shape_cast %86 : vector<1x32x32xbf16> to vector<32x32xbf16>
    %cst_48 = arith.constant dense<0.000000e+00> : vector<8x32xf32>
    %88 = tpu.matmul %84, %87, %cst_48 {dimension_numbers = #tpu.dot_dimension_numbers<[1], [0], [0], [1], [0, 0, 1, 1], [], []>} : vector<8x32xbf16>, vector<32x32xbf16>, vector<8x32xf32> -> vector<8x32xf32>
    %c0_49 = arith.constant 0 : index
    %c0_50 = arith.constant 0 : index
    %c0_51 = arith.constant 0 : index
    %89 = vector.load %arg14[%c0_49, %c0_50, %c0_51] : memref<2x32x32xbf16, #tpu.memory_space<vmem>>, vector<1x32x32xbf16>
    %90 = vector.shape_cast %89 : vector<1x32x32xbf16> to vector<32x32xbf16>
    %cst_52 = arith.constant dense<0.000000e+00> : vector<8x32xf32>
    %91 = tpu.matmul %84, %90, %cst_52 {dimension_numbers = #tpu.dot_dimension_numbers<[1], [0], [0], [1], [0, 0, 1, 1], [], []>} : vector<8x32xbf16>, vector<32x32xbf16>, vector<8x32xf32> -> vector<8x32xf32>
    %92 = arith.truncf %88 : vector<8x32xf32> to vector<8x32xbf16>
    %cst_53 = arith.constant dense<0.000000e+00> : vector<8x8xf32>
    %93 = tpu.matmul %92, %84, %cst_53 {dimension_numbers = #tpu.dot_dimension_numbers<[1], [1], [0], [0], [0, 0, 1, 0], [], []>} : vector<8x32xbf16>, vector<8x32xbf16>, vector<8x8xf32> -> vector<8x8xf32>
    %94 = arith.addf %93, %83 : vector<8x8xf32>
    %cst_54 = arith.constant dense<0xFF800000> : vector<8xf32>
    %95 = vector.multi_reduction <maximumf>, %94, %cst_54 [1] : vector<8x8xf32> to vector<8xf32>
    %96 = vector.shape_cast %95 : vector<8xf32> to vector<8x1xf32>
    %97 = vector.broadcast %96 : vector<8x1xf32> to vector<8x8xf32>
    %98 = arith.subf %94, %97 : vector<8x8xf32>
    %99 = math.exp %98 : vector<8x8xf32>
    %cst_55 = arith.constant dense<0.000000e+00> : vector<8xf32>
    %100 = vector.multi_reduction <add>, %99, %cst_55 [1] : vector<8x8xf32> to vector<8xf32>
    %101 = vector.shape_cast %100 : vector<8xf32> to vector<8x1xf32>
    %102 = tpu.reciprocal %101 {approx = true} : vector<8x1xf32> -> vector<8x1xf32>
    %103 = vector.broadcast %102 : vector<8x1xf32> to vector<8x8xf32>
    %104 = arith.mulf %99, %103 : vector<8x8xf32>
    %105 = arith.truncf %104 : vector<8x8xf32> to vector<8x8xbf16>
    %106 = arith.truncf %91 : vector<8x32xf32> to vector<8x32xbf16>
    %cst_56 = arith.constant dense<0.000000e+00> : vector<8x32xf32>
    %107 = tpu.matmul %105, %106, %cst_56 {dimension_numbers = #tpu.dot_dimension_numbers<[1], [0], [0], [1], [0, 0, 1, 1], [], []>} : vector<8x8xbf16>, vector<8x32xbf16>, vector<8x32xf32> -> vector<8x32xf32>
    %108 = arith.negf %107 : vector<8x32xf32>
    %109 = math.exp %108 : vector<8x32xf32>
    %cst_57 = arith.constant 1.000000e+00 : f32
    %110 = vector.broadcast %cst_57 : f32 to vector<8x32xf32>
    %111 = arith.addf %110, %109 : vector<8x32xf32>
    %112 = arith.divf %110, %111 : vector<8x32xf32>
    %113 = arith.mulf %107, %112 : vector<8x32xf32>
    %114 = arith.truncf %113 : vector<8x32xf32> to vector<8x32xbf16>
    %c0_58 = arith.constant 0 : index
    %c0_59 = arith.constant 0 : index
    %c0_60 = arith.constant 0 : index
    %115 = vector.load %arg15[%c0_58, %c0_59, %c0_60] : memref<2x32x32xbf16, #tpu.memory_space<vmem>>, vector<1x32x32xbf16>
    %116 = vector.shape_cast %115 : vector<1x32x32xbf16> to vector<32x32xbf16>
    %cst_61 = arith.constant dense<0.000000e+00> : vector<8x32xf32>
    %117 = tpu.matmul %114, %116, %cst_61 {dimension_numbers = #tpu.dot_dimension_numbers<[1], [0], [0], [1], [0, 0, 1, 1], [], []>} : vector<8x32xbf16>, vector<32x32xbf16>, vector<8x32xf32> -> vector<8x32xf32>
    %c0_62 = arith.constant 0 : index
    %c0_63 = arith.constant 0 : index
    %c0_64 = arith.constant 0 : index
    %118 = vector.load %arg16[%c0_62, %c0_63, %c0_64] : memref<2x1x32xf32, #tpu.memory_space<vmem>>, vector<1x1x32xf32>
    %119 = vector.shape_cast %118 : vector<1x1x32xf32> to vector<1x32xf32>
    %120 = vector.broadcast %119 : vector<1x32xf32> to vector<8x32xf32>
    %121 = arith.addf %117, %120 : vector<8x32xf32>
    %122 = arith.negf %121 : vector<8x32xf32>
    %123 = math.exp %122 : vector<8x32xf32>
    %cst_65 = arith.constant 1.000000e+00 : f32
    %124 = vector.broadcast %cst_65 : f32 to vector<8x32xf32>
    %125 = arith.addf %124, %123 : vector<8x32xf32>
    %126 = arith.divf %124, %125 : vector<8x32xf32>
    %127 = arith.mulf %121, %126 : vector<8x32xf32>
    %128 = arith.truncf %127 : vector<8x32xf32> to vector<8x32xbf16>
    %c0_66 = arith.constant 0 : index
    %c0_67 = arith.constant 0 : index
    %c0_68 = arith.constant 0 : index
    %129 = vector.load %arg17[%c0_66, %c0_67, %c0_68] : memref<2x32x32xbf16, #tpu.memory_space<vmem>>, vector<1x32x32xbf16>
    %130 = vector.shape_cast %129 : vector<1x32x32xbf16> to vector<32x32xbf16>
    %cst_69 = arith.constant dense<0.000000e+00> : vector<8x32xf32>
    %131 = tpu.matmul %128, %130, %cst_69 {dimension_numbers = #tpu.dot_dimension_numbers<[1], [0], [0], [1], [0, 0, 1, 1], [], []>} : vector<8x32xbf16>, vector<32x32xbf16>, vector<8x32xf32> -> vector<8x32xf32>
    %c0_70 = arith.constant 0 : index
    %c0_71 = arith.constant 0 : index
    %c0_72 = arith.constant 0 : index
    %132 = vector.load %arg18[%c0_70, %c0_71, %c0_72] : memref<2x1x32xf32, #tpu.memory_space<vmem>>, vector<1x1x32xf32>
    %133 = vector.shape_cast %132 : vector<1x1x32xf32> to vector<1x32xf32>
    %134 = vector.broadcast %133 : vector<1x32xf32> to vector<8x32xf32>
    %135 = arith.addf %131, %134 : vector<8x32xf32>
    %cst_73 = arith.constant dense<0.000000e+00> : vector<8xf32>
    %136 = vector.multi_reduction <add>, %135, %cst_73 [1] : vector<8x32xf32> to vector<8xf32>
    %137 = vector.shape_cast %136 : vector<8xf32> to vector<8x1xf32>
    %cst_74 = arith.constant 3.200000e+01 : f32
    %138 = vector.broadcast %cst_74 : f32 to vector<8x1xf32>
    %139 = arith.divf %137, %138 : vector<8x1xf32>
    %140 = vector.broadcast %139 : vector<8x1xf32> to vector<8x32xf32>
    %141 = arith.subf %135, %140 : vector<8x32xf32>
    %142 = arith.mulf %141, %141 : vector<8x32xf32>
    %cst_75 = arith.constant dense<0.000000e+00> : vector<8xf32>
    %143 = vector.multi_reduction <add>, %142, %cst_75 [1] : vector<8x32xf32> to vector<8xf32>
    %144 = vector.shape_cast %143 : vector<8xf32> to vector<8x1xf32>
    %cst_76 = arith.constant 3.200000e+01 : f32
    %145 = vector.broadcast %cst_76 : f32 to vector<8x1xf32>
    %146 = arith.divf %144, %145 : vector<8x1xf32>
    %147 = vector.broadcast %139 : vector<8x1xf32> to vector<8x32xf32>
    %148 = arith.subf %135, %147 : vector<8x32xf32>
    %cst_77 = arith.constant 9.99999974E-6 : f32
    %149 = vector.broadcast %cst_77 : f32 to vector<8x1xf32>
    %150 = arith.addf %146, %149 : vector<8x1xf32>
    %151 = math.rsqrt %150 : vector<8x1xf32>
    %152 = vector.broadcast %151 : vector<8x1xf32> to vector<8x32xf32>
    %153 = arith.mulf %148, %152 : vector<8x32xf32>
    %c0_78 = arith.constant 0 : index
    %c0_79 = arith.constant 0 : index
    %c0_80 = arith.constant 0 : index
    %154 = vector.load %arg19[%c0_78, %c0_79, %c0_80] : memref<2x1x32xf32, #tpu.memory_space<vmem>>, vector<1x1x32xf32>
    %155 = vector.shape_cast %154 : vector<1x1x32xf32> to vector<1x32xf32>
    %156 = vector.broadcast %155 : vector<1x32xf32> to vector<8x32xf32>
    %157 = arith.mulf %153, %156 : vector<8x32xf32>
    %c0_81 = arith.constant 0 : index
    %c0_82 = arith.constant 0 : index
    %c0_83 = arith.constant 0 : index
    %158 = vector.load %arg20[%c0_81, %c0_82, %c0_83] : memref<2x1x32xf32, #tpu.memory_space<vmem>>, vector<1x1x32xf32>
    %159 = vector.shape_cast %158 : vector<1x1x32xf32> to vector<1x32xf32>
    %160 = vector.broadcast %159 : vector<1x32xf32> to vector<8x32xf32>
    %161 = arith.addf %157, %160 : vector<8x32xf32>
    %162 = arith.addf %85, %161 : vector<8x32xf32>
    %c1 = arith.constant 1 : index
    %c0_84 = arith.constant 0 : index
    %c0_85 = arith.constant 0 : index
    %163 = vector.load %arg13[%c1, %c0_84, %c0_85] : memref<2x32x32xbf16, #tpu.memory_space<vmem>>, vector<1x32x32xbf16>
    %164 = vector.shape_cast %163 : vector<1x32x32xbf16> to vector<32x32xbf16>
    %cst_86 = arith.constant dense<0.000000e+00> : vector<8x32xf32>
    %165 = tpu.matmul %84, %164, %cst_86 {dimension_numbers = #tpu.dot_dimension_numbers<[1], [0], [0], [1], [0, 0, 1, 1], [], []>} : vector<8x32xbf16>, vector<32x32xbf16>, vector<8x32xf32> -> vector<8x32xf32>
    %c1_87 = arith.constant 1 : index
    %c0_88 = arith.constant 0 : index
    %c0_89 = arith.constant 0 : index
    %166 = vector.load %arg14[%c1_87, %c0_88, %c0_89] : memref<2x32x32xbf16, #tpu.memory_space<vmem>>, vector<1x32x32xbf16>
    %167 = vector.shape_cast %166 : vector<1x32x32xbf16> to vector<32x32xbf16>
    %cst_90 = arith.constant dense<0.000000e+00> : vector<8x32xf32>
    %168 = tpu.matmul %84, %167, %cst_90 {dimension_numbers = #tpu.dot_dimension_numbers<[1], [0], [0], [1], [0, 0, 1, 1], [], []>} : vector<8x32xbf16>, vector<32x32xbf16>, vector<8x32xf32> -> vector<8x32xf32>
    %169 = arith.truncf %165 : vector<8x32xf32> to vector<8x32xbf16>
    %cst_91 = arith.constant dense<0.000000e+00> : vector<8x8xf32>
    %170 = tpu.matmul %169, %84, %cst_91 {dimension_numbers = #tpu.dot_dimension_numbers<[1], [1], [0], [0], [0, 0, 1, 0], [], []>} : vector<8x32xbf16>, vector<8x32xbf16>, vector<8x8xf32> -> vector<8x8xf32>
    %171 = arith.addf %170, %83 : vector<8x8xf32>
    %cst_92 = arith.constant dense<0xFF800000> : vector<8xf32>
    %172 = vector.multi_reduction <maximumf>, %171, %cst_92 [1] : vector<8x8xf32> to vector<8xf32>
    %173 = vector.shape_cast %172 : vector<8xf32> to vector<8x1xf32>
    %174 = vector.broadcast %173 : vector<8x1xf32> to vector<8x8xf32>
    %175 = arith.subf %171, %174 : vector<8x8xf32>
    %176 = math.exp %175 : vector<8x8xf32>
    %cst_93 = arith.constant dense<0.000000e+00> : vector<8xf32>
    %177 = vector.multi_reduction <add>, %176, %cst_93 [1] : vector<8x8xf32> to vector<8xf32>
    %178 = vector.shape_cast %177 : vector<8xf32> to vector<8x1xf32>
    %179 = tpu.reciprocal %178 {approx = true} : vector<8x1xf32> -> vector<8x1xf32>
    %180 = vector.broadcast %179 : vector<8x1xf32> to vector<8x8xf32>
    %181 = arith.mulf %176, %180 : vector<8x8xf32>
    %182 = arith.truncf %181 : vector<8x8xf32> to vector<8x8xbf16>
    %183 = arith.truncf %168 : vector<8x32xf32> to vector<8x32xbf16>
    %cst_94 = arith.constant dense<0.000000e+00> : vector<8x32xf32>
    %184 = tpu.matmul %182, %183, %cst_94 {dimension_numbers = #tpu.dot_dimension_numbers<[1], [0], [0], [1], [0, 0, 1, 1], [], []>} : vector<8x8xbf16>, vector<8x32xbf16>, vector<8x32xf32> -> vector<8x32xf32>
    %185 = arith.negf %184 : vector<8x32xf32>
    %186 = math.exp %185 : vector<8x32xf32>
    %cst_95 = arith.constant 1.000000e+00 : f32
    %187 = vector.broadcast %cst_95 : f32 to vector<8x32xf32>
    %188 = arith.addf %187, %186 : vector<8x32xf32>
    %189 = arith.divf %187, %188 : vector<8x32xf32>
    %190 = arith.mulf %184, %189 : vector<8x32xf32>
    %191 = arith.truncf %190 : vector<8x32xf32> to vector<8x32xbf16>
    %c1_96 = arith.constant 1 : index
    %c0_97 = arith.constant 0 : index
    %c0_98 = arith.constant 0 : index
    %192 = vector.load %arg15[%c1_96, %c0_97, %c0_98] : memref<2x32x32xbf16, #tpu.memory_space<vmem>>, vector<1x32x32xbf16>
    %193 = vector.shape_cast %192 : vector<1x32x32xbf16> to vector<32x32xbf16>
    %cst_99 = arith.constant dense<0.000000e+00> : vector<8x32xf32>
    %194 = tpu.matmul %191, %193, %cst_99 {dimension_numbers = #tpu.dot_dimension_numbers<[1], [0], [0], [1], [0, 0, 1, 1], [], []>} : vector<8x32xbf16>, vector<32x32xbf16>, vector<8x32xf32> -> vector<8x32xf32>
    %c1_100 = arith.constant 1 : index
    %c0_101 = arith.constant 0 : index
    %c0_102 = arith.constant 0 : index
    %195 = vector.load %arg16[%c1_100, %c0_101, %c0_102] : memref<2x1x32xf32, #tpu.memory_space<vmem>>, vector<1x1x32xf32>
    %196 = vector.shape_cast %195 : vector<1x1x32xf32> to vector<1x32xf32>
    %197 = vector.broadcast %196 : vector<1x32xf32> to vector<8x32xf32>
    %198 = arith.addf %194, %197 : vector<8x32xf32>
    %199 = arith.negf %198 : vector<8x32xf32>
    %200 = math.exp %199 : vector<8x32xf32>
    %cst_103 = arith.constant 1.000000e+00 : f32
    %201 = vector.broadcast %cst_103 : f32 to vector<8x32xf32>
    %202 = arith.addf %201, %200 : vector<8x32xf32>
    %203 = arith.divf %201, %202 : vector<8x32xf32>
    %204 = arith.mulf %198, %203 : vector<8x32xf32>
    %205 = arith.truncf %204 : vector<8x32xf32> to vector<8x32xbf16>
    %c1_104 = arith.constant 1 : index
    %c0_105 = arith.constant 0 : index
    %c0_106 = arith.constant 0 : index
    %206 = vector.load %arg17[%c1_104, %c0_105, %c0_106] : memref<2x32x32xbf16, #tpu.memory_space<vmem>>, vector<1x32x32xbf16>
    %207 = vector.shape_cast %206 : vector<1x32x32xbf16> to vector<32x32xbf16>
    %cst_107 = arith.constant dense<0.000000e+00> : vector<8x32xf32>
    %208 = tpu.matmul %205, %207, %cst_107 {dimension_numbers = #tpu.dot_dimension_numbers<[1], [0], [0], [1], [0, 0, 1, 1], [], []>} : vector<8x32xbf16>, vector<32x32xbf16>, vector<8x32xf32> -> vector<8x32xf32>
    %c1_108 = arith.constant 1 : index
    %c0_109 = arith.constant 0 : index
    %c0_110 = arith.constant 0 : index
    %209 = vector.load %arg18[%c1_108, %c0_109, %c0_110] : memref<2x1x32xf32, #tpu.memory_space<vmem>>, vector<1x1x32xf32>
    %210 = vector.shape_cast %209 : vector<1x1x32xf32> to vector<1x32xf32>
    %211 = vector.broadcast %210 : vector<1x32xf32> to vector<8x32xf32>
    %212 = arith.addf %208, %211 : vector<8x32xf32>
    %cst_111 = arith.constant dense<0.000000e+00> : vector<8xf32>
    %213 = vector.multi_reduction <add>, %212, %cst_111 [1] : vector<8x32xf32> to vector<8xf32>
    %214 = vector.shape_cast %213 : vector<8xf32> to vector<8x1xf32>
    %cst_112 = arith.constant 3.200000e+01 : f32
    %215 = vector.broadcast %cst_112 : f32 to vector<8x1xf32>
    %216 = arith.divf %214, %215 : vector<8x1xf32>
    %217 = vector.broadcast %216 : vector<8x1xf32> to vector<8x32xf32>
    %218 = arith.subf %212, %217 : vector<8x32xf32>
    %219 = arith.mulf %218, %218 : vector<8x32xf32>
    %cst_113 = arith.constant dense<0.000000e+00> : vector<8xf32>
    %220 = vector.multi_reduction <add>, %219, %cst_113 [1] : vector<8x32xf32> to vector<8xf32>
    %221 = vector.shape_cast %220 : vector<8xf32> to vector<8x1xf32>
    %cst_114 = arith.constant 3.200000e+01 : f32
    %222 = vector.broadcast %cst_114 : f32 to vector<8x1xf32>
    %223 = arith.divf %221, %222 : vector<8x1xf32>
    %224 = vector.broadcast %216 : vector<8x1xf32> to vector<8x32xf32>
    %225 = arith.subf %212, %224 : vector<8x32xf32>
    %cst_115 = arith.constant 9.99999974E-6 : f32
    %226 = vector.broadcast %cst_115 : f32 to vector<8x1xf32>
    %227 = arith.addf %223, %226 : vector<8x1xf32>
    %228 = math.rsqrt %227 : vector<8x1xf32>
    %229 = vector.broadcast %228 : vector<8x1xf32> to vector<8x32xf32>
    %230 = arith.mulf %225, %229 : vector<8x32xf32>
    %c1_116 = arith.constant 1 : index
    %c0_117 = arith.constant 0 : index
    %c0_118 = arith.constant 0 : index
    %231 = vector.load %arg19[%c1_116, %c0_117, %c0_118] : memref<2x1x32xf32, #tpu.memory_space<vmem>>, vector<1x1x32xf32>
    %232 = vector.shape_cast %231 : vector<1x1x32xf32> to vector<1x32xf32>
    %233 = vector.broadcast %232 : vector<1x32xf32> to vector<8x32xf32>
    %234 = arith.mulf %230, %233 : vector<8x32xf32>
    %c1_119 = arith.constant 1 : index
    %c0_120 = arith.constant 0 : index
    %c0_121 = arith.constant 0 : index
    %235 = vector.load %arg20[%c1_119, %c0_120, %c0_121] : memref<2x1x32xf32, #tpu.memory_space<vmem>>, vector<1x1x32xf32>
    %236 = vector.shape_cast %235 : vector<1x1x32xf32> to vector<1x32xf32>
    %237 = vector.broadcast %236 : vector<1x32xf32> to vector<8x32xf32>
    %238 = arith.addf %234, %237 : vector<8x32xf32>
    %239 = arith.addf %162, %238 : vector<8x32xf32>
    %cst_122 = arith.constant 5.000000e-01 : f32
    %240 = vector.broadcast %cst_122 : f32 to vector<8x32xf32>
    %241 = arith.mulf %239, %240 : vector<8x32xf32>
    %242 = arith.truncf %241 : vector<8x32xf32> to vector<8x32xbf16>
    %cst_123 = arith.constant 0.000000e+00 : f32
    %243 = vector.broadcast %cst_123 : f32 to vector<8x32xf32>
    %c0_124 = arith.constant 0 : index
    %c0_125 = arith.constant 0 : index
    %c0_126 = arith.constant 0 : index
    %244 = vector.load %arg13[%c0_124, %c0_125, %c0_126] : memref<2x32x32xbf16, #tpu.memory_space<vmem>>, vector<1x32x32xbf16>
    %245 = vector.shape_cast %244 : vector<1x32x32xbf16> to vector<32x32xbf16>
    %cst_127 = arith.constant dense<0.000000e+00> : vector<8x32xf32>
    %246 = tpu.matmul %242, %245, %cst_127 {dimension_numbers = #tpu.dot_dimension_numbers<[1], [0], [0], [1], [0, 0, 1, 1], [], []>} : vector<8x32xbf16>, vector<32x32xbf16>, vector<8x32xf32> -> vector<8x32xf32>
    %c0_128 = arith.constant 0 : index
    %c0_129 = arith.constant 0 : index
    %c0_130 = arith.constant 0 : index
    %247 = vector.load %arg14[%c0_128, %c0_129, %c0_130] : memref<2x32x32xbf16, #tpu.memory_space<vmem>>, vector<1x32x32xbf16>
    %248 = vector.shape_cast %247 : vector<1x32x32xbf16> to vector<32x32xbf16>
    %cst_131 = arith.constant dense<0.000000e+00> : vector<8x32xf32>
    %249 = tpu.matmul %242, %248, %cst_131 {dimension_numbers = #tpu.dot_dimension_numbers<[1], [0], [0], [1], [0, 0, 1, 1], [], []>} : vector<8x32xbf16>, vector<32x32xbf16>, vector<8x32xf32> -> vector<8x32xf32>
    %250 = arith.truncf %246 : vector<8x32xf32> to vector<8x32xbf16>
    %cst_132 = arith.constant dense<0.000000e+00> : vector<8x8xf32>
    %251 = tpu.matmul %250, %242, %cst_132 {dimension_numbers = #tpu.dot_dimension_numbers<[1], [1], [0], [0], [0, 0, 1, 0], [], []>} : vector<8x32xbf16>, vector<8x32xbf16>, vector<8x8xf32> -> vector<8x8xf32>
    %252 = arith.addf %251, %83 : vector<8x8xf32>
    %cst_133 = arith.constant dense<0xFF800000> : vector<8xf32>
    %253 = vector.multi_reduction <maximumf>, %252, %cst_133 [1] : vector<8x8xf32> to vector<8xf32>
    %254 = vector.shape_cast %253 : vector<8xf32> to vector<8x1xf32>
    %255 = vector.broadcast %254 : vector<8x1xf32> to vector<8x8xf32>
    %256 = arith.subf %252, %255 : vector<8x8xf32>
    %257 = math.exp %256 : vector<8x8xf32>
    %cst_134 = arith.constant dense<0.000000e+00> : vector<8xf32>
    %258 = vector.multi_reduction <add>, %257, %cst_134 [1] : vector<8x8xf32> to vector<8xf32>
    %259 = vector.shape_cast %258 : vector<8xf32> to vector<8x1xf32>
    %260 = tpu.reciprocal %259 {approx = true} : vector<8x1xf32> -> vector<8x1xf32>
    %261 = vector.broadcast %260 : vector<8x1xf32> to vector<8x8xf32>
    %262 = arith.mulf %257, %261 : vector<8x8xf32>
    %263 = arith.truncf %262 : vector<8x8xf32> to vector<8x8xbf16>
    %264 = arith.truncf %249 : vector<8x32xf32> to vector<8x32xbf16>
    %cst_135 = arith.constant dense<0.000000e+00> : vector<8x32xf32>
    %265 = tpu.matmul %263, %264, %cst_135 {dimension_numbers = #tpu.dot_dimension_numbers<[1], [0], [0], [1], [0, 0, 1, 1], [], []>} : vector<8x8xbf16>, vector<8x32xbf16>, vector<8x32xf32> -> vector<8x32xf32>
    %266 = arith.negf %265 : vector<8x32xf32>
    %267 = math.exp %266 : vector<8x32xf32>
    %cst_136 = arith.constant 1.000000e+00 : f32
    %268 = vector.broadcast %cst_136 : f32 to vector<8x32xf32>
    %269 = arith.addf %268, %267 : vector<8x32xf32>
    %270 = arith.divf %268, %269 : vector<8x32xf32>
    %271 = arith.mulf %265, %270 : vector<8x32xf32>
    %272 = arith.truncf %271 : vector<8x32xf32> to vector<8x32xbf16>
    %c0_137 = arith.constant 0 : index
    %c0_138 = arith.constant 0 : index
    %c0_139 = arith.constant 0 : index
    %273 = vector.load %arg15[%c0_137, %c0_138, %c0_139] : memref<2x32x32xbf16, #tpu.memory_space<vmem>>, vector<1x32x32xbf16>
    %274 = vector.shape_cast %273 : vector<1x32x32xbf16> to vector<32x32xbf16>
    %cst_140 = arith.constant dense<0.000000e+00> : vector<8x32xf32>
    %275 = tpu.matmul %272, %274, %cst_140 {dimension_numbers = #tpu.dot_dimension_numbers<[1], [0], [0], [1], [0, 0, 1, 1], [], []>} : vector<8x32xbf16>, vector<32x32xbf16>, vector<8x32xf32> -> vector<8x32xf32>
    %c0_141 = arith.constant 0 : index
    %c0_142 = arith.constant 0 : index
    %c0_143 = arith.constant 0 : index
    %276 = vector.load %arg16[%c0_141, %c0_142, %c0_143] : memref<2x1x32xf32, #tpu.memory_space<vmem>>, vector<1x1x32xf32>
    %277 = vector.shape_cast %276 : vector<1x1x32xf32> to vector<1x32xf32>
    %278 = vector.broadcast %277 : vector<1x32xf32> to vector<8x32xf32>
    %279 = arith.addf %275, %278 : vector<8x32xf32>
    %280 = arith.negf %279 : vector<8x32xf32>
    %281 = math.exp %280 : vector<8x32xf32>
    %cst_144 = arith.constant 1.000000e+00 : f32
    %282 = vector.broadcast %cst_144 : f32 to vector<8x32xf32>
    %283 = arith.addf %282, %281 : vector<8x32xf32>
    %284 = arith.divf %282, %283 : vector<8x32xf32>
    %285 = arith.mulf %279, %284 : vector<8x32xf32>
    %286 = arith.truncf %285 : vector<8x32xf32> to vector<8x32xbf16>
    %c0_145 = arith.constant 0 : index
    %c0_146 = arith.constant 0 : index
    %c0_147 = arith.constant 0 : index
    %287 = vector.load %arg17[%c0_145, %c0_146, %c0_147] : memref<2x32x32xbf16, #tpu.memory_space<vmem>>, vector<1x32x32xbf16>
    %288 = vector.shape_cast %287 : vector<1x32x32xbf16> to vector<32x32xbf16>
    %cst_148 = arith.constant dense<0.000000e+00> : vector<8x32xf32>
    %289 = tpu.matmul %286, %288, %cst_148 {dimension_numbers = #tpu.dot_dimension_numbers<[1], [0], [0], [1], [0, 0, 1, 1], [], []>} : vector<8x32xbf16>, vector<32x32xbf16>, vector<8x32xf32> -> vector<8x32xf32>
    %c0_149 = arith.constant 0 : index
    %c0_150 = arith.constant 0 : index
    %c0_151 = arith.constant 0 : index
    %290 = vector.load %arg18[%c0_149, %c0_150, %c0_151] : memref<2x1x32xf32, #tpu.memory_space<vmem>>, vector<1x1x32xf32>
    %291 = vector.shape_cast %290 : vector<1x1x32xf32> to vector<1x32xf32>
    %292 = vector.broadcast %291 : vector<1x32xf32> to vector<8x32xf32>
    %293 = arith.addf %289, %292 : vector<8x32xf32>
    %cst_152 = arith.constant dense<0.000000e+00> : vector<8xf32>
    %294 = vector.multi_reduction <add>, %293, %cst_152 [1] : vector<8x32xf32> to vector<8xf32>
    %295 = vector.shape_cast %294 : vector<8xf32> to vector<8x1xf32>
    %cst_153 = arith.constant 3.200000e+01 : f32
    %296 = vector.broadcast %cst_153 : f32 to vector<8x1xf32>
    %297 = arith.divf %295, %296 : vector<8x1xf32>
    %298 = vector.broadcast %297 : vector<8x1xf32> to vector<8x32xf32>
    %299 = arith.subf %293, %298 : vector<8x32xf32>
    %300 = arith.mulf %299, %299 : vector<8x32xf32>
    %cst_154 = arith.constant dense<0.000000e+00> : vector<8xf32>
    %301 = vector.multi_reduction <add>, %300, %cst_154 [1] : vector<8x32xf32> to vector<8xf32>
    %302 = vector.shape_cast %301 : vector<8xf32> to vector<8x1xf32>
    %cst_155 = arith.constant 3.200000e+01 : f32
    %303 = vector.broadcast %cst_155 : f32 to vector<8x1xf32>
    %304 = arith.divf %302, %303 : vector<8x1xf32>
    %305 = vector.broadcast %297 : vector<8x1xf32> to vector<8x32xf32>
    %306 = arith.subf %293, %305 : vector<8x32xf32>
    %cst_156 = arith.constant 9.99999974E-6 : f32
    %307 = vector.broadcast %cst_156 : f32 to vector<8x1xf32>
    %308 = arith.addf %304, %307 : vector<8x1xf32>
    %309 = math.rsqrt %308 : vector<8x1xf32>
    %310 = vector.broadcast %309 : vector<8x1xf32> to vector<8x32xf32>
    %311 = arith.mulf %306, %310 : vector<8x32xf32>
    %c0_157 = arith.constant 0 : index
    %c0_158 = arith.constant 0 : index
    %c0_159 = arith.constant 0 : index
    %312 = vector.load %arg19[%c0_157, %c0_158, %c0_159] : memref<2x1x32xf32, #tpu.memory_space<vmem>>, vector<1x1x32xf32>
    %313 = vector.shape_cast %312 : vector<1x1x32xf32> to vector<1x32xf32>
    %314 = vector.broadcast %313 : vector<1x32xf32> to vector<8x32xf32>
    %315 = arith.mulf %311, %314 : vector<8x32xf32>
    %c0_160 = arith.constant 0 : index
    %c0_161 = arith.constant 0 : index
    %c0_162 = arith.constant 0 : index
    %316 = vector.load %arg20[%c0_160, %c0_161, %c0_162] : memref<2x1x32xf32, #tpu.memory_space<vmem>>, vector<1x1x32xf32>
    %317 = vector.shape_cast %316 : vector<1x1x32xf32> to vector<1x32xf32>
    %318 = vector.broadcast %317 : vector<1x32xf32> to vector<8x32xf32>
    %319 = arith.addf %315, %318 : vector<8x32xf32>
    %320 = arith.addf %243, %319 : vector<8x32xf32>
    %c1_163 = arith.constant 1 : index
    %c0_164 = arith.constant 0 : index
    %c0_165 = arith.constant 0 : index
    %321 = vector.load %arg13[%c1_163, %c0_164, %c0_165] : memref<2x32x32xbf16, #tpu.memory_space<vmem>>, vector<1x32x32xbf16>
    %322 = vector.shape_cast %321 : vector<1x32x32xbf16> to vector<32x32xbf16>
    %cst_166 = arith.constant dense<0.000000e+00> : vector<8x32xf32>
    %323 = tpu.matmul %242, %322, %cst_166 {dimension_numbers = #tpu.dot_dimension_numbers<[1], [0], [0], [1], [0, 0, 1, 1], [], []>} : vector<8x32xbf16>, vector<32x32xbf16>, vector<8x32xf32> -> vector<8x32xf32>
    %c1_167 = arith.constant 1 : index
    %c0_168 = arith.constant 0 : index
    %c0_169 = arith.constant 0 : index
    %324 = vector.load %arg14[%c1_167, %c0_168, %c0_169] : memref<2x32x32xbf16, #tpu.memory_space<vmem>>, vector<1x32x32xbf16>
    %325 = vector.shape_cast %324 : vector<1x32x32xbf16> to vector<32x32xbf16>
    %cst_170 = arith.constant dense<0.000000e+00> : vector<8x32xf32>
    %326 = tpu.matmul %242, %325, %cst_170 {dimension_numbers = #tpu.dot_dimension_numbers<[1], [0], [0], [1], [0, 0, 1, 1], [], []>} : vector<8x32xbf16>, vector<32x32xbf16>, vector<8x32xf32> -> vector<8x32xf32>
    %327 = arith.truncf %323 : vector<8x32xf32> to vector<8x32xbf16>
    %cst_171 = arith.constant dense<0.000000e+00> : vector<8x8xf32>
    %328 = tpu.matmul %327, %242, %cst_171 {dimension_numbers = #tpu.dot_dimension_numbers<[1], [1], [0], [0], [0, 0, 1, 0], [], []>} : vector<8x32xbf16>, vector<8x32xbf16>, vector<8x8xf32> -> vector<8x8xf32>
    %329 = arith.addf %328, %83 : vector<8x8xf32>
    %cst_172 = arith.constant dense<0xFF800000> : vector<8xf32>
    %330 = vector.multi_reduction <maximumf>, %329, %cst_172 [1] : vector<8x8xf32> to vector<8xf32>
    %331 = vector.shape_cast %330 : vector<8xf32> to vector<8x1xf32>
    %332 = vector.broadcast %331 : vector<8x1xf32> to vector<8x8xf32>
    %333 = arith.subf %329, %332 : vector<8x8xf32>
    %334 = math.exp %333 : vector<8x8xf32>
    %cst_173 = arith.constant dense<0.000000e+00> : vector<8xf32>
    %335 = vector.multi_reduction <add>, %334, %cst_173 [1] : vector<8x8xf32> to vector<8xf32>
    %336 = vector.shape_cast %335 : vector<8xf32> to vector<8x1xf32>
    %337 = tpu.reciprocal %336 {approx = true} : vector<8x1xf32> -> vector<8x1xf32>
    %338 = vector.broadcast %337 : vector<8x1xf32> to vector<8x8xf32>
    %339 = arith.mulf %334, %338 : vector<8x8xf32>
    %340 = arith.truncf %339 : vector<8x8xf32> to vector<8x8xbf16>
    %341 = arith.truncf %326 : vector<8x32xf32> to vector<8x32xbf16>
    %cst_174 = arith.constant dense<0.000000e+00> : vector<8x32xf32>
    %342 = tpu.matmul %340, %341, %cst_174 {dimension_numbers = #tpu.dot_dimension_numbers<[1], [0], [0], [1], [0, 0, 1, 1], [], []>} : vector<8x8xbf16>, vector<8x32xbf16>, vector<8x32xf32> -> vector<8x32xf32>
    %343 = arith.negf %342 : vector<8x32xf32>
    %344 = math.exp %343 : vector<8x32xf32>
    %cst_175 = arith.constant 1.000000e+00 : f32
    %345 = vector.broadcast %cst_175 : f32 to vector<8x32xf32>
    %346 = arith.addf %345, %344 : vector<8x32xf32>
    %347 = arith.divf %345, %346 : vector<8x32xf32>
    %348 = arith.mulf %342, %347 : vector<8x32xf32>
    %349 = arith.truncf %348 : vector<8x32xf32> to vector<8x32xbf16>
    %c1_176 = arith.constant 1 : index
    %c0_177 = arith.constant 0 : index
    %c0_178 = arith.constant 0 : index
    %350 = vector.load %arg15[%c1_176, %c0_177, %c0_178] : memref<2x32x32xbf16, #tpu.memory_space<vmem>>, vector<1x32x32xbf16>
    %351 = vector.shape_cast %350 : vector<1x32x32xbf16> to vector<32x32xbf16>
    %cst_179 = arith.constant dense<0.000000e+00> : vector<8x32xf32>
    %352 = tpu.matmul %349, %351, %cst_179 {dimension_numbers = #tpu.dot_dimension_numbers<[1], [0], [0], [1], [0, 0, 1, 1], [], []>} : vector<8x32xbf16>, vector<32x32xbf16>, vector<8x32xf32> -> vector<8x32xf32>
    %c1_180 = arith.constant 1 : index
    %c0_181 = arith.constant 0 : index
    %c0_182 = arith.constant 0 : index
    %353 = vector.load %arg16[%c1_180, %c0_181, %c0_182] : memref<2x1x32xf32, #tpu.memory_space<vmem>>, vector<1x1x32xf32>
    %354 = vector.shape_cast %353 : vector<1x1x32xf32> to vector<1x32xf32>
    %355 = vector.broadcast %354 : vector<1x32xf32> to vector<8x32xf32>
    %356 = arith.addf %352, %355 : vector<8x32xf32>
    %357 = arith.negf %356 : vector<8x32xf32>
    %358 = math.exp %357 : vector<8x32xf32>
    %cst_183 = arith.constant 1.000000e+00 : f32
    %359 = vector.broadcast %cst_183 : f32 to vector<8x32xf32>
    %360 = arith.addf %359, %358 : vector<8x32xf32>
    %361 = arith.divf %359, %360 : vector<8x32xf32>
    %362 = arith.mulf %356, %361 : vector<8x32xf32>
    %363 = arith.truncf %362 : vector<8x32xf32> to vector<8x32xbf16>
    %c1_184 = arith.constant 1 : index
    %c0_185 = arith.constant 0 : index
    %c0_186 = arith.constant 0 : index
    %364 = vector.load %arg17[%c1_184, %c0_185, %c0_186] : memref<2x32x32xbf16, #tpu.memory_space<vmem>>, vector<1x32x32xbf16>
    %365 = vector.shape_cast %364 : vector<1x32x32xbf16> to vector<32x32xbf16>
    %cst_187 = arith.constant dense<0.000000e+00> : vector<8x32xf32>
    %366 = tpu.matmul %363, %365, %cst_187 {dimension_numbers = #tpu.dot_dimension_numbers<[1], [0], [0], [1], [0, 0, 1, 1], [], []>} : vector<8x32xbf16>, vector<32x32xbf16>, vector<8x32xf32> -> vector<8x32xf32>
    %c1_188 = arith.constant 1 : index
    %c0_189 = arith.constant 0 : index
    %c0_190 = arith.constant 0 : index
    %367 = vector.load %arg18[%c1_188, %c0_189, %c0_190] : memref<2x1x32xf32, #tpu.memory_space<vmem>>, vector<1x1x32xf32>
    %368 = vector.shape_cast %367 : vector<1x1x32xf32> to vector<1x32xf32>
    %369 = vector.broadcast %368 : vector<1x32xf32> to vector<8x32xf32>
    %370 = arith.addf %366, %369 : vector<8x32xf32>
    %cst_191 = arith.constant dense<0.000000e+00> : vector<8xf32>
    %371 = vector.multi_reduction <add>, %370, %cst_191 [1] : vector<8x32xf32> to vector<8xf32>
    %372 = vector.shape_cast %371 : vector<8xf32> to vector<8x1xf32>
    %cst_192 = arith.constant 3.200000e+01 : f32
    %373 = vector.broadcast %cst_192 : f32 to vector<8x1xf32>
    %374 = arith.divf %372, %373 : vector<8x1xf32>
    %375 = vector.broadcast %374 : vector<8x1xf32> to vector<8x32xf32>
    %376 = arith.subf %370, %375 : vector<8x32xf32>
    %377 = arith.mulf %376, %376 : vector<8x32xf32>
    %cst_193 = arith.constant dense<0.000000e+00> : vector<8xf32>
    %378 = vector.multi_reduction <add>, %377, %cst_193 [1] : vector<8x32xf32> to vector<8xf32>
    %379 = vector.shape_cast %378 : vector<8xf32> to vector<8x1xf32>
    %cst_194 = arith.constant 3.200000e+01 : f32
    %380 = vector.broadcast %cst_194 : f32 to vector<8x1xf32>
    %381 = arith.divf %379, %380 : vector<8x1xf32>
    %382 = vector.broadcast %374 : vector<8x1xf32> to vector<8x32xf32>
    %383 = arith.subf %370, %382 : vector<8x32xf32>
    %cst_195 = arith.constant 9.99999974E-6 : f32
    %384 = vector.broadcast %cst_195 : f32 to vector<8x1xf32>
    %385 = arith.addf %381, %384 : vector<8x1xf32>
    %386 = math.rsqrt %385 : vector<8x1xf32>
    %387 = vector.broadcast %386 : vector<8x1xf32> to vector<8x32xf32>
    %388 = arith.mulf %383, %387 : vector<8x32xf32>
    %c1_196 = arith.constant 1 : index
    %c0_197 = arith.constant 0 : index
    %c0_198 = arith.constant 0 : index
    %389 = vector.load %arg19[%c1_196, %c0_197, %c0_198] : memref<2x1x32xf32, #tpu.memory_space<vmem>>, vector<1x1x32xf32>
    %390 = vector.shape_cast %389 : vector<1x1x32xf32> to vector<1x32xf32>
    %391 = vector.broadcast %390 : vector<1x32xf32> to vector<8x32xf32>
    %392 = arith.mulf %388, %391 : vector<8x32xf32>
    %c1_199 = arith.constant 1 : index
    %c0_200 = arith.constant 0 : index
    %c0_201 = arith.constant 0 : index
    %393 = vector.load %arg20[%c1_199, %c0_200, %c0_201] : memref<2x1x32xf32, #tpu.memory_space<vmem>>, vector<1x1x32xf32>
    %394 = vector.shape_cast %393 : vector<1x1x32xf32> to vector<1x32xf32>
    %395 = vector.broadcast %394 : vector<1x32xf32> to vector<8x32xf32>
    %396 = arith.addf %392, %395 : vector<8x32xf32>
    %397 = arith.addf %320, %396 : vector<8x32xf32>
    %cst_202 = arith.constant 5.000000e-01 : f32
    %398 = vector.broadcast %cst_202 : f32 to vector<8x32xf32>
    %399 = arith.mulf %397, %398 : vector<8x32xf32>
    %400 = arith.truncf %399 : vector<8x32xf32> to vector<8x32xbf16>
    %cst_203 = arith.constant 0.000000e+00 : f32
    %401 = vector.broadcast %cst_203 : f32 to vector<8x32xf32>
    %c0_204 = arith.constant 0 : index
    %c0_205 = arith.constant 0 : index
    %c0_206 = arith.constant 0 : index
    %402 = vector.load %arg13[%c0_204, %c0_205, %c0_206] : memref<2x32x32xbf16, #tpu.memory_space<vmem>>, vector<1x32x32xbf16>
    %403 = vector.shape_cast %402 : vector<1x32x32xbf16> to vector<32x32xbf16>
    %cst_207 = arith.constant dense<0.000000e+00> : vector<8x32xf32>
    %404 = tpu.matmul %400, %403, %cst_207 {dimension_numbers = #tpu.dot_dimension_numbers<[1], [0], [0], [1], [0, 0, 1, 1], [], []>} : vector<8x32xbf16>, vector<32x32xbf16>, vector<8x32xf32> -> vector<8x32xf32>
    %c0_208 = arith.constant 0 : index
    %c0_209 = arith.constant 0 : index
    %c0_210 = arith.constant 0 : index
    %405 = vector.load %arg14[%c0_208, %c0_209, %c0_210] : memref<2x32x32xbf16, #tpu.memory_space<vmem>>, vector<1x32x32xbf16>
    %406 = vector.shape_cast %405 : vector<1x32x32xbf16> to vector<32x32xbf16>
    %cst_211 = arith.constant dense<0.000000e+00> : vector<8x32xf32>
    %407 = tpu.matmul %400, %406, %cst_211 {dimension_numbers = #tpu.dot_dimension_numbers<[1], [0], [0], [1], [0, 0, 1, 1], [], []>} : vector<8x32xbf16>, vector<32x32xbf16>, vector<8x32xf32> -> vector<8x32xf32>
    %408 = arith.truncf %404 : vector<8x32xf32> to vector<8x32xbf16>
    %cst_212 = arith.constant dense<0.000000e+00> : vector<8x8xf32>
    %409 = tpu.matmul %408, %400, %cst_212 {dimension_numbers = #tpu.dot_dimension_numbers<[1], [1], [0], [0], [0, 0, 1, 0], [], []>} : vector<8x32xbf16>, vector<8x32xbf16>, vector<8x8xf32> -> vector<8x8xf32>
    %410 = arith.addf %409, %83 : vector<8x8xf32>
    %cst_213 = arith.constant dense<0xFF800000> : vector<8xf32>
    %411 = vector.multi_reduction <maximumf>, %410, %cst_213 [1] : vector<8x8xf32> to vector<8xf32>
    %412 = vector.shape_cast %411 : vector<8xf32> to vector<8x1xf32>
    %413 = vector.broadcast %412 : vector<8x1xf32> to vector<8x8xf32>
    %414 = arith.subf %410, %413 : vector<8x8xf32>
    %415 = math.exp %414 : vector<8x8xf32>
    %cst_214 = arith.constant dense<0.000000e+00> : vector<8xf32>
    %416 = vector.multi_reduction <add>, %415, %cst_214 [1] : vector<8x8xf32> to vector<8xf32>
    %417 = vector.shape_cast %416 : vector<8xf32> to vector<8x1xf32>
    %418 = tpu.reciprocal %417 {approx = true} : vector<8x1xf32> -> vector<8x1xf32>
    %419 = vector.broadcast %418 : vector<8x1xf32> to vector<8x8xf32>
    %420 = arith.mulf %415, %419 : vector<8x8xf32>
    %421 = arith.truncf %420 : vector<8x8xf32> to vector<8x8xbf16>
    %422 = arith.truncf %407 : vector<8x32xf32> to vector<8x32xbf16>
    %cst_215 = arith.constant dense<0.000000e+00> : vector<8x32xf32>
    %423 = tpu.matmul %421, %422, %cst_215 {dimension_numbers = #tpu.dot_dimension_numbers<[1], [0], [0], [1], [0, 0, 1, 1], [], []>} : vector<8x8xbf16>, vector<8x32xbf16>, vector<8x32xf32> -> vector<8x32xf32>
    %424 = arith.negf %423 : vector<8x32xf32>
    %425 = math.exp %424 : vector<8x32xf32>
    %cst_216 = arith.constant 1.000000e+00 : f32
    %426 = vector.broadcast %cst_216 : f32 to vector<8x32xf32>
    %427 = arith.addf %426, %425 : vector<8x32xf32>
    %428 = arith.divf %426, %427 : vector<8x32xf32>
    %429 = arith.mulf %423, %428 : vector<8x32xf32>
    %430 = arith.truncf %429 : vector<8x32xf32> to vector<8x32xbf16>
    %c0_217 = arith.constant 0 : index
    %c0_218 = arith.constant 0 : index
    %c0_219 = arith.constant 0 : index
    %431 = vector.load %arg15[%c0_217, %c0_218, %c0_219] : memref<2x32x32xbf16, #tpu.memory_space<vmem>>, vector<1x32x32xbf16>
    %432 = vector.shape_cast %431 : vector<1x32x32xbf16> to vector<32x32xbf16>
    %cst_220 = arith.constant dense<0.000000e+00> : vector<8x32xf32>
    %433 = tpu.matmul %430, %432, %cst_220 {dimension_numbers = #tpu.dot_dimension_numbers<[1], [0], [0], [1], [0, 0, 1, 1], [], []>} : vector<8x32xbf16>, vector<32x32xbf16>, vector<8x32xf32> -> vector<8x32xf32>
    %c0_221 = arith.constant 0 : index
    %c0_222 = arith.constant 0 : index
    %c0_223 = arith.constant 0 : index
    %434 = vector.load %arg16[%c0_221, %c0_222, %c0_223] : memref<2x1x32xf32, #tpu.memory_space<vmem>>, vector<1x1x32xf32>
    %435 = vector.shape_cast %434 : vector<1x1x32xf32> to vector<1x32xf32>
    %436 = vector.broadcast %435 : vector<1x32xf32> to vector<8x32xf32>
    %437 = arith.addf %433, %436 : vector<8x32xf32>
    %438 = arith.negf %437 : vector<8x32xf32>
    %439 = math.exp %438 : vector<8x32xf32>
    %cst_224 = arith.constant 1.000000e+00 : f32
    %440 = vector.broadcast %cst_224 : f32 to vector<8x32xf32>
    %441 = arith.addf %440, %439 : vector<8x32xf32>
    %442 = arith.divf %440, %441 : vector<8x32xf32>
    %443 = arith.mulf %437, %442 : vector<8x32xf32>
    %444 = arith.truncf %443 : vector<8x32xf32> to vector<8x32xbf16>
    %c0_225 = arith.constant 0 : index
    %c0_226 = arith.constant 0 : index
    %c0_227 = arith.constant 0 : index
    %445 = vector.load %arg17[%c0_225, %c0_226, %c0_227] : memref<2x32x32xbf16, #tpu.memory_space<vmem>>, vector<1x32x32xbf16>
    %446 = vector.shape_cast %445 : vector<1x32x32xbf16> to vector<32x32xbf16>
    %cst_228 = arith.constant dense<0.000000e+00> : vector<8x32xf32>
    %447 = tpu.matmul %444, %446, %cst_228 {dimension_numbers = #tpu.dot_dimension_numbers<[1], [0], [0], [1], [0, 0, 1, 1], [], []>} : vector<8x32xbf16>, vector<32x32xbf16>, vector<8x32xf32> -> vector<8x32xf32>
    %c0_229 = arith.constant 0 : index
    %c0_230 = arith.constant 0 : index
    %c0_231 = arith.constant 0 : index
    %448 = vector.load %arg18[%c0_229, %c0_230, %c0_231] : memref<2x1x32xf32, #tpu.memory_space<vmem>>, vector<1x1x32xf32>
    %449 = vector.shape_cast %448 : vector<1x1x32xf32> to vector<1x32xf32>
    %450 = vector.broadcast %449 : vector<1x32xf32> to vector<8x32xf32>
    %451 = arith.addf %447, %450 : vector<8x32xf32>
    %cst_232 = arith.constant dense<0.000000e+00> : vector<8xf32>
    %452 = vector.multi_reduction <add>, %451, %cst_232 [1] : vector<8x32xf32> to vector<8xf32>
    %453 = vector.shape_cast %452 : vector<8xf32> to vector<8x1xf32>
    %cst_233 = arith.constant 3.200000e+01 : f32
    %454 = vector.broadcast %cst_233 : f32 to vector<8x1xf32>
    %455 = arith.divf %453, %454 : vector<8x1xf32>
    %456 = vector.broadcast %455 : vector<8x1xf32> to vector<8x32xf32>
    %457 = arith.subf %451, %456 : vector<8x32xf32>
    %458 = arith.mulf %457, %457 : vector<8x32xf32>
    %cst_234 = arith.constant dense<0.000000e+00> : vector<8xf32>
    %459 = vector.multi_reduction <add>, %458, %cst_234 [1] : vector<8x32xf32> to vector<8xf32>
    %460 = vector.shape_cast %459 : vector<8xf32> to vector<8x1xf32>
    %cst_235 = arith.constant 3.200000e+01 : f32
    %461 = vector.broadcast %cst_235 : f32 to vector<8x1xf32>
    %462 = arith.divf %460, %461 : vector<8x1xf32>
    %463 = vector.broadcast %455 : vector<8x1xf32> to vector<8x32xf32>
    %464 = arith.subf %451, %463 : vector<8x32xf32>
    %cst_236 = arith.constant 9.99999974E-6 : f32
    %465 = vector.broadcast %cst_236 : f32 to vector<8x1xf32>
    %466 = arith.addf %462, %465 : vector<8x1xf32>
    %467 = math.rsqrt %466 : vector<8x1xf32>
    %468 = vector.broadcast %467 : vector<8x1xf32> to vector<8x32xf32>
    %469 = arith.mulf %464, %468 : vector<8x32xf32>
    %c0_237 = arith.constant 0 : index
    %c0_238 = arith.constant 0 : index
    %c0_239 = arith.constant 0 : index
    %470 = vector.load %arg19[%c0_237, %c0_238, %c0_239] : memref<2x1x32xf32, #tpu.memory_space<vmem>>, vector<1x1x32xf32>
    %471 = vector.shape_cast %470 : vector<1x1x32xf32> to vector<1x32xf32>
    %472 = vector.broadcast %471 : vector<1x32xf32> to vector<8x32xf32>
    %473 = arith.mulf %469, %472 : vector<8x32xf32>
    %c0_240 = arith.constant 0 : index
    %c0_241 = arith.constant 0 : index
    %c0_242 = arith.constant 0 : index
    %474 = vector.load %arg20[%c0_240, %c0_241, %c0_242] : memref<2x1x32xf32, #tpu.memory_space<vmem>>, vector<1x1x32xf32>
    %475 = vector.shape_cast %474 : vector<1x1x32xf32> to vector<1x32xf32>
    %476 = vector.broadcast %475 : vector<1x32xf32> to vector<8x32xf32>
    %477 = arith.addf %473, %476 : vector<8x32xf32>
    %478 = arith.addf %401, %477 : vector<8x32xf32>
    %c1_243 = arith.constant 1 : index
    %c0_244 = arith.constant 0 : index
    %c0_245 = arith.constant 0 : index
    %479 = vector.load %arg13[%c1_243, %c0_244, %c0_245] : memref<2x32x32xbf16, #tpu.memory_space<vmem>>, vector<1x32x32xbf16>
    %480 = vector.shape_cast %479 : vector<1x32x32xbf16> to vector<32x32xbf16>
    %cst_246 = arith.constant dense<0.000000e+00> : vector<8x32xf32>
    %481 = tpu.matmul %400, %480, %cst_246 {dimension_numbers = #tpu.dot_dimension_numbers<[1], [0], [0], [1], [0, 0, 1, 1], [], []>} : vector<8x32xbf16>, vector<32x32xbf16>, vector<8x32xf32> -> vector<8x32xf32>
    %c1_247 = arith.constant 1 : index
    %c0_248 = arith.constant 0 : index
    %c0_249 = arith.constant 0 : index
    %482 = vector.load %arg14[%c1_247, %c0_248, %c0_249] : memref<2x32x32xbf16, #tpu.memory_space<vmem>>, vector<1x32x32xbf16>
    %483 = vector.shape_cast %482 : vector<1x32x32xbf16> to vector<32x32xbf16>
    %cst_250 = arith.constant dense<0.000000e+00> : vector<8x32xf32>
    %484 = tpu.matmul %400, %483, %cst_250 {dimension_numbers = #tpu.dot_dimension_numbers<[1], [0], [0], [1], [0, 0, 1, 1], [], []>} : vector<8x32xbf16>, vector<32x32xbf16>, vector<8x32xf32> -> vector<8x32xf32>
    %485 = arith.truncf %481 : vector<8x32xf32> to vector<8x32xbf16>
    %cst_251 = arith.constant dense<0.000000e+00> : vector<8x8xf32>
    %486 = tpu.matmul %485, %400, %cst_251 {dimension_numbers = #tpu.dot_dimension_numbers<[1], [1], [0], [0], [0, 0, 1, 0], [], []>} : vector<8x32xbf16>, vector<8x32xbf16>, vector<8x8xf32> -> vector<8x8xf32>
    %487 = arith.addf %486, %83 : vector<8x8xf32>
    %cst_252 = arith.constant dense<0xFF800000> : vector<8xf32>
    %488 = vector.multi_reduction <maximumf>, %487, %cst_252 [1] : vector<8x8xf32> to vector<8xf32>
    %489 = vector.shape_cast %488 : vector<8xf32> to vector<8x1xf32>
    %490 = vector.broadcast %489 : vector<8x1xf32> to vector<8x8xf32>
    %491 = arith.subf %487, %490 : vector<8x8xf32>
    %492 = math.exp %491 : vector<8x8xf32>
    %cst_253 = arith.constant dense<0.000000e+00> : vector<8xf32>
    %493 = vector.multi_reduction <add>, %492, %cst_253 [1] : vector<8x8xf32> to vector<8xf32>
    %494 = vector.shape_cast %493 : vector<8xf32> to vector<8x1xf32>
    %495 = tpu.reciprocal %494 {approx = true} : vector<8x1xf32> -> vector<8x1xf32>
    %496 = vector.broadcast %495 : vector<8x1xf32> to vector<8x8xf32>
    %497 = arith.mulf %492, %496 : vector<8x8xf32>
    %498 = arith.truncf %497 : vector<8x8xf32> to vector<8x8xbf16>
    %499 = arith.truncf %484 : vector<8x32xf32> to vector<8x32xbf16>
    %cst_254 = arith.constant dense<0.000000e+00> : vector<8x32xf32>
    %500 = tpu.matmul %498, %499, %cst_254 {dimension_numbers = #tpu.dot_dimension_numbers<[1], [0], [0], [1], [0, 0, 1, 1], [], []>} : vector<8x8xbf16>, vector<8x32xbf16>, vector<8x32xf32> -> vector<8x32xf32>
    %501 = arith.negf %500 : vector<8x32xf32>
    %502 = math.exp %501 : vector<8x32xf32>
    %cst_255 = arith.constant 1.000000e+00 : f32
    %503 = vector.broadcast %cst_255 : f32 to vector<8x32xf32>
    %504 = arith.addf %503, %502 : vector<8x32xf32>
    %505 = arith.divf %503, %504 : vector<8x32xf32>
    %506 = arith.mulf %500, %505 : vector<8x32xf32>
    %507 = arith.truncf %506 : vector<8x32xf32> to vector<8x32xbf16>
    %c1_256 = arith.constant 1 : index
    %c0_257 = arith.constant 0 : index
    %c0_258 = arith.constant 0 : index
    %508 = vector.load %arg15[%c1_256, %c0_257, %c0_258] : memref<2x32x32xbf16, #tpu.memory_space<vmem>>, vector<1x32x32xbf16>
    %509 = vector.shape_cast %508 : vector<1x32x32xbf16> to vector<32x32xbf16>
    %cst_259 = arith.constant dense<0.000000e+00> : vector<8x32xf32>
    %510 = tpu.matmul %507, %509, %cst_259 {dimension_numbers = #tpu.dot_dimension_numbers<[1], [0], [0], [1], [0, 0, 1, 1], [], []>} : vector<8x32xbf16>, vector<32x32xbf16>, vector<8x32xf32> -> vector<8x32xf32>
    %c1_260 = arith.constant 1 : index
    %c0_261 = arith.constant 0 : index
    %c0_262 = arith.constant 0 : index
    %511 = vector.load %arg16[%c1_260, %c0_261, %c0_262] : memref<2x1x32xf32, #tpu.memory_space<vmem>>, vector<1x1x32xf32>
    %512 = vector.shape_cast %511 : vector<1x1x32xf32> to vector<1x32xf32>
    %513 = vector.broadcast %512 : vector<1x32xf32> to vector<8x32xf32>
    %514 = arith.addf %510, %513 : vector<8x32xf32>
    %515 = arith.negf %514 : vector<8x32xf32>
    %516 = math.exp %515 : vector<8x32xf32>
    %cst_263 = arith.constant 1.000000e+00 : f32
    %517 = vector.broadcast %cst_263 : f32 to vector<8x32xf32>
    %518 = arith.addf %517, %516 : vector<8x32xf32>
    %519 = arith.divf %517, %518 : vector<8x32xf32>
    %520 = arith.mulf %514, %519 : vector<8x32xf32>
    %521 = arith.truncf %520 : vector<8x32xf32> to vector<8x32xbf16>
    %c1_264 = arith.constant 1 : index
    %c0_265 = arith.constant 0 : index
    %c0_266 = arith.constant 0 : index
    %522 = vector.load %arg17[%c1_264, %c0_265, %c0_266] : memref<2x32x32xbf16, #tpu.memory_space<vmem>>, vector<1x32x32xbf16>
    %523 = vector.shape_cast %522 : vector<1x32x32xbf16> to vector<32x32xbf16>
    %cst_267 = arith.constant dense<0.000000e+00> : vector<8x32xf32>
    %524 = tpu.matmul %521, %523, %cst_267 {dimension_numbers = #tpu.dot_dimension_numbers<[1], [0], [0], [1], [0, 0, 1, 1], [], []>} : vector<8x32xbf16>, vector<32x32xbf16>, vector<8x32xf32> -> vector<8x32xf32>
    %c1_268 = arith.constant 1 : index
    %c0_269 = arith.constant 0 : index
    %c0_270 = arith.constant 0 : index
    %525 = vector.load %arg18[%c1_268, %c0_269, %c0_270] : memref<2x1x32xf32, #tpu.memory_space<vmem>>, vector<1x1x32xf32>
    %526 = vector.shape_cast %525 : vector<1x1x32xf32> to vector<1x32xf32>
    %527 = vector.broadcast %526 : vector<1x32xf32> to vector<8x32xf32>
    %528 = arith.addf %524, %527 : vector<8x32xf32>
    %cst_271 = arith.constant dense<0.000000e+00> : vector<8xf32>
    %529 = vector.multi_reduction <add>, %528, %cst_271 [1] : vector<8x32xf32> to vector<8xf32>
    %530 = vector.shape_cast %529 : vector<8xf32> to vector<8x1xf32>
    %cst_272 = arith.constant 3.200000e+01 : f32
    %531 = vector.broadcast %cst_272 : f32 to vector<8x1xf32>
    %532 = arith.divf %530, %531 : vector<8x1xf32>
    %533 = vector.broadcast %532 : vector<8x1xf32> to vector<8x32xf32>
    %534 = arith.subf %528, %533 : vector<8x32xf32>
    %535 = arith.mulf %534, %534 : vector<8x32xf32>
    %cst_273 = arith.constant dense<0.000000e+00> : vector<8xf32>
    %536 = vector.multi_reduction <add>, %535, %cst_273 [1] : vector<8x32xf32> to vector<8xf32>
    %537 = vector.shape_cast %536 : vector<8xf32> to vector<8x1xf32>
    %cst_274 = arith.constant 3.200000e+01 : f32
    %538 = vector.broadcast %cst_274 : f32 to vector<8x1xf32>
    %539 = arith.divf %537, %538 : vector<8x1xf32>
    %540 = vector.broadcast %532 : vector<8x1xf32> to vector<8x32xf32>
    %541 = arith.subf %528, %540 : vector<8x32xf32>
    %cst_275 = arith.constant 9.99999974E-6 : f32
    %542 = vector.broadcast %cst_275 : f32 to vector<8x1xf32>
    %543 = arith.addf %539, %542 : vector<8x1xf32>
    %544 = math.rsqrt %543 : vector<8x1xf32>
    %545 = vector.broadcast %544 : vector<8x1xf32> to vector<8x32xf32>
    %546 = arith.mulf %541, %545 : vector<8x32xf32>
    %c1_276 = arith.constant 1 : index
    %c0_277 = arith.constant 0 : index
    %c0_278 = arith.constant 0 : index
    %547 = vector.load %arg19[%c1_276, %c0_277, %c0_278] : memref<2x1x32xf32, #tpu.memory_space<vmem>>, vector<1x1x32xf32>
    %548 = vector.shape_cast %547 : vector<1x1x32xf32> to vector<1x32xf32>
    %549 = vector.broadcast %548 : vector<1x32xf32> to vector<8x32xf32>
    %550 = arith.mulf %546, %549 : vector<8x32xf32>
    %c1_279 = arith.constant 1 : index
    %c0_280 = arith.constant 0 : index
    %c0_281 = arith.constant 0 : index
    %551 = vector.load %arg20[%c1_279, %c0_280, %c0_281] : memref<2x1x32xf32, #tpu.memory_space<vmem>>, vector<1x1x32xf32>
    %552 = vector.shape_cast %551 : vector<1x1x32xf32> to vector<1x32xf32>
    %553 = vector.broadcast %552 : vector<1x32xf32> to vector<8x32xf32>
    %554 = arith.addf %550, %553 : vector<8x32xf32>
    %555 = arith.addf %478, %554 : vector<8x32xf32>
    %cst_282 = arith.constant 5.000000e-01 : f32
    %556 = vector.broadcast %cst_282 : f32 to vector<8x32xf32>
    %557 = arith.mulf %555, %556 : vector<8x32xf32>
    %558 = arith.truncf %557 : vector<8x32xf32> to vector<8x32xbf16>
    %c0_283 = arith.constant 0 : index
    %c0_284 = arith.constant 0 : index
    %559 = vector.load %arg21[%c0_283, %c0_284] : memref<32x128xbf16, #tpu.memory_space<vmem>>, vector<32x128xbf16>
    %cst_285 = arith.constant dense<0.000000e+00> : vector<8x128xf32>
    %560 = tpu.matmul %558, %559, %cst_285 {dimension_numbers = #tpu.dot_dimension_numbers<[1], [0], [0], [1], [0, 0, 1, 1], [], []>} : vector<8x32xbf16>, vector<32x128xbf16>, vector<8x128xf32> -> vector<8x128xf32>
    %c0_286 = arith.constant 0 : index
    %c0_287 = arith.constant 0 : index
    %561 = vector.load %arg22[%c0_286, %c0_287] : memref<1x128xf32, #tpu.memory_space<vmem>>, vector<1x128xf32>
    %562 = vector.broadcast %561 : vector<1x128xf32> to vector<8x128xf32>
    %563 = arith.addf %560, %562 : vector<8x128xf32>
    %c0_288 = arith.constant 0 : index
    %c0_289 = arith.constant 0 : index
    %564 = vector.load %arg23[%c0_288, %c0_289] : memref<8x128xf32, #tpu.memory_space<vmem>>, vector<8x128xf32>
    tpu.vector_store %arg23[%c0_288, %c0_289], %563 {strides = array<i32>} : memref<8x128xf32, #tpu.memory_space<vmem>>, vector<8x128xf32>,
    return
  }
  func.func @transform_0(%arg0: i32) -> (i32, i32) {
    %c0_i32 = arith.constant 0 : i32
    %c0_i32_0 = arith.constant 0 : i32
    return %arg0, %c0_i32 : i32, i32
  }
  func.func @transform_1(%arg0: i32) -> (i32, i32) {
    %c0_i32 = arith.constant 0 : i32
    %c0_i32_0 = arith.constant 0 : i32
    return %arg0, %c0_i32 : i32, i32
  }
  func.func @transform_2(%arg0: i32) -> (i32, i32) {
    %c0_i32 = arith.constant 0 : i32
    %c0_i32_0 = arith.constant 0 : i32
    %c0_i32_1 = arith.constant 0 : i32
    return %c0_i32, %c0_i32_0 : i32, i32
  }
  func.func @transform_3(%arg0: i32) -> (i32, i32) {
    %c0_i32 = arith.constant 0 : i32
    %c0_i32_0 = arith.constant 0 : i32
    %c0_i32_1 = arith.constant 0 : i32
    return %c0_i32, %c0_i32_0 : i32, i32
  }
  func.func @transform_4(%arg0: i32) -> (i32, i32) {
    %c0_i32 = arith.constant 0 : i32
    %c0_i32_0 = arith.constant 0 : i32
    %c0_i32_1 = arith.constant 0 : i32
    return %c0_i32, %c0_i32_0 : i32, i32
  }
  func.func @transform_5(%arg0: i32) -> (i32, i32) {
    %c0_i32 = arith.constant 0 : i32
    %c0_i32_0 = arith.constant 0 : i32
    %c0_i32_1 = arith.constant 0 : i32
    return %c0_i32, %c0_i32_0 : i32, i32
  }
  func.func @transform_6(%arg0: i32) -> (i32, i32) {
    %c0_i32 = arith.constant 0 : i32
    %c0_i32_0 = arith.constant 0 : i32
    %c0_i32_1 = arith.constant 0 : i32
    return %c0_i32, %c0_i32_0 : i32, i32
  }
  func.func @transform_7(%arg0: i32) -> (i32, i32) {
    %c0_i32 = arith.constant 0 : i32
    %c0_i32_0 = arith.constant 0 : i32
    %c0_i32_1 = arith.constant 0 : i32
    return %c0_i32, %c0_i32_0 : i32, i32
  }
  func.func @transform_8(%arg0: i32) -> (i32, i32) {
    %c0_i32 = arith.constant 0 : i32
    %c0_i32_0 = arith.constant 0 : i32
    %c0_i32_1 = arith.constant 0 : i32
    return %c0_i32, %c0_i32_0 : i32, i32
  }
  func.func @transform_9(%arg0: i32) -> (i32, i32) {
    %c0_i32 = arith.constant 0 : i32
    %c0_i32_0 = arith.constant 0 : i32
    %c0_i32_1 = arith.constant 0 : i32
    return %c0_i32, %c0_i32_0 : i32, i32
  }
  func.func @transform_10(%arg0: i32) -> (i32, i32) {
    %c0_i32 = arith.constant 0 : i32
    %c0_i32_0 = arith.constant 0 : i32
    %c0_i32_1 = arith.constant 0 : i32
    return %c0_i32, %c0_i32_0 : i32, i32
  }
  func.func @transform_11(%arg0: i32) -> (i32, i32) {
    %c0_i32 = arith.constant 0 : i32
    %c0_i32_0 = arith.constant 0 : i32
    %c0_i32_1 = arith.constant 0 : i32
    return %c0_i32, %c0_i32_0 : i32, i32
  }
  func.func @transform_12(%arg0: i32) -> (i32, i32, i32) {
    %c0_i32 = arith.constant 0 : i32
    %c0_i32_0 = arith.constant 0 : i32
    %c0_i32_1 = arith.constant 0 : i32
    %c0_i32_2 = arith.constant 0 : i32
    return %c0_i32, %c0_i32_0, %c0_i32_1 : i32, i32, i32
  }
  func.func @transform_13(%arg0: i32) -> (i32, i32, i32) {
    %c0_i32 = arith.constant 0 : i32
    %c0_i32_0 = arith.constant 0 : i32
    %c0_i32_1 = arith.constant 0 : i32
    %c0_i32_2 = arith.constant 0 : i32
    return %c0_i32, %c0_i32_0, %c0_i32_1 : i32, i32, i32
  }
  func.func @transform_14(%arg0: i32) -> (i32, i32, i32) {
    %c0_i32 = arith.constant 0 : i32
    %c0_i32_0 = arith.constant 0 : i32
    %c0_i32_1 = arith.constant 0 : i32
    %c0_i32_2 = arith.constant 0 : i32
    return %c0_i32, %c0_i32_0, %c0_i32_1 : i32, i32, i32
  }
  func.func @transform_15(%arg0: i32) -> (i32, i32, i32) {
    %c0_i32 = arith.constant 0 : i32
    %c0_i32_0 = arith.constant 0 : i32
    %c0_i32_1 = arith.constant 0 : i32
    %c0_i32_2 = arith.constant 0 : i32
    return %c0_i32, %c0_i32_0, %c0_i32_1 : i32, i32, i32
  }
  func.func @transform_16(%arg0: i32) -> (i32, i32, i32) {
    %c0_i32 = arith.constant 0 : i32
    %c0_i32_0 = arith.constant 0 : i32
    %c0_i32_1 = arith.constant 0 : i32
    %c0_i32_2 = arith.constant 0 : i32
    return %c0_i32, %c0_i32_0, %c0_i32_1 : i32, i32, i32
  }
  func.func @transform_17(%arg0: i32) -> (i32, i32, i32) {
    %c0_i32 = arith.constant 0 : i32
    %c0_i32_0 = arith.constant 0 : i32
    %c0_i32_1 = arith.constant 0 : i32
    %c0_i32_2 = arith.constant 0 : i32
    return %c0_i32, %c0_i32_0, %c0_i32_1 : i32, i32, i32
  }
  func.func @transform_18(%arg0: i32) -> (i32, i32, i32) {
    %c0_i32 = arith.constant 0 : i32
    %c0_i32_0 = arith.constant 0 : i32
    %c0_i32_1 = arith.constant 0 : i32
    %c0_i32_2 = arith.constant 0 : i32
    return %c0_i32, %c0_i32_0, %c0_i32_1 : i32, i32, i32
  }
  func.func @transform_19(%arg0: i32) -> (i32, i32, i32) {
    %c0_i32 = arith.constant 0 : i32
    %c0_i32_0 = arith.constant 0 : i32
    %c0_i32_1 = arith.constant 0 : i32
    %c0_i32_2 = arith.constant 0 : i32
    return %c0_i32, %c0_i32_0, %c0_i32_1 : i32, i32, i32
  }
  func.func @transform_20(%arg0: i32) -> (i32, i32) {
    %c0_i32 = arith.constant 0 : i32
    %c0_i32_0 = arith.constant 0 : i32
    %c0_i32_1 = arith.constant 0 : i32
    return %c0_i32, %c0_i32_0 : i32, i32
  }
  func.func @transform_21(%arg0: i32) -> (i32, i32) {
    %c0_i32 = arith.constant 0 : i32
    %c0_i32_0 = arith.constant 0 : i32
    %c0_i32_1 = arith.constant 0 : i32
    return %c0_i32, %c0_i32_0 : i32, i32
  }
  func.func @transform_22(%arg0: i32) -> (i32, i32) {
    %c0_i32 = arith.constant 0 : i32
    %c0_i32_0 = arith.constant 0 : i32
    return %arg0, %c0_i32 : i32, i32
  }
}

</mosaic_0001>

<llo_original>
// kernel: distributed_dot_gat_forward.1
$region0: #{distributed_dot_gat_forward.1}
  #allocation0 [shape = 'u32[]', space=smem, size = 0x4, offset = 0x4, fixed_abs, tag = 'smem constant byte address 0x4 - core index']
  #allocation1 [shape = 'u32[72,128]{1,0:T(1,128)}', space=vmem, size = 0x9000, scoped, tag = 'internal scratch']
  %s0 = inlined_call_operand.vmem [shape: bf16[128,33], index: 0, kind: input, shape index: {}]
  %s1 = inlined_call_operand.vmem [shape: f32[128,1], index: 1, kind: input, shape index: {}]
  %s2 = inlined_call_operand.vmem [shape: bf16[33,32], index: 2, kind: input, shape index: {}]
  %s3 = inlined_call_operand.vmem [shape: f32[1,32], index: 3, kind: input, shape index: {}]
  %s4 = inlined_call_operand.vmem [shape: bf16[32,32], index: 4, kind: input, shape index: {}]
  %s5 = inlined_call_operand.vmem [shape: f32[1,32], index: 5, kind: input, shape index: {}]
  %s6 = inlined_call_operand.vmem [shape: f32[1,32], index: 6, kind: input, shape index: {}]
  %s7 = inlined_call_operand.vmem [shape: bf16[256,64], index: 7, kind: input, shape index: {}]
  %s8 = inlined_call_operand.vmem [shape: f32[1,64], index: 8, kind: input, shape index: {}]
  %s9 = inlined_call_operand.vmem [shape: bf16[64,32], index: 9, kind: input, shape index: {}]
  %s10 = inlined_call_operand.vmem [shape: f32[1,32], index: 10, kind: input, shape index: {}]
  %s11 = inlined_call_operand.vmem [shape: f32[8,8], index: 11, kind: input, shape index: {}]
  %s12 = inlined_call_operand.vmem [shape: bf16[2,32,32], index: 12, kind: input, shape index: {}]
  %s13 = inlined_call_operand.vmem [shape: bf16[2,32,32], index: 13, kind: input, shape index: {}]
  %s14 = inlined_call_operand.vmem [shape: bf16[2,32,32], index: 14, kind: input, shape index: {}]
  %s15 = inlined_call_operand.vmem [shape: f32[2,1,32], index: 15, kind: input, shape index: {}]
  %s16 = inlined_call_operand.vmem [shape: bf16[2,32,32], index: 16, kind: input, shape index: {}]
  %s17 = inlined_call_operand.vmem [shape: f32[2,1,32], index: 17, kind: input, shape index: {}]
  %s18 = inlined_call_operand.vmem [shape: f32[2,1,32], index: 18, kind: input, shape index: {}]
  %s19 = inlined_call_operand.vmem [shape: f32[2,1,32], index: 19, kind: input, shape index: {}]
  %s20 = inlined_call_operand.vmem [shape: bf16[32,128], index: 20, kind: input, shape index: {}]
  %s21 = inlined_call_operand.vmem [shape: f32[1,128], index: 21, kind: input, shape index: {}]
  %s22 = inlined_call_operand.vmem [shape: f32[16,128], index: 22, kind: output, shape index: {}]
  %s23 = sld [smem:[#allocation0]]
  $region121: #{distributed_dot_gat_forward.1} parent=0
    _
  %s25 = ssub.s32 1, %s23
  %s26 = scalar_select 0, %s25, %s23
  loop: start=0, step=1, limit=4
  $region2: #{distributed_dot_gat_forward.1} parent=0 // loop_pre_header
    _
  $region3: #{distributed_dot_gat_forward.1} parent=0 // loop_header
    %s28 = sphi 0, %s32
    %p29 = scmp.ge.s32.totalorder %s28, 4
    %s38 = sphi 0, %s40
    %s41 = sphi 0, %s38
    %s42 = sphi 0, %s41
    %s58 = sphi 0, %s42
    %s64 = sphi 0, %s66
    %s67 = sphi 0, %s64
    %s68 = sphi 0, %s67
    %s84 = sphi 0, %s68
    %s88 = sphi 0, %s88
    %s90 = sphi 0, %s88
    %s91 = sphi 0, %s90
    %s105 = sphi 0, %s91
    %s109 = sphi 0, %s109
    %s111 = sphi 0, %s109
    %s112 = sphi 0, %s111
    %s126 = sphi 0, %s112
    %s130 = sphi 0, %s130
    %s132 = sphi 0, %s130
    %s133 = sphi 0, %s132
    %s147 = sphi 0, %s133
    %s151 = sphi 0, %s151
    %s153 = sphi 0, %s151
    %s154 = sphi 0, %s153
    %s168 = sphi 0, %s154
    %s172 = sphi 0, %s172
    %s174 = sphi 0, %s172
    %s175 = sphi 0, %s174
    %s189 = sphi 0, %s175
    %s193 = sphi 0, %s193
    %s195 = sphi 0, %s193
    %s196 = sphi 0, %s195
    %s210 = sphi 0, %s196
    %s214 = sphi 0, %s214
    %s216 = sphi 0, %s214
    %s217 = sphi 0, %s216
    %s231 = sphi 0, %s217
    %s235 = sphi 0, %s235
    %s237 = sphi 0, %s235
    %s238 = sphi 0, %s237
    %s252 = sphi 0, %s238
    %s256 = sphi 0, %s256
    %s258 = sphi 0, %s256
    %s259 = sphi 0, %s258
    %s273 = sphi 0, %s259
    %s277 = sphi 0, %s277
    %s279 = sphi 0, %s277
    %s280 = sphi 0, %s279
    %s294 = sphi 0, %s280
    %s298 = sphi 0, %s298
    %s300 = sphi 0, %s298
    %s301 = sphi 0, %s300
    %s315 = sphi 0, %s301
    %s319 = sphi 0, %s319
    %s321 = sphi 0, %s319
    %s322 = sphi 0, %s321
    %s336 = sphi 0, %s322
    %s340 = sphi 0, %s340
    %s342 = sphi 0, %s340
    %s343 = sphi 0, %s342
    %s357 = sphi 0, %s343
    %s361 = sphi 0, %s361
    %s363 = sphi 0, %s361
    %s364 = sphi 0, %s363
    %s378 = sphi 0, %s364
    %s382 = sphi 0, %s382
    %s384 = sphi 0, %s382
    %s385 = sphi 0, %s384
    %s399 = sphi 0, %s385
    %s403 = sphi 0, %s403
    %s405 = sphi 0, %s403
    %s406 = sphi 0, %s405
    %s420 = sphi 0, %s406
    %s424 = sphi 0, %s424
    %s426 = sphi 0, %s424
    %s427 = sphi 0, %s426
    %s441 = sphi 0, %s427
    %s445 = sphi 0, %s445
    %s447 = sphi 0, %s445
    %s448 = sphi 0, %s447
    %s462 = sphi 0, %s448
    %s466 = sphi 0, %s466
    %s468 = sphi 0, %s466
    %s469 = sphi 0, %s468
    %s483 = sphi 0, %s469
    %s487 = sphi 0, %s487
    %s489 = sphi 0, %s487
    %s490 = sphi 0, %s489
    %s504 = sphi 0, %s490
    %s510 = sphi 0, %s512
    %s513 = sphi 0, %s510
    %s514 = sphi 0, %s513
    %s530 = sphi 0, %s514
  $region4: #{distributed_dot_gat_forward.1} parent=0 // loop_header_branch
    %31 = sbr.rel (%p29) target = $region8
  $region5: #{distributed_dot_gat_forward.1} parent=0 // loop_body
    %s33 = ssub.s32 %s28, 1
    %s34 = ssub.s32 %s28, 2
    %s35 = sadd.s32 %s28, 1
    %s36 = ssub.s32 %s28, %s35
    %p37 = scmp.eq.s32.totalorder %s36, 0
    %s39 = sadd.s32 %s38, 1
    %s40 = scalar_select %p37, %s38, %s39
    %p43 = pneg %p37
    %p44 = scmp.eq.s32.totalorder %s28, 1
    %p45 = por %p43, %p44
    %p46 = scmp.ne.s32.totalorder %s38, %s41
    %p47 = scmp.eq.s32.totalorder %s28, 0
    %p48 = por %p46, %p47
    %p49 = scmp.ne.s32.totalorder %s38, %s41
    %p50 = scmp.eq.s32.totalorder %s33, 1
    %p51 = por %p49, %p50
    %p52 = scmp.ne.s32.totalorder %s41, %s42
    %p53 = scmp.eq.s32.totalorder %s33, 0
    %p54 = por %p52, %p53
    %p55 = scmp.ne.s32.totalorder %s41, %s42
    %p56 = scmp.eq.s32.totalorder %s34, 1
    %p57 = por %p55, %p56
    %p59 = scmp.ne.s32.totalorder %s42, %s58
    %p60 = scmp.eq.s32.totalorder %s34, 0
    %p61 = por %p59, %p60
    %s62 = ssub.s32 %s28, %s35
    %p63 = scmp.eq.s32.totalorder %s62, 0
    %s65 = sadd.s32 %s64, 1
    %s66 = scalar_select %p63, %s64, %s65
    %p69 = pneg %p63
    %p70 = scmp.eq.s32.totalorder %s28, 1
    %p71 = por %p69, %p70
    %p72 = scmp.ne.s32.totalorder %s64, %s67
    %p73 = scmp.eq.s32.totalorder %s28, 0
    %p74 = por %p72, %p73
    %p75 = scmp.ne.s32.totalorder %s64, %s67
    %p76 = scmp.eq.s32.totalorder %s33, 1
    %p77 = por %p75, %p76
    %p78 = scmp.ne.s32.totalorder %s67, %s68
    %p79 = scmp.eq.s32.totalorder %s33, 0
    %p80 = por %p78, %p79
    %p81 = scmp.ne.s32.totalorder %s67, %s68
    %p82 = scmp.eq.s32.totalorder %s34, 1
    %p83 = por %p81, %p82
    %p85 = scmp.ne.s32.totalorder %s68, %s84
    %p86 = scmp.eq.s32.totalorder %s34, 0
    %p87 = por %p85, %p86
    %s89 = sadd.s32 %s88, 1
    %p92 = scmp.eq.s32.totalorder %s28, 1
    %p93 = scmp.ne.s32.totalorder %s88, %s90
    %p94 = scmp.eq.s32.totalorder %s28, 0
    %p95 = por %p93, %p94
    %p96 = scmp.ne.s32.totalorder %s88, %s90
    %p97 = scmp.eq.s32.totalorder %s33, 1
    %p98 = por %p96, %p97
    %p99 = scmp.ne.s32.totalorder %s90, %s91
    %p100 = scmp.eq.s32.totalorder %s33, 0
    %p101 = por %p99, %p100
    %p102 = scmp.ne.s32.totalorder %s90, %s91
    %p103 = scmp.eq.s32.totalorder %s34, 1
    %p104 = por %p102, %p103
    %p106 = scmp.ne.s32.totalorder %s91, %s105
    %p107 = scmp.eq.s32.totalorder %s34, 0
    %p108 = por %p106, %p107
    %s110 = sadd.s32 %s109, 1
    %p113 = scmp.eq.s32.totalorder %s28, 1
    %p114 = scmp.ne.s32.totalorder %s109, %s111
    %p115 = scmp.eq.s32.totalorder %s28, 0
    %p116 = por %p114, %p115
    %p117 = scmp.ne.s32.totalorder %s109, %s111
    %p118 = scmp.eq.s32.totalorder %s33, 1
    %p119 = por %p117, %p118
    %p120 = scmp.ne.s32.totalorder %s111, %s112
    %p121 = scmp.eq.s32.totalorder %s33, 0
    %p122 = por %p120, %p121
    %p123 = scmp.ne.s32.totalorder %s111, %s112
    %p124 = scmp.eq.s32.totalorder %s34, 1
    %p125 = por %p123, %p124
    %p127 = scmp.ne.s32.totalorder %s112, %s126
    %p128 = scmp.eq.s32.totalorder %s34, 0
    %p129 = por %p127, %p128
    %s131 = sadd.s32 %s130, 1
    %p134 = scmp.eq.s32.totalorder %s28, 1
    %p135 = scmp.ne.s32.totalorder %s130, %s132
    %p136 = scmp.eq.s32.totalorder %s28, 0
    %p137 = por %p135, %p136
    %p138 = scmp.ne.s32.totalorder %s130, %s132
    %p139 = scmp.eq.s32.totalorder %s33, 1
    %p140 = por %p138, %p139
    %p141 = scmp.ne.s32.totalorder %s132, %s133
    %p142 = scmp.eq.s32.totalorder %s33, 0
    %p143 = por %p141, %p142
    %p144 = scmp.ne.s32.totalorder %s132, %s133
    %p145 = scmp.eq.s32.totalorder %s34, 1
    %p146 = por %p144, %p145
    %p148 = scmp.ne.s32.totalorder %s133, %s147
    %p149 = scmp.eq.s32.totalorder %s34, 0
    %p150 = por %p148, %p149
    %s152 = sadd.s32 %s151, 1
    %p155 = scmp.eq.s32.totalorder %s28, 1
    %p156 = scmp.ne.s32.totalorder %s151, %s153
    %p157 = scmp.eq.s32.totalorder %s28, 0
    %p158 = por %p156, %p157
    %p159 = scmp.ne.s32.totalorder %s151, %s153
    %p160 = scmp.eq.s32.totalorder %s33, 1
    %p161 = por %p159, %p160
    %p162 = scmp.ne.s32.totalorder %s153, %s154
    %p163 = scmp.eq.s32.totalorder %s33, 0
    %p164 = por %p162, %p163
    %p165 = scmp.ne.s32.totalorder %s153, %s154
    %p166 = scmp.eq.s32.totalorder %s34, 1
    %p167 = por %p165, %p166
    %p169 = scmp.ne.s32.totalorder %s154, %s168
    %p170 = scmp.eq.s32.totalorder %s34, 0
    %p171 = por %p169, %p170
    %s173 = sadd.s32 %s172, 1
    %p176 = scmp.eq.s32.totalorder %s28, 1
    %p177 = scmp.ne.s32.totalorder %s172, %s174
    %p178 = scmp.eq.s32.totalorder %s28, 0
    %p179 = por %p177, %p178
    %p180 = scmp.ne.s32.totalorder %s172, %s174
    %p181 = scmp.eq.s32.totalorder %s33, 1
    %p182 = por %p180, %p181
    %p183 = scmp.ne.s32.totalorder %s174, %s175
    %p184 = scmp.eq.s32.totalorder %s33, 0
    %p185 = por %p183, %p184
    %p186 = scmp.ne.s32.totalorder %s174, %s175
    %p187 = scmp.eq.s32.totalorder %s34, 1
    %p188 = por %p186, %p187
    %p190 = scmp.ne.s32.totalorder %s175, %s189
    %p191 = scmp.eq.s32.totalorder %s34, 0
    %p192 = por %p190, %p191
    %s194 = sadd.s32 %s193, 1
    %p197 = scmp.eq.s32.totalorder %s28, 1
    %p198 = scmp.ne.s32.totalorder %s193, %s195
    %p199 = scmp.eq.s32.totalorder %s28, 0
    %p200 = por %p198, %p199
    %p201 = scmp.ne.s32.totalorder %s193, %s195
    %p202 = scmp.eq.s32.totalorder %s33, 1
    %p203 = por %p201, %p202
    %p204 = scmp.ne.s32.totalorder %s195, %s196
    %p205 = scmp.eq.s32.totalorder %s33, 0
    %p206 = por %p204, %p205
    %p207 = scmp.ne.s32.totalorder %s195, %s196
    %p208 = scmp.eq.s32.totalorder %s34, 1
    %p209 = por %p207, %p208
    %p211 = scmp.ne.s32.totalorder %s196, %s210
    %p212 = scmp.eq.s32.totalorder %s34, 0
    %p213 = por %p211, %p212
    %s215 = sadd.s32 %s214, 1
    %p218 = scmp.eq.s32.totalorder %s28, 1
    %p219 = scmp.ne.s32.totalorder %s214, %s216
    %p220 = scmp.eq.s32.totalorder %s28, 0
    %p221 = por %p219, %p220
    %p222 = scmp.ne.s32.totalorder %s214, %s216
    %p223 = scmp.eq.s32.totalorder %s33, 1
    %p224 = por %p222, %p223
    %p225 = scmp.ne.s32.totalorder %s216, %s217
    %p226 = scmp.eq.s32.totalorder %s33, 0
    %p227 = por %p225, %p226
    %p228 = scmp.ne.s32.totalorder %s216, %s217
    %p229 = scmp.eq.s32.totalorder %s34, 1
    %p230 = por %p228, %p229
    %p232 = scmp.ne.s32.totalorder %s217, %s231
    %p233 = scmp.eq.s32.totalorder %s34, 0
    %p234 = por %p232, %p233
    %s236 = sadd.s32 %s235, 1
    %p239 = scmp.eq.s32.totalorder %s28, 1
    %p240 = scmp.ne.s32.totalorder %s235, %s237
    %p241 = scmp.eq.s32.totalorder %s28, 0
    %p242 = por %p240, %p241
    %p243 = scmp.ne.s32.totalorder %s235, %s237
    %p244 = scmp.eq.s32.totalorder %s33, 1
    %p245 = por %p243, %p244
    %p246 = scmp.ne.s32.totalorder %s237, %s238
    %p247 = scmp.eq.s32.totalorder %s33, 0
    %p248 = por %p246, %p247
    %p249 = scmp.ne.s32.totalorder %s237, %s238
    %p250 = scmp.eq.s32.totalorder %s34, 1
    %p251 = por %p249, %p250
    %p253 = scmp.ne.s32.totalorder %s238, %s252
    %p254 = scmp.eq.s32.totalorder %s34, 0
    %p255 = por %p253, %p254
    %s257 = sadd.s32 %s256, 1
    %p260 = scmp.eq.s32.totalorder %s28, 1
    %p261 = scmp.ne.s32.totalorder %s256, %s258
    %p262 = scmp.eq.s32.totalorder %s28, 0
    %p263 = por %p261, %p262
    %p264 = scmp.ne.s32.totalorder %s256, %s258
    %p265 = scmp.eq.s32.totalorder %s33, 1
    %p266 = por %p264, %p265
    %p267 = scmp.ne.s32.totalorder %s258, %s259
    %p268 = scmp.eq.s32.totalorder %s33, 0
    %p269 = por %p267, %p268
    %p270 = scmp.ne.s32.totalorder %s258, %s259
    %p271 = scmp.eq.s32.totalorder %s34, 1
    %p272 = por %p270, %p271
    %p274 = scmp.ne.s32.totalorder %s259, %s273
    %p275 = scmp.eq.s32.totalorder %s34, 0
    %p276 = por %p274, %p275
    %s278 = sadd.s32 %s277, 1
    %p281 = scmp.eq.s32.totalorder %s28, 1
    %p282 = scmp.ne.s32.totalorder %s277, %s279
    %p283 = scmp.eq.s32.totalorder %s28, 0
    %p284 = por %p282, %p283
    %p285 = scmp.ne.s32.totalorder %s277, %s279
    %p286 = scmp.eq.s32.totalorder %s33, 1
    %p287 = por %p285, %p286
    %p288 = scmp.ne.s32.totalorder %s279, %s280
    %p289 = scmp.eq.s32.totalorder %s33, 0
    %p290 = por %p288, %p289
    %p291 = scmp.ne.s32.totalorder %s279, %s280
    %p292 = scmp.eq.s32.totalorder %s34, 1
    %p293 = por %p291, %p292
    %p295 = scmp.ne.s32.totalorder %s280, %s294
    %p296 = scmp.eq.s32.totalorder %s34, 0
    %p297 = por %p295, %p296
    %s299 = sadd.s32 %s298, 1
    %p302 = scmp.eq.s32.totalorder %s28, 1
    %p303 = scmp.ne.s32.totalorder %s298, %s300
    %p304 = scmp.eq.s32.totalorder %s28, 0
    %p305 = por %p303, %p304
    %p306 = scmp.ne.s32.totalorder %s298, %s300
    %p307 = scmp.eq.s32.totalorder %s33, 1
    %p308 = por %p306, %p307
    %p309 = scmp.ne.s32.totalorder %s300, %s301
    %p310 = scmp.eq.s32.totalorder %s33, 0
    %p311 = por %p309, %p310
    %p312 = scmp.ne.s32.totalorder %s300, %s301
    %p313 = scmp.eq.s32.totalorder %s34, 1
    %p314 = por %p312, %p313
    %p316 = scmp.ne.s32.totalorder %s301, %s315
    %p317 = scmp.eq.s32.totalorder %s34, 0
    %p318 = por %p316, %p317
    %s320 = sadd.s32 %s319, 1
    %p323 = scmp.eq.s32.totalorder %s28, 1
    %p324 = scmp.ne.s32.totalorder %s319, %s321
    %p325 = scmp.eq.s32.totalorder %s28, 0
    %p326 = por %p324, %p325
    %p327 = scmp.ne.s32.totalorder %s319, %s321
    %p328 = scmp.eq.s32.totalorder %s33, 1
    %p329 = por %p327, %p328
    %p330 = scmp.ne.s32.totalorder %s321, %s322
    %p331 = scmp.eq.s32.totalorder %s33, 0
    %p332 = por %p330, %p331
    %p333 = scmp.ne.s32.totalorder %s321, %s322
    %p334 = scmp.eq.s32.totalorder %s34, 1
    %p335 = por %p333, %p334
    %p337 = scmp.ne.s32.totalorder %s322, %s336
    %p338 = scmp.eq.s32.totalorder %s34, 0
    %p339 = por %p337, %p338
    %s341 = sadd.s32 %s340, 1
    %p344 = scmp.eq.s32.totalorder %s28, 1
    %p345 = scmp.ne.s32.totalorder %s340, %s342
    %p346 = scmp.eq.s32.totalorder %s28, 0
    %p347 = por %p345, %p346
    %p348 = scmp.ne.s32.totalorder %s340, %s342
    %p349 = scmp.eq.s32.totalorder %s33, 1
    %p350 = por %p348, %p349
    %p351 = scmp.ne.s32.totalorder %s342, %s343
    %p352 = scmp.eq.s32.totalorder %s33, 0
    %p353 = por %p351, %p352
    %p354 = scmp.ne.s32.totalorder %s342, %s343
    %p355 = scmp.eq.s32.totalorder %s34, 1
    %p356 = por %p354, %p355
    %p358 = scmp.ne.s32.totalorder %s343, %s357
    %p359 = scmp.eq.s32.totalorder %s34, 0
    %p360 = por %p358, %p359
    %s362 = sadd.s32 %s361, 1
    %p365 = scmp.eq.s32.totalorder %s28, 1
    %p366 = scmp.ne.s32.totalorder %s361, %s363
    %p367 = scmp.eq.s32.totalorder %s28, 0
    %p368 = por %p366, %p367
    %p369 = scmp.ne.s32.totalorder %s361, %s363
    %p370 = scmp.eq.s32.totalorder %s33, 1
    %p371 = por %p369, %p370
    %p372 = scmp.ne.s32.totalorder %s363, %s364
    %p373 = scmp.eq.s32.totalorder %s33, 0
    %p374 = por %p372, %p373
    %p375 = scmp.ne.s32.totalorder %s363, %s364
    %p376 = scmp.eq.s32.totalorder %s34, 1
    %p377 = por %p375, %p376
    %p379 = scmp.ne.s32.totalorder %s364, %s378
    %p380 = scmp.eq.s32.totalorder %s34, 0
    %p381 = por %p379, %p380
    %s383 = sadd.s32 %s382, 1
    %p386 = scmp.eq.s32.totalorder %s28, 1
    %p387 = scmp.ne.s32.totalorder %s382, %s384
    %p388 = scmp.eq.s32.totalorder %s28, 0
    %p389 = por %p387, %p388
    %p390 = scmp.ne.s32.totalorder %s382, %s384
    %p391 = scmp.eq.s32.totalorder %s33, 1
    %p392 = por %p390, %p391
    %p393 = scmp.ne.s32.totalorder %s384, %s385
    %p394 = scmp.eq.s32.totalorder %s33, 0
    %p395 = por %p393, %p394
    %p396 = scmp.ne.s32.totalorder %s384, %s385
    %p397 = scmp.eq.s32.totalorder %s34, 1
    %p398 = por %p396, %p397
    %p400 = scmp.ne.s32.totalorder %s385, %s399
    %p401 = scmp.eq.s32.totalorder %s34, 0
    %p402 = por %p400, %p401
    %s404 = sadd.s32 %s403, 1
    %p407 = scmp.eq.s32.totalorder %s28, 1
    %p408 = scmp.ne.s32.totalorder %s403, %s405
    %p409 = scmp.eq.s32.totalorder %s28, 0
    %p410 = por %p408, %p409
    %p411 = scmp.ne.s32.totalorder %s403, %s405
    %p412 = scmp.eq.s32.totalorder %s33, 1
    %p413 = por %p411, %p412
    %p414 = scmp.ne.s32.totalorder %s405, %s406
    %p415 = scmp.eq.s32.totalorder %s33, 0
    %p416 = por %p414, %p415
    %p417 = scmp.ne.s32.totalorder %s405, %s406
    %p418 = scmp.eq.s32.totalorder %s34, 1
    %p419 = por %p417, %p418
    %p421 = scmp.ne.s32.totalorder %s406, %s420
    %p422 = scmp.eq.s32.totalorder %s34, 0
    %p423 = por %p421, %p422
    %s425 = sadd.s32 %s424, 1
    %p428 = scmp.eq.s32.totalorder %s28, 1
    %p429 = scmp.ne.s32.totalorder %s424, %s426
    %p430 = scmp.eq.s32.totalorder %s28, 0
    %p431 = por %p429, %p430
    %p432 = scmp.ne.s32.totalorder %s424, %s426
    %p433 = scmp.eq.s32.totalorder %s33, 1
    %p434 = por %p432, %p433
    %p435 = scmp.ne.s32.totalorder %s426, %s427
    %p436 = scmp.eq.s32.totalorder %s33, 0
    %p437 = por %p435, %p436
    %p438 = scmp.ne.s32.totalorder %s426, %s427
    %p439 = scmp.eq.s32.totalorder %s34, 1
    %p440 = por %p438, %p439
    %p442 = scmp.ne.s32.totalorder %s427, %s441
    %p443 = scmp.eq.s32.totalorder %s34, 0
    %p444 = por %p442, %p443
    %s446 = sadd.s32 %s445, 1
    %p449 = scmp.eq.s32.totalorder %s28, 1
    %p450 = scmp.ne.s32.totalorder %s445, %s447
    %p451 = scmp.eq.s32.totalorder %s28, 0
    %p452 = por %p450, %p451
    %p453 = scmp.ne.s32.totalorder %s445, %s447
    %p454 = scmp.eq.s32.totalorder %s33, 1
    %p455 = por %p453, %p454
    %p456 = scmp.ne.s32.totalorder %s447, %s448
    %p457 = scmp.eq.s32.totalorder %s33, 0
    %p458 = por %p456, %p457
    %p459 = scmp.ne.s32.totalorder %s447, %s448
    %p460 = scmp.eq.s32.totalorder %s34, 1
    %p461 = por %p459, %p460
    %p463 = scmp.ne.s32.totalorder %s448, %s462
    %p464 = scmp.eq.s32.totalorder %s34, 0
    %p465 = por %p463, %p464
    %s467 = sadd.s32 %s466, 1
    %p470 = scmp.eq.s32.totalorder %s28, 1
    %p471 = scmp.ne.s32.totalorder %s466, %s468
    %p472 = scmp.eq.s32.totalorder %s28, 0
    %p473 = por %p471, %p472
    %p474 = scmp.ne.s32.totalorder %s466, %s468
    %p475 = scmp.eq.s32.totalorder %s33, 1
    %p476 = por %p474, %p475
    %p477 = scmp.ne.s32.totalorder %s468, %s469
    %p478 = scmp.eq.s32.totalorder %s33, 0
    %p479 = por %p477, %p478
    %p480 = scmp.ne.s32.totalorder %s468, %s469
    %p481 = scmp.eq.s32.totalorder %s34, 1
    %p482 = por %p480, %p481
    %p484 = scmp.ne.s32.totalorder %s469, %s483
    %p485 = scmp.eq.s32.totalorder %s34, 0
    %p486 = por %p484, %p485
    %s488 = sadd.s32 %s487, 1
    %p491 = scmp.eq.s32.totalorder %s28, 1
    %p492 = scmp.ne.s32.totalorder %s487, %s489
    %p493 = scmp.eq.s32.totalorder %s28, 0
    %p494 = por %p492, %p493
    %p495 = scmp.ne.s32.totalorder %s487, %s489
    %p496 = scmp.eq.s32.totalorder %s33, 1
    %p497 = por %p495, %p496
    %p498 = scmp.ne.s32.totalorder %s489, %s490
    %p499 = scmp.eq.s32.totalorder %s33, 0
    %p500 = por %p498, %p499
    %p501 = scmp.ne.s32.totalorder %s489, %s490
    %p502 = scmp.eq.s32.totalorder %s34, 1
    %p503 = por %p501, %p502
    %p505 = scmp.ne.s32.totalorder %s490, %s504
    %p506 = scmp.eq.s32.totalorder %s34, 0
    %p507 = por %p505, %p506
    %s508 = ssub.s32 %s28, %s35
    %p509 = scmp.eq.s32.totalorder %s508, 0
    %s511 = sadd.s32 %s510, 1
    %s512 = scalar_select %p509, %s510, %s511
    %p515 = pneg %p509
    %p516 = scmp.eq.s32.totalorder %s28, 1
    %p517 = por %p515, %p516
    %p518 = scmp.ne.s32.totalorder %s510, %s513
    %p519 = scmp.eq.s32.totalorder %s28, 0
    %p520 = por %p518, %p519
    %p521 = scmp.ne.s32.totalorder %s510, %s513
    %p522 = scmp.eq.s32.totalorder %s33, 1
    %p523 = por %p521, %p522
    %p524 = scmp.ne.s32.totalorder %s513, %s514
    %p525 = scmp.eq.s32.totalorder %s33, 0
    %p526 = por %p524, %p525
    %p527 = scmp.ne.s32.totalorder %s513, %s514
    %p528 = scmp.eq.s32.totalorder %s34, 1
    %p529 = por %p527, %p528
    %p531 = scmp.ne.s32.totalorder %s514, %s530
    %p532 = scmp.eq.s32.totalorder %s34, 0
    %p533 = por %p531, %p532
    %p534 = scmp.le.s32.totalorder 1, %s28
    %p535 = scmp.lt.s32.totalorder %s28, 3
    %p536 = pnand %p534, %p535
    %p537 = pneg %p536
    // Predicated region
    $region9: #{distributed_dot_gat_forward.1} parent=5 // pred_check
      _
    $region10: #{distributed_dot_gat_forward.1} parent=5 // pred_check_branch
      %539 = sbr.rel (%p536) target = $region12
    $region11: #{distributed_dot_gat_forward.1} parent=5 // pred_region
      %s540 = ssub.s32 %s28, 1
      // Predicated region
      $region13: #{distributed_dot_gat_forward.1} parent=11 // pred_check
        %p541 = pneg %p101
      $region14: #{distributed_dot_gat_forward.1} parent=11 // pred_check_branch
        %543 = sbr.rel (%p541) target = $region16
      $region15: #{distributed_dot_gat_forward.1} parent=11 // pred_region
        _
      $region16: #{distributed_dot_gat_forward.1} parent=11 // pred_fallthru
        _
      // Predicated region
      $region17: #{distributed_dot_gat_forward.1} parent=11 // pred_check
        %p544 = pneg %p122
      $region18: #{distributed_dot_gat_forward.1} parent=11 // pred_check_branch
        %546 = sbr.rel (%p544) target = $region20
      $region19: #{distributed_dot_gat_forward.1} parent=11 // pred_region
        _
      $region20: #{distributed_dot_gat_forward.1} parent=11 // pred_fallthru
        _
      // Predicated region
      $region21: #{distributed_dot_gat_forward.1} parent=11 // pred_check
        %p547 = pneg %p143
      $region22: #{distributed_dot_gat_forward.1} parent=11 // pred_check_branch
        %549 = sbr.rel (%p547) target = $region24
      $region23: #{distributed_dot_gat_forward.1} parent=11 // pred_region
        _
      $region24: #{distributed_dot_gat_forward.1} parent=11 // pred_fallthru
        _
      // Predicated region
      $region25: #{distributed_dot_gat_forward.1} parent=11 // pred_check
        %p550 = pneg %p164
      $region26: #{distributed_dot_gat_forward.1} parent=11 // pred_check_branch
        %552 = sbr.rel (%p550) target = $region28
      $region27: #{distributed_dot_gat_forward.1} parent=11 // pred_region
        _
      $region28: #{distributed_dot_gat_forward.1} parent=11 // pred_fallthru
        _
      // Predicated region
      $region29: #{distributed_dot_gat_forward.1} parent=11 // pred_check
        %p553 = pneg %p185
      $region30: #{distributed_dot_gat_forward.1} parent=11 // pred_check_branch
        %555 = sbr.rel (%p553) target = $region32
      $region31: #{distributed_dot_gat_forward.1} parent=11 // pred_region
        _
      $region32: #{distributed_dot_gat_forward.1} parent=11 // pred_fallthru
        _
      // Predicated region
      $region33: #{distributed_dot_gat_forward.1} parent=11 // pred_check
        %p556 = pneg %p206
      $region34: #{distributed_dot_gat_forward.1} parent=11 // pred_check_branch
        %558 = sbr.rel (%p556) target = $region36
      $region35: #{distributed_dot_gat_forward.1} parent=11 // pred_region
        _
      $region36: #{distributed_dot_gat_forward.1} parent=11 // pred_fallthru
        _
      // Predicated region
      $region37: #{distributed_dot_gat_forward.1} parent=11 // pred_check
        %p559 = pneg %p227
      $region38: #{distributed_dot_gat_forward.1} parent=11 // pred_check_branch
        %561 = sbr.rel (%p559) target = $region40
      $region39: #{distributed_dot_gat_forward.1} parent=11 // pred_region
        _
      $region40: #{distributed_dot_gat_forward.1} parent=11 // pred_fallthru
        _
      // Predicated region
      $region41: #{distributed_dot_gat_forward.1} parent=11 // pred_check
        %p562 = pneg %p248
      $region42: #{distributed_dot_gat_forward.1} parent=11 // pred_check_branch
        %564 = sbr.rel (%p562) target = $region44
      $region43: #{distributed_dot_gat_forward.1} parent=11 // pred_region
        _
      $region44: #{distributed_dot_gat_forward.1} parent=11 // pred_fallthru
        _
      // Predicated region
      $region45: #{distributed_dot_gat_forward.1} parent=11 // pred_check
        %p565 = pneg %p269
      $region46: #{distributed_dot_gat_forward.1} parent=11 // pred_check_branch
        %567 = sbr.rel (%p565) target = $region48
      $region47: #{distributed_dot_gat_forward.1} parent=11 // pred_region
        _
      $region48: #{distributed_dot_gat_forward.1} parent=11 // pred_fallthru
        _
      // Predicated region
      $region49: #{distributed_dot_gat_forward.1} parent=11 // pred_check
        %p568 = pneg %p290
      $region50: #{distributed_dot_gat_forward.1} parent=11 // pred_check_branch
        %570 = sbr.rel (%p568) target = $region52
      $region51: #{distributed_dot_gat_forward.1} parent=11 // pred_region
        _
      $region52: #{distributed_dot_gat_forward.1} parent=11 // pred_fallthru
        _
      // Predicated region
      $region53: #{distributed_dot_gat_forward.1} parent=11 // pred_check
        %p571 = pneg %p311
      $region54: #{distributed_dot_gat_forward.1} parent=11 // pred_check_branch
        %573 = sbr.rel (%p571) target = $region56
      $region55: #{distributed_dot_gat_forward.1} parent=11 // pred_region
        _
      $region56: #{distributed_dot_gat_forward.1} parent=11 // pred_fallthru
        _
      // Predicated region
      $region57: #{distributed_dot_gat_forward.1} parent=11 // pred_check
        %p574 = pneg %p332
      $region58: #{distributed_dot_gat_forward.1} parent=11 // pred_check_branch
        %576 = sbr.rel (%p574) target = $region60
      $region59: #{distributed_dot_gat_forward.1} parent=11 // pred_region
        _
      $region60: #{distributed_dot_gat_forward.1} parent=11 // pred_fallthru
        _
      // Predicated region
      $region61: #{distributed_dot_gat_forward.1} parent=11 // pred_check
        %p577 = pneg %p353
      $region62: #{distributed_dot_gat_forward.1} parent=11 // pred_check_branch
        %579 = sbr.rel (%p577) target = $region64
      $region63: #{distributed_dot_gat_forward.1} parent=11 // pred_region
        _
      $region64: #{distributed_dot_gat_forward.1} parent=11 // pred_fallthru
        _
      // Predicated region
      $region65: #{distributed_dot_gat_forward.1} parent=11 // pred_check
        %p580 = pneg %p374
      $region66: #{distributed_dot_gat_forward.1} parent=11 // pred_check_branch
        %582 = sbr.rel (%p580) target = $region68
      $region67: #{distributed_dot_gat_forward.1} parent=11 // pred_region
        _
      $region68: #{distributed_dot_gat_forward.1} parent=11 // pred_fallthru
        _
      // Predicated region
      $region69: #{distributed_dot_gat_forward.1} parent=11 // pred_check
        %p583 = pneg %p395
      $region70: #{distributed_dot_gat_forward.1} parent=11 // pred_check_branch
        %585 = sbr.rel (%p583) target = $region72
      $region71: #{distributed_dot_gat_forward.1} parent=11 // pred_region
        _
      $region72: #{distributed_dot_gat_forward.1} parent=11 // pred_fallthru
        _
      // Predicated region
      $region73: #{distributed_dot_gat_forward.1} parent=11 // pred_check
        %p586 = pneg %p416
      $region74: #{distributed_dot_gat_forward.1} parent=11 // pred_check_branch
        %588 = sbr.rel (%p586) target = $region76
      $region75: #{distributed_dot_gat_forward.1} parent=11 // pred_region
        _
      $region76: #{distributed_dot_gat_forward.1} parent=11 // pred_fallthru
        _
      // Predicated region
      $region77: #{distributed_dot_gat_forward.1} parent=11 // pred_check
        %p589 = pneg %p437
      $region78: #{distributed_dot_gat_forward.1} parent=11 // pred_check_branch
        %591 = sbr.rel (%p589) target = $region80
      $region79: #{distributed_dot_gat_forward.1} parent=11 // pred_region
        _
      $region80: #{distributed_dot_gat_forward.1} parent=11 // pred_fallthru
        _
      // Predicated region
      $region81: #{distributed_dot_gat_forward.1} parent=11 // pred_check
        %p592 = pneg %p458
      $region82: #{distributed_dot_gat_forward.1} parent=11 // pred_check_branch
        %594 = sbr.rel (%p592) target = $region84
      $region83: #{distributed_dot_gat_forward.1} parent=11 // pred_region
        _
      $region84: #{distributed_dot_gat_forward.1} parent=11 // pred_fallthru
        _
      // Predicated region
      $region85: #{distributed_dot_gat_forward.1} parent=11 // pred_check
        %p595 = pneg %p479
      $region86: #{distributed_dot_gat_forward.1} parent=11 // pred_check_branch
        %597 = sbr.rel (%p595) target = $region88
      $region87: #{distributed_dot_gat_forward.1} parent=11 // pred_region
        _
      $region88: #{distributed_dot_gat_forward.1} parent=11 // pred_fallthru
        _
      // Predicated region
      $region89: #{distributed_dot_gat_forward.1} parent=11 // pred_check
        %p598 = pneg %p500
      $region90: #{distributed_dot_gat_forward.1} parent=11 // pred_check_branch
        %600 = sbr.rel (%p598) target = $region92
      $region91: #{distributed_dot_gat_forward.1} parent=11 // pred_region
        _
      $region92: #{distributed_dot_gat_forward.1} parent=11 // pred_fallthru
        _
    $region12: #{distributed_dot_gat_forward.1} parent=5 // pred_fallthru
      _
    %p601 = scmp.lt.s32.totalorder %s28, 2
    // Predicated region
    $region93: #{distributed_dot_gat_forward.1} parent=5 // pred_check
      %p602 = pneg %p601
    $region94: #{distributed_dot_gat_forward.1} parent=5 // pred_check_branch
      %604 = sbr.rel (%p602) target = $region96
    $region95: #{distributed_dot_gat_forward.1} parent=5 // pred_region
      // Predicated region
      $region97: #{distributed_dot_gat_forward.1} parent=95 // pred_check
        %p605 = pneg %p48
      $region98: #{distributed_dot_gat_forward.1} parent=95 // pred_check_branch
        %607 = sbr.rel (%p605) target = $region100
      $region99: #{distributed_dot_gat_forward.1} parent=95 // pred_region
        %s608 = smul.u32 8, %s28
        %p609 = scmp.lt.s32.totalorder %s608, 15
        %s610 = scalar_select %p609, %s608, 15
        %s611 = smul.addr %s610, 4
        %s612 = scalar_lea.vmem %s0, %s611
        %s613 = smul.u32 8, %s28
      $region100: #{distributed_dot_gat_forward.1} parent=95 // pred_fallthru
        _
      // Predicated region
      $region101: #{distributed_dot_gat_forward.1} parent=95 // pred_check
        %p614 = pneg %p74
      $region102: #{distributed_dot_gat_forward.1} parent=95 // pred_check_branch
        %616 = sbr.rel (%p614) target = $region104
      $region103: #{distributed_dot_gat_forward.1} parent=95 // pred_region
        %s617 = smul.u32 8, %s28
        %p618 = scmp.lt.s32.totalorder %s617, 15
        %s619 = scalar_select %p618, %s617, 15
        %s620 = smul.addr %s619, 8
        %s621 = scalar_lea.vmem %s1, %s620
        %s622 = smul.u32 8, %s28
      $region104: #{distributed_dot_gat_forward.1} parent=95 // pred_fallthru
        _
    $region96: #{distributed_dot_gat_forward.1} parent=5 // pred_fallthru
      _
    %p623 = scmp.le.s32.totalorder 1, %s28
    %p624 = scmp.lt.s32.totalorder %s28, 3
    %p625 = pnand %p623, %p624
    %p626 = pneg %p625
    // Predicated region
    $region105: #{distributed_dot_gat_forward.1} parent=5 // pred_check
      _
    $region106: #{distributed_dot_gat_forward.1} parent=5 // pred_check_branch
      %628 = sbr.rel (%p625) target = $region108
    $region107: #{distributed_dot_gat_forward.1} parent=5 // pred_region
      %s629 = ssub.s32 %s28, 1
      %s630 = smul.u32 8, %s33
      %p631 = scmp.lt.s32.totalorder %s630, 15
      %s632 = scalar_select %p631, %s630, 15
      %s633 = smul.addr %s632, 4
      %s634 = scalar_lea.vmem %s0, %s633
      %p635 = pneg %p54
      %p636 = pneg %p51
      %s637 = smul.u32 8, %s33
      %p638 = scmp.lt.s32.totalorder %s637, 15
      %s639 = scalar_select %p638, %s637, 15
      %s640 = smul.addr %s639, 8
      %s641 = scalar_lea.vmem %s1, %s640
      %p642 = pneg %p80
      %p643 = pneg %p77
      %p644 = pneg %p101
      %p645 = pneg %p98
      %p646 = pneg %p122
      %p647 = pneg %p119
      %p648 = pneg %p143
      %p649 = pneg %p140
      %p650 = pneg %p164
      %p651 = pneg %p161
      %p652 = pneg %p185
      %p653 = pneg %p182
      %p654 = pneg %p206
      %p655 = pneg %p203
      %p656 = pneg %p227
      %p657 = pneg %p224
      %p658 = pneg %p248
      %p659 = pneg %p245
      %p660 = pneg %p269
      %p661 = pneg %p266
      %p662 = pneg %p290
      %p663 = pneg %p287
      %p664 = pneg %p311
      %p665 = pneg %p308
      %p666 = pneg %p332
      %p667 = pneg %p329
      %p668 = pneg %p353
      %p669 = pneg %p350
      %p670 = pneg %p374
      %p671 = pneg %p371
      %p672 = pneg %p395
      %p673 = pneg %p392
      %p674 = pneg %p416
      %p675 = pneg %p413
      %p676 = pneg %p437
      %p677 = pneg %p434
      %p678 = pneg %p458
      %p679 = pneg %p455
      %p680 = pneg %p479
      %p681 = pneg %p476
      %p682 = pneg %p500
      %p683 = pneg %p497
      %p684 = pneg %p526
      %p685 = pneg %p523
      %p686 = scmp.lt.s32.totalorder %s33, 1
      %s687 = scalar_select %p686, %s33, 1
      %s688 = smul.addr %s687, 8
      %s689 = scalar_lea.vmem %s22, %s688
      %s690 = smul.u32 8, %s33
      %p691 = scmp.lt.s32.totalorder %s690, 15
      %s692 = scalar_select %p691, %s690, 15
      %s693 = smul.addr %s692, 4
      %s694 = scalar_lea.vmem %s0, %s693
      %s695 = smul.u32 8, %s33
      %s696 = smul.u32 8, %s33
      %p697 = scmp.lt.s32.totalorder %s696, 15
      %s698 = scalar_select %p697, %s696, 15
      %s699 = smul.addr %s698, 8
      %s700 = scalar_lea.vmem %s1, %s699
      %s701 = smul.u32 8, %s33
      %p702 = scmp.lt.s32.totalorder %s33, 1
      %s703 = scalar_select %p702, %s33, 1
      %s704 = smul.addr %s703, 8
      %s705 = scalar_lea.vmem %s22, %s704
      %v707 = vld [vmem:[%s694] sm:$0xf]
      %v708 = vld [vmem:[%s694 + $0x4] sm:$0xf]
      %v709 = vld [vmem:[%s694 + $0x8] sm:$0xf]
      %v710 = vld [vmem:[%s694 + $0xc] sm:$0xf]
      %v711 = vld [vmem:[%s694 + $0x10] sm:$0xf]
      %v712 = vld [vmem:[%s694 + $0x14] sm:$0xf]
      %v713 = vld [vmem:[%s694 + $0x18] sm:$0xf]
      %v714 = vld [vmem:[%s694 + $0x1c] sm:$0xf]
      %v715 = vld [vmem:[%s2] sm:$0xf]
      %v716 = vld [vmem:[%s2 + $0x4] sm:$0xf]
      %v717 = vld [vmem:[%s2 + $0x8] sm:$0xf]
      %v718 = vld [vmem:[%s2 + $0xc] sm:$0xf]
      %v719 = vld [vmem:[%s2 + $0x10] sm:$0x1]
      %v720 = vld [vmem:[%s3] sm:$0x1]
      %v722 = vperm.slane %v720, 0
      %v732 = vunpack.c.l.b16 %v707
      %v733 = vunpack.c.l.b16 %v708
      %v734 = vunpack.c.l.b16 %v709
      %v735 = vunpack.c.l.b16 %v710
      %v736 = vunpack.c.l.b16 %v711
      %v737 = vunpack.c.l.b16 %v712
      %v738 = vunpack.c.l.b16 %v713
      %v739 = vunpack.c.l.b16 %v714
      %v740 = vpack.c.b16 %v733, %v732
      %v741 = vpack.c.b16 %v735, %v734
      %v742 = vpack.c.b16 %v737, %v736
      %v743 = vpack.c.b16 %v739, %v738
      %v749 = vunpack.c.l.b16 %v715
      %v750 = vunpack.c.l.b16 %v716
      %v751 = vunpack.c.l.b16 %v717
      %v752 = vunpack.c.l.b16 %v718
      %v753 = vunpack.c.l.b16 %v719
      %v754 = vpack.c.b16 %v750, %v749
      %v755 = vpack.c.b16 %v752, %v751
      %v756 = vpack.c.b16 %v753, %v753
      %vm759 = vcmask 269312
      %v761 = vsel %vm759, %v740, 0
      %v764 = vsel %vm759, %v741, 0
      %v767 = vsel %vm759, %v742, 0
      %v770 = vsel %vm759, %v743, 0
      %vm772 = vcmask 1040384
      %v773 = vsel 0, 4294967295, 65535
      %v774 = vsel %vm772, %v773, 0
      %v776 = vand.u32 %v756, %v774
      %778 = vmatpush.bf16.msra.mxu0 0
      %779 = vmatpush.bf16.msra.mxu0 0
      %780 = vmatpush.bf16.msra.mxu0 0
      %781 = vmatpush.bf16.msra.mxu0 0
      %782 = vmatpush.bf16.msra.mxu0 0
      %783 = vmatpush.bf16.msra.mxu0 %v776
      %784 = vmatpush.bf16.msra.mxu0 %v755
      %785 = vmatpush.bf16.msra.mxu0 %v754
      %786 = vmatmul.bf16.gmra.mxu0 %v761
      %v787 = vpop.f32.mrf.mxu0
      %v788 = vadd.f32 %v722, %v787
      %v789 = vpop.f32.mrf.mxu0
      %v790 = vadd.f32 %v722, %v789
      %791 = vmatmul.bf16.gmra.mxu0 %v764
      %v792 = vpop.f32.mrf.mxu0
      %v793 = vadd.f32 %v722, %v792
      %v794 = vpop.f32.mrf.mxu0
      %v795 = vadd.f32 %v722, %v794
      %796 = vmatmul.bf16.gmra.mxu0 %v767
      %v797 = vpop.f32.mrf.mxu0
      %v798 = vadd.f32 %v722, %v797
      %v799 = vpop.f32.mrf.mxu0
      %v800 = vadd.f32 %v722, %v799
      %801 = vmatmul.bf16.gmra.mxu0 %v770
      %v802 = vpop.f32.mrf.mxu0
      %v803 = vadd.f32 %v722, %v802
      %v804 = vpop.f32.mrf.mxu0
      %v805 = vadd.f32 %v722, %v804
      %806 = vdwg.mxu0
      %v807 = vxor.u32 %v788, 2147483648
      %v808 = vxor.u32 %v790, 2147483648
      %v809 = vxor.u32 %v793, 2147483648
      %v810 = vxor.u32 %v795, 2147483648
      %v811 = vxor.u32 %v798, 2147483648
      %v812 = vxor.u32 %v800, 2147483648
      %v813 = vxor.u32 %v803, 2147483648
      %v814 = vxor.u32 %v805, 2147483648
      %v815 = vmul.f32 %v807, 1.442695
      %v816 = vpow.pop %v815
      %v817 = vmul.f32 %v808, 1.442695
      %v818 = vpow.pop %v817
      %v819 = vmul.f32 %v809, 1.442695
      %v820 = vpow.pop %v819
      %v821 = vmul.f32 %v810, 1.442695
      %v822 = vpow.pop %v821
      %v823 = vmul.f32 %v811, 1.442695
      %v824 = vpow.pop %v823
      %v825 = vmul.f32 %v812, 1.442695
      %v826 = vpow.pop %v825
      %v827 = vmul.f32 %v813, 1.442695
      %v828 = vpow.pop %v827
      %v829 = vmul.f32 %v814, 1.442695
      %v830 = vpow.pop %v829
      %v831 = vadd.f32 %v816, 1.0
      %v832 = vadd.f32 %v818, 1.0
      %v833 = vadd.f32 %v820, 1.0
      %v834 = vadd.f32 %v822, 1.0
      %v835 = vadd.f32 %v824, 1.0
      %v836 = vadd.f32 %v826, 1.0
      %v837 = vadd.f32 %v828, 1.0
      %v838 = vadd.f32 %v830, 1.0
      %v839 = vrcp.pop %v831
      %v840 = vmul.f32 %v831, %v839
      %v841 = vsub.f32 1.0, %v840
      %v842 = vmul.f32 %v839, %v841
      %v843 = vadd.f32 %v839, %v842
      %vm844 = vweird.f32 %v831
      %vm845 = vweird.f32 %v839
      %vm846 = vmor %vm844, %vm845
      %v847 = vsel %vm846, %v839, %v843
      %v848 = vand.u32 2147483647, %v831
      %vm849 = vcmp.eq.f32.partialorder %v848, 8.507059e+37
      %v850 = vand.u32 %v831, 2147483648
      %v851 = vor.u32 1.1754944e-38, %v850
      %v852 = vsel %vm849, %v851, %v847
      %v853 = vmul.f32 1.0, %v852
      %v854 = vrcp.pop %v832
      %v855 = vmul.f32 %v832, %v854
      %v856 = vsub.f32 1.0, %v855
      %v857 = vmul.f32 %v854, %v856
      %v858 = vadd.f32 %v854, %v857
      %vm859 = vweird.f32 %v832
      %vm860 = vweird.f32 %v854
      %vm861 = vmor %vm859, %vm860
      %v862 = vsel %vm861, %v854, %v858
      %v863 = vand.u32 2147483647, %v832
      %vm864 = vcmp.eq.f32.partialorder %v863, 8.507059e+37
      %v865 = vand.u32 %v832, 2147483648
      %v866 = vor.u32 1.1754944e-38, %v865
      %v867 = vsel %vm864, %v866, %v862
      %v868 = vmul.f32 1.0, %v867
      %v869 = vrcp.pop %v833
      %v870 = vmul.f32 %v833, %v869
      %v871 = vsub.f32 1.0, %v870
      %v872 = vmul.f32 %v869, %v871
      %v873 = vadd.f32 %v869, %v872
      %vm874 = vweird.f32 %v833
      %vm875 = vweird.f32 %v869
      %vm876 = vmor %vm874, %vm875
      %v877 = vsel %vm876, %v869, %v873
      %v878 = vand.u32 2147483647, %v833
      %vm879 = vcmp.eq.f32.partialorder %v878, 8.507059e+37
      %v880 = vand.u32 %v833, 2147483648
      %v881 = vor.u32 1.1754944e-38, %v880
      %v882 = vsel %vm879, %v881, %v877
      %v883 = vmul.f32 1.0, %v882
      %v884 = vrcp.pop %v834
      %v885 = vmul.f32 %v834, %v884
      %v886 = vsub.f32 1.0, %v885
      %v887 = vmul.f32 %v884, %v886
      %v888 = vadd.f32 %v884, %v887
      %vm889 = vweird.f32 %v834
      %vm890 = vweird.f32 %v884
      %vm891 = vmor %vm889, %vm890
      %v892 = vsel %vm891, %v884, %v888
      %v893 = vand.u32 2147483647, %v834
      %vm894 = vcmp.eq.f32.partialorder %v893, 8.507059e+37
      %v895 = vand.u32 %v834, 2147483648
      %v896 = vor.u32 1.1754944e-38, %v895
      %v897 = vsel %vm894, %v896, %v892
      %v898 = vmul.f32 1.0, %v897
      %v899 = vrcp.pop %v835
      %v900 = vmul.f32 %v835, %v899
      %v901 = vsub.f32 1.0, %v900
      %v902 = vmul.f32 %v899, %v901
      %v903 = vadd.f32 %v899, %v902
      %vm904 = vweird.f32 %v835
      %vm905 = vweird.f32 %v899
      %vm906 = vmor %vm904, %vm905
      %v907 = vsel %vm906, %v899, %v903
      %v908 = vand.u32 2147483647, %v835
      %vm909 = vcmp.eq.f32.partialorder %v908, 8.507059e+37
      %v910 = vand.u32 %v835, 2147483648
      %v911 = vor.u32 1.1754944e-38, %v910
      %v912 = vsel %vm909, %v911, %v907
      %v913 = vmul.f32 1.0, %v912
      %v914 = vrcp.pop %v836
      %v915 = vmul.f32 %v836, %v914
      %v916 = vsub.f32 1.0, %v915
      %v917 = vmul.f32 %v914, %v916
      %v918 = vadd.f32 %v914, %v917
      %vm919 = vweird.f32 %v836
      %vm920 = vweird.f32 %v914
      %vm921 = vmor %vm919, %vm920
      %v922 = vsel %vm921, %v914, %v918
      %v923 = vand.u32 2147483647, %v836
      %vm924 = vcmp.eq.f32.partialorder %v923, 8.507059e+37
      %v925 = vand.u32 %v836, 2147483648
      %v926 = vor.u32 1.1754944e-38, %v925
      %v927 = vsel %vm924, %v926, %v922
      %v928 = vmul.f32 1.0, %v927
      %v929 = vrcp.pop %v837
      %v930 = vmul.f32 %v837, %v929
      %v931 = vsub.f32 1.0, %v930
      %v932 = vmul.f32 %v929, %v931
      %v933 = vadd.f32 %v929, %v932
      %vm934 = vweird.f32 %v837
      %vm935 = vweird.f32 %v929
      %vm936 = vmor %vm934, %vm935
      %v937 = vsel %vm936, %v929, %v933
      %v938 = vand.u32 2147483647, %v837
      %vm939 = vcmp.eq.f32.partialorder %v938, 8.507059e+37
      %v940 = vand.u32 %v837, 2147483648
      %v941 = vor.u32 1.1754944e-38, %v940
      %v942 = vsel %vm939, %v941, %v937
      %v943 = vmul.f32 1.0, %v942
      %v944 = vrcp.pop %v838
      %v945 = vmul.f32 %v838, %v944
      %v946 = vsub.f32 1.0, %v945
      %v947 = vmul.f32 %v944, %v946
      %v948 = vadd.f32 %v944, %v947
      %vm949 = vweird.f32 %v838
      %vm950 = vweird.f32 %v944
      %vm951 = vmor %vm949, %vm950
      %v952 = vsel %vm951, %v944, %v948
      %v953 = vand.u32 2147483647, %v838
      %vm954 = vcmp.eq.f32.partialorder %v953, 8.507059e+37
      %v955 = vand.u32 %v838, 2147483648
      %v956 = vor.u32 1.1754944e-38, %v955
      %v957 = vsel %vm954, %v956, %v952
      %v958 = vmul.f32 1.0, %v957
      %v959 = vmul.f32 %v788, %v853
      %v960 = vmul.f32 %v790, %v868
      %v961 = vmul.f32 %v793, %v883
      %v962 = vmul.f32 %v795, %v898
      %v963 = vmul.f32 %v798, %v913
      %v964 = vmul.f32 %v800, %v928
      %v965 = vmul.f32 %v803, %v943
      %v966 = vmul.f32 %v805, %v958
      %v967 = vpack.c.bf16 %v960, %v959
      %v968 = vpack.c.bf16 %v962, %v961
      %v969 = vpack.c.bf16 %v964, %v963
      %v970 = vpack.c.bf16 %v966, %v965
      %v971 = vld [vmem:[%s4] sm:$0xf]
      %v972 = vld [vmem:[%s4 + $0x4] sm:$0xf]
      %v973 = vld [vmem:[%s4 + $0x8] sm:$0xf]
      %v974 = vld [vmem:[%s4 + $0xc] sm:$0xf]
      %v975 = vld [vmem:[%s5] sm:$0x1]
      %v977 = vperm.slane %v975, 0
      %v983 = vunpack.c.l.b16 %v971
      %v984 = vunpack.c.l.b16 %v972
      %v985 = vunpack.c.l.b16 %v973
      %v986 = vunpack.c.l.b16 %v974
      %v987 = vpack.c.b16 %v984, %v983
      %v988 = vpack.c.b16 %v986, %v985
      %vm991 = vcmask 261120
      %v993 = vsel %vm991, %v967, 0
      %v996 = vsel %vm991, %v968, 0
      %v999 = vsel %vm991, %v969, 0
      %v1002 = vsel %vm991, %v970, 0
      %1004 = vmatpush.bf16.msra.mxu0 0
      %1005 = vmatpush.bf16.msra.mxu0 0
      %1006 = vmatpush.bf16.msra.mxu0 0
      %1007 = vmatpush.bf16.msra.mxu0 0
      %1008 = vmatpush.bf16.msra.mxu0 0
      %1009 = vmatpush.bf16.msra.mxu0 0
      %1010 = vmatpush.bf16.msra.mxu0 %v988
      %1011 = vmatpush.bf16.msra.mxu0 %v987
      %1012 = vmatmul.bf16.gmra.mxu0 %v993
      %v1013 = vpop.f32.mrf.mxu0
      %v1014 = vadd.f32 %v977, %v1013
      %v1015 = vpop.f32.mrf.mxu0
      %v1016 = vadd.f32 %v977, %v1015
      %1017 = vmatmul.bf16.gmra.mxu0 %v996
      %v1018 = vpop.f32.mrf.mxu0
      %v1019 = vadd.f32 %v977, %v1018
      %v1020 = vpop.f32.mrf.mxu0
      %v1021 = vadd.f32 %v977, %v1020
      %1022 = vmatmul.bf16.gmra.mxu0 %v999
      %v1023 = vpop.f32.mrf.mxu0
      %v1024 = vadd.f32 %v977, %v1023
      %v1025 = vpop.f32.mrf.mxu0
      %v1026 = vadd.f32 %v977, %v1025
      %1027 = vmatmul.bf16.gmra.mxu0 %v1002
      %v1028 = vpop.f32.mrf.mxu0
      %v1029 = vadd.f32 %v977, %v1028
      %v1030 = vpop.f32.mrf.mxu0
      %v1031 = vadd.f32 %v977, %v1030
      %1032 = vdwg.mxu0
      %v1033 = vld [vmem:[%s700] sm:$0xff]
      %v1034 = vld [vmem:[%s700 + $0x8] sm:$0xff]
      %v1035 = vld [vmem:[%s700 + $0x10] sm:$0xff]
      %v1036 = vld [vmem:[%s700 + $0x18] sm:$0xff]
      %v1037 = vld [vmem:[%s700 + $0x20] sm:$0xff]
      %v1038 = vld [vmem:[%s700 + $0x28] sm:$0xff]
      %v1039 = vld [vmem:[%s700 + $0x30] sm:$0xff]
      %v1040 = vld [vmem:[%s700 + $0x38] sm:$0xff]
      %vm1041 = vcmp.gt.f32.partialorder %v1033, 0.0
      %vm1042 = vcmp.gt.f32.partialorder %v1034, 0.0
      %vm1043 = vcmp.gt.f32.partialorder %v1035, 0.0
      %vm1044 = vcmp.gt.f32.partialorder %v1036, 0.0
      %vm1045 = vcmp.gt.f32.partialorder %v1037, 0.0
      %vm1046 = vcmp.gt.f32.partialorder %v1038, 0.0
      %vm1047 = vcmp.gt.f32.partialorder %v1039, 0.0
      %vm1048 = vcmp.gt.f32.partialorder %v1040, 0.0
      %v1049 = vld [vmem:[%s6] sm:$0x1]
      %v1050 = vsel %vm1041, 1, 0
      %v1051 = vsel %vm1042, 1, 0
      %v1052 = vsel %vm1043, 1, 0
      %v1053 = vsel %vm1044, 1, 0
      %v1054 = vsel %vm1045, 1, 0
      %v1055 = vsel %vm1046, 1, 0
      %v1056 = vsel %vm1047, 1, 0
      %v1057 = vsel %vm1048, 1, 0
      %1058 = vset.pattern.permute.xlu0 0
      %1059 = vperm.xlu0 %1058, %v1050
      %v1060 = vpop.permute.xlu0 %1059
      %1061 = vset.pattern.permute.xlu0 0
      %1062 = vperm.xlu0 %1061, %v1051
      %v1063 = vpop.permute.xlu0 %1062
      %1064 = vset.pattern.permute.xlu0 0
      %1065 = vperm.xlu0 %1064, %v1052
      %v1066 = vpop.permute.xlu0 %1065
      %1067 = vset.pattern.permute.xlu0 0
      %1068 = vperm.xlu0 %1067, %v1053
      %v1069 = vpop.permute.xlu0 %1068
      %1070 = vset.pattern.permute.xlu0 0
      %1071 = vperm.xlu0 %1070, %v1054
      %v1072 = vpop.permute.xlu0 %1071
      %1073 = vset.pattern.permute.xlu0 0
      %1074 = vperm.xlu0 %1073, %v1055
      %v1075 = vpop.permute.xlu0 %1074
      %1076 = vset.pattern.permute.xlu0 0
      %1077 = vperm.xlu0 %1076, %v1056
      %v1078 = vpop.permute.xlu0 %1077
      %1079 = vset.pattern.permute.xlu0 0
      %1080 = vperm.xlu0 %1079, %v1057
      %v1081 = vpop.permute.xlu0 %1080
      %vm1082 = vcmp.eq.s32.totalorder %v1060, 1
      %vm1083 = vcmp.eq.s32.totalorder %v1063, 1
      %vm1084 = vcmp.eq.s32.totalorder %v1066, 1
      %vm1085 = vcmp.eq.s32.totalorder %v1069, 1
      %vm1086 = vcmp.eq.s32.totalorder %v1072, 1
      %vm1087 = vcmp.eq.s32.totalorder %v1075, 1
      %vm1088 = vcmp.eq.s32.totalorder %v1078, 1
      %vm1089 = vcmp.eq.s32.totalorder %v1081, 1
      %v1091 = vperm.slane %v1049, 0
      %v1093 = vsel %vm1082, %v1014, %v1091
      %v1094 = vsel %vm1083, %v1016, %v1091
      %v1095 = vsel %vm1084, %v1019, %v1091
      %v1096 = vsel %vm1085, %v1021, %v1091
      %v1097 = vsel %vm1086, %v1024, %v1091
      %v1098 = vsel %vm1087, %v1026, %v1091
      %v1099 = vsel %vm1088, %v1029, %v1091
      %v1100 = vsel %vm1089, %v1031, %v1091
      %v1101 = vpack.c.bf16 %v1093, %v1093
      %v1102 = vld [vmem:[%s7] sm:$0xf]
      %v1103 = vld [vmem:[%s7 + $0x4] sm:$0xf]
      %v1104 = vld [vmem:[%s7 + $0x8] sm:$0xf]
      %v1105 = vld [vmem:[%s7 + $0xc] sm:$0xf]
      %v1106 = vpack.c.bf16 %v1094, %v1094
      %v1107 = vld [vmem:[%s7 + $0x10] sm:$0xf]
      %v1108 = vld [vmem:[%s7 + $0x14] sm:$0xf]
      %v1109 = vld [vmem:[%s7 + $0x18] sm:$0xf]
      %v1110 = vld [vmem:[%s7 + $0x1c] sm:$0xf]
      %v1115 = vunpack.c.l.b16 %v1107
      %v1116 = vunpack.c.l.b16 %v1108
      %v1117 = vunpack.c.l.b16 %v1109
      %v1118 = vunpack.c.l.b16 %v1110
      %v1119 = vpack.c.b16 %v1116, %v1115
      %v1120 = vpack.c.b16 %v1118, %v1117
      %v1124 = vsel %vm991, %v1106, 0
      %1126 = vmatpush.bf16.msra.mxu0 0
      %1127 = vmatpush.bf16.msra.mxu0 0
      %1128 = vmatpush.bf16.msra.mxu0 0
      %1129 = vmatpush.bf16.msra.mxu0 0
      %1130 = vmatpush.bf16.msra.mxu0 0
      %1131 = vmatpush.bf16.msra.mxu0 0
      %1132 = vmatpush.bf16.msra.mxu0 %v1120
      %1133 = vmatpush.bf16.msra.mxu0 %v1119
      %1134 = vmatmul.bf16.gmra.mxu0 %v1124
      %v1135 = vpop.f32.mrf.mxu0
      %v1136 = vadd.f32 0.0, %v1135
      %v1137 = vpop.f32.mrf.mxu0
      %1138 = vdwg.mxu0
      %v1143 = vunpack.c.l.b16 %v1102
      %v1144 = vunpack.c.l.b16 %v1103
      %v1145 = vunpack.c.l.b16 %v1104
      %v1146 = vunpack.c.l.b16 %v1105
      %v1147 = vpack.c.b16 %v1144, %v1143
      %v1148 = vpack.c.b16 %v1146, %v1145
      %v1152 = vsel %vm991, %v1101, 0
      %1154 = vmatpush.bf16.msra.mxu0 0
      %1155 = vmatpush.bf16.msra.mxu0 0
      %1156 = vmatpush.bf16.msra.mxu0 0
      %1157 = vmatpush.bf16.msra.mxu0 0
      %1158 = vmatpush.bf16.msra.mxu0 0
      %1159 = vmatpush.bf16.msra.mxu0 0
      %1160 = vmatpush.bf16.msra.mxu0 %v1148
      %1161 = vmatpush.bf16.msra.mxu0 %v1147
      %1162 = vmatmul.bf16.gmra.mxu0 %v1152
      %v1163 = vpop.f32.mrf.mxu0
      %v1164 = vadd.f32 %v1136, %v1163
      %v1165 = vpop.f32.mrf.mxu0
      %1166 = vdwg.mxu0
      %v1167 = vpack.c.bf16 %v1095, %v1095
      %v1168 = vld [vmem:[%s7 + $0x20] sm:$0xf]
      %v1169 = vld [vmem:[%s7 + $0x24] sm:$0xf]
      %v1170 = vld [vmem:[%s7 + $0x28] sm:$0xf]
      %v1171 = vld [vmem:[%s7 + $0x2c] sm:$0xf]
      %v1176 = vunpack.c.l.b16 %v1168
      %v1177 = vunpack.c.l.b16 %v1169
      %v1178 = vunpack.c.l.b16 %v1170
      %v1179 = vunpack.c.l.b16 %v1171
      %v1180 = vpack.c.b16 %v1177, %v1176
      %v1181 = vpack.c.b16 %v1179, %v1178
      %v1185 = vsel %vm991, %v1167, 0
      %1187 = vmatpush.bf16.msra.mxu0 0
      %1188 = vmatpush.bf16.msra.mxu0 0
      %1189 = vmatpush.bf16.msra.mxu0 0
      %1190 = vmatpush.bf16.msra.mxu0 0
      %1191 = vmatpush.bf16.msra.mxu0 0
      %1192 = vmatpush.bf16.msra.mxu0 0
      %1193 = vmatpush.bf16.msra.mxu0 %v1181
      %1194 = vmatpush.bf16.msra.mxu0 %v1180
      %1195 = vmatmul.bf16.gmra.mxu0 %v1185
      %v1196 = vpop.f32.mrf.mxu0
      %v1197 = vadd.f32 0.0, %v1196
      %v1198 = vpop.f32.mrf.mxu0
      %1199 = vdwg.mxu0
      %v1200 = vadd.f32 %v1164, %v1197
      %v1201 = vpack.c.bf16 %v1096, %v1096
      %v1202 = vld [vmem:[%s7 + $0x30] sm:$0xf]
      %v1203 = vld [vmem:[%s7 + $0x34] sm:$0xf]
      %v1204 = vld [vmem:[%s7 + $0x38] sm:$0xf]
      %v1205 = vld [vmem:[%s7 + $0x3c] sm:$0xf]
      %v1210 = vunpack.c.l.b16 %v1202
      %v1211 = vunpack.c.l.b16 %v1203
      %v1212 = vunpack.c.l.b16 %v1204
      %v1213 = vunpack.c.l.b16 %v1205
      %v1214 = vpack.c.b16 %v1211, %v1210
      %v1215 = vpack.c.b16 %v1213, %v1212
      %v1219 = vsel %vm991, %v1201, 0
      %1221 = vmatpush.bf16.msra.mxu0 0
      %1222 = vmatpush.bf16.msra.mxu0 0
      %1223 = vmatpush.bf16.msra.mxu0 0
      %1224 = vmatpush.bf16.msra.mxu0 0
      %1225 = vmatpush.bf16.msra.mxu0 0
      %1226 = vmatpush.bf16.msra.mxu0 0
      %1227 = vmatpush.bf16.msra.mxu0 %v1215
      %1228 = vmatpush.bf16.msra.mxu0 %v1214
      %1229 = vmatmul.bf16.gmra.mxu0 %v1219
      %v1230 = vpop.f32.mrf.mxu0
      %v1231 = vadd.f32 0.0, %v1230
      %v1232 = vpop.f32.mrf.mxu0
      %1233 = vdwg.mxu0
      %v1234 = vadd.f32 %v1200, %v1231
      %v1235 = vpack.c.bf16 %v1097, %v1097
      %v1236 = vld [vmem:[%s7 + $0x40] sm:$0xf]
      %v1237 = vld [vmem:[%s7 + $0x44] sm:$0xf]
      %v1238 = vld [vmem:[%s7 + $0x48] sm:$0xf]
      %v1239 = vld [vmem:[%s7 + $0x4c] sm:$0xf]
      %v1244 = vunpack.c.l.b16 %v1236
      %v1245 = vunpack.c.l.b16 %v1237
      %v1246 = vunpack.c.l.b16 %v1238
      %v1247 = vunpack.c.l.b16 %v1239
      %v1248 = vpack.c.b16 %v1245, %v1244
      %v1249 = vpack.c.b16 %v1247, %v1246
      %v1253 = vsel %vm991, %v1235, 0
      %1255 = vmatpush.bf16.msra.mxu0 0
      %1256 = vmatpush.bf16.msra.mxu0 0
      %1257 = vmatpush.bf16.msra.mxu0 0
      %1258 = vmatpush.bf16.msra.mxu0 0
      %1259 = vmatpush.bf16.msra.mxu0 0
      %1260 = vmatpush.bf16.msra.mxu0 0
      %1261 = vmatpush.bf16.msra.mxu0 %v1249
      %1262 = vmatpush.bf16.msra.mxu0 %v1248
      %1263 = vmatmul.bf16.gmra.mxu0 %v1253
      %v1264 = vpop.f32.mrf.mxu0
      %v1265 = vadd.f32 0.0, %v1264
      %v1266 = vpop.f32.mrf.mxu0
      %1267 = vdwg.mxu0
      %v1268 = vadd.f32 %v1234, %v1265
      %v1269 = vpack.c.bf16 %v1098, %v1098
      %v1270 = vld [vmem:[%s7 + $0x50] sm:$0xf]
      %v1271 = vld [vmem:[%s7 + $0x54] sm:$0xf]
      %v1272 = vld [vmem:[%s7 + $0x58] sm:$0xf]
      %v1273 = vld [vmem:[%s7 + $0x5c] sm:$0xf]
      %v1278 = vunpack.c.l.b16 %v1270
      %v1279 = vunpack.c.l.b16 %v1271
      %v1280 = vunpack.c.l.b16 %v1272
      %v1281 = vunpack.c.l.b16 %v1273
      %v1282 = vpack.c.b16 %v1279, %v1278
      %v1283 = vpack.c.b16 %v1281, %v1280
      %v1287 = vsel %vm991, %v1269, 0
      %1289 = vmatpush.bf16.msra.mxu0 0
      %1290 = vmatpush.bf16.msra.mxu0 0
      %1291 = vmatpush.bf16.msra.mxu0 0
      %1292 = vmatpush.bf16.msra.mxu0 0
      %1293 = vmatpush.bf16.msra.mxu0 0
      %1294 = vmatpush.bf16.msra.mxu0 0
      %1295 = vmatpush.bf16.msra.mxu0 %v1283
      %1296 = vmatpush.bf16.msra.mxu0 %v1282
      %1297 = vmatmul.bf16.gmra.mxu0 %v1287
      %v1298 = vpop.f32.mrf.mxu0
      %v1299 = vadd.f32 0.0, %v1298
      %v1300 = vpop.f32.mrf.mxu0
      %1301 = vdwg.mxu0
      %v1302 = vadd.f32 %v1268, %v1299
      %v1303 = vpack.c.bf16 %v1099, %v1099
      %v1304 = vld [vmem:[%s7 + $0x60] sm:$0xf]
      %v1305 = vld [vmem:[%s7 + $0x64] sm:$0xf]
      %v1306 = vld [vmem:[%s7 + $0x68] sm:$0xf]
      %v1307 = vld [vmem:[%s7 + $0x6c] sm:$0xf]
      %v1312 = vunpack.c.l.b16 %v1304
      %v1313 = vunpack.c.l.b16 %v1305
      %v1314 = vunpack.c.l.b16 %v1306
      %v1315 = vunpack.c.l.b16 %v1307
      %v1316 = vpack.c.b16 %v1313, %v1312
      %v1317 = vpack.c.b16 %v1315, %v1314
      %v1321 = vsel %vm991, %v1303, 0
      %1323 = vmatpush.bf16.msra.mxu0 0
      %1324 = vmatpush.bf16.msra.mxu0 0
      %1325 = vmatpush.bf16.msra.mxu0 0
      %1326 = vmatpush.bf16.msra.mxu0 0
      %1327 = vmatpush.bf16.msra.mxu0 0
      %1328 = vmatpush.bf16.msra.mxu0 0
      %1329 = vmatpush.bf16.msra.mxu0 %v1317
      %1330 = vmatpush.bf16.msra.mxu0 %v1316
      %1331 = vmatmul.bf16.gmra.mxu0 %v1321
      %v1332 = vpop.f32.mrf.mxu0
      %v1333 = vadd.f32 0.0, %v1332
      %v1334 = vpop.f32.mrf.mxu0
      %1335 = vdwg.mxu0
      %v1336 = vadd.f32 %v1302, %v1333
      %v1337 = vpack.c.bf16 %v1100, %v1100
      %v1338 = vld [vmem:[%s7 + $0x70] sm:$0xf]
      %v1339 = vld [vmem:[%s7 + $0x74] sm:$0xf]
      %v1340 = vld [vmem:[%s7 + $0x78] sm:$0xf]
      %v1341 = vld [vmem:[%s7 + $0x7c] sm:$0xf]
      %v1346 = vunpack.c.l.b16 %v1338
      %v1347 = vunpack.c.l.b16 %v1339
      %v1348 = vunpack.c.l.b16 %v1340
      %v1349 = vunpack.c.l.b16 %v1341
      %v1350 = vpack.c.b16 %v1347, %v1346
      %v1351 = vpack.c.b16 %v1349, %v1348
      %v1355 = vsel %vm991, %v1337, 0
      %1357 = vmatpush.bf16.msra.mxu0 0
      %1358 = vmatpush.bf16.msra.mxu0 0
      %1359 = vmatpush.bf16.msra.mxu0 0
      %1360 = vmatpush.bf16.msra.mxu0 0
      %1361 = vmatpush.bf16.msra.mxu0 0
      %1362 = vmatpush.bf16.msra.mxu0 0
      %1363 = vmatpush.bf16.msra.mxu0 %v1351
      %1364 = vmatpush.bf16.msra.mxu0 %v1350
      %1365 = vmatmul.bf16.gmra.mxu0 %v1355
      %v1366 = vpop.f32.mrf.mxu0
      %v1367 = vadd.f32 0.0, %v1366
      %v1368 = vpop.f32.mrf.mxu0
      %1369 = vdwg.mxu0
      %v1370 = vadd.f32 %v1336, %v1367
      %v1371 = vld [vmem:[%s8] sm:$0x1]
      %v1373 = vperm.slane %v1371, 0
      %v1375 = vadd.f32 %v1370, %v1373
      %v1376 = vxor.u32 %v1375, 2147483648
      %v1377 = vmul.f32 %v1376, 1.442695
      %v1378 = vpow.pop %v1377
      %v1379 = vadd.f32 %v1378, 1.0
      %v1380 = vrcp.pop %v1379
      %v1381 = vmul.f32 %v1379, %v1380
      %v1382 = vsub.f32 1.0, %v1381
      %v1383 = vmul.f32 %v1380, %v1382
      %v1384 = vadd.f32 %v1380, %v1383
      %vm1385 = vweird.f32 %v1379
      %vm1386 = vweird.f32 %v1380
      %vm1387 = vmor %vm1385, %vm1386
      %v1388 = vsel %vm1387, %v1380, %v1384
      %v1389 = vand.u32 2147483647, %v1379
      %vm1390 = vcmp.eq.f32.partialorder %v1389, 8.507059e+37
      %v1391 = vand.u32 %v1379, 2147483648
      %v1392 = vor.u32 1.1754944e-38, %v1391
      %v1393 = vsel %vm1390, %v1392, %v1388
      %v1394 = vmul.f32 1.0, %v1393
      %v1395 = vmul.f32 %v1375, %v1394
      %v1396 = vpack.c.bf16 %v1395, %v1395
      %v1397 = vld [vmem:[%s9] sm:$0xf]
      %v1398 = vld [vmem:[%s9 + $0x4] sm:$0xf]
      %v1399 = vld [vmem:[%s9 + $0x8] sm:$0xf]
      %v1400 = vld [vmem:[%s9 + $0xc] sm:$0xf]
      %v1401 = vld [vmem:[%s9 + $0x10] sm:$0xf]
      %v1402 = vld [vmem:[%s9 + $0x14] sm:$0xf]
      %v1403 = vld [vmem:[%s9 + $0x18] sm:$0xf]
      %v1404 = vld [vmem:[%s9 + $0x1c] sm:$0xf]
      %v1405 = vld [vmem:[%s10] sm:$0x1]
      %v1407 = vperm.slane %v1405, 0
      %v1417 = vunpack.c.l.b16 %v1397
      %v1418 = vunpack.c.l.b16 %v1398
      %v1419 = vunpack.c.l.b16 %v1399
      %v1420 = vunpack.c.l.b16 %v1400
      %v1421 = vunpack.c.l.b16 %v1401
      %v1422 = vunpack.c.l.b16 %v1402
      %v1423 = vunpack.c.l.b16 %v1403
      %v1424 = vunpack.c.l.b16 %v1404
      %v1425 = vpack.c.b16 %v1418, %v1417
      %v1426 = vpack.c.b16 %v1420, %v1419
      %v1427 = vpack.c.b16 %v1422, %v1421
      %v1428 = vpack.c.b16 %v1424, %v1423
      %vm1433 = vcmask 523264
      %v1435 = vsel %vm1433, %v1396, 0
      %1437 = vmatpush.bf16.msra.mxu0 0
      %1438 = vmatpush.bf16.msra.mxu0 0
      %1439 = vmatpush.bf16.msra.mxu0 0
      %1440 = vmatpush.bf16.msra.mxu0 0
      %1441 = vmatpush.bf16.msra.mxu0 %v1428
      %1442 = vmatpush.bf16.msra.mxu0 %v1427
      %1443 = vmatpush.bf16.msra.mxu0 %v1426
      %1444 = vmatpush.bf16.msra.mxu0 %v1425
      %1445 = vmatmul.bf16.gmra.mxu0 %v1435
      %v1446 = vpop.f32.mrf.mxu0
      %v1447 = vadd.f32 %v1407, %v1446
      %v1448 = vpop.f32.mrf.mxu0
      %1449 = vdwg.mxu0
      %v1450 = vld [vmem:[%s11] sm:$0xff]
      %v1451 = vpack.c.bf16 %v1447, %v1447
      %v1452 = vld [vmem:[%s12] sm:$0xf]
      %v1453 = vld [vmem:[%s12 + $0x4] sm:$0xf]
      %v1454 = vld [vmem:[%s12 + $0x8] sm:$0xf]
      %v1455 = vld [vmem:[%s12 + $0xc] sm:$0xf]
      %v1460 = vunpack.c.l.b16 %v1452
      %v1461 = vunpack.c.l.b16 %v1453
      %v1462 = vunpack.c.l.b16 %v1454
      %v1463 = vunpack.c.l.b16 %v1455
      %v1464 = vpack.c.b16 %v1461, %v1460
      %v1465 = vpack.c.b16 %v1463, %v1462
      %v1469 = vsel %vm991, %v1451, 0
      %1471 = vmatpush.bf16.msra.mxu0 0
      %1472 = vmatpush.bf16.msra.mxu0 0
      %1473 = vmatpush.bf16.msra.mxu0 0
      %1474 = vmatpush.bf16.msra.mxu0 0
      %1475 = vmatpush.bf16.msra.mxu0 0
      %1476 = vmatpush.bf16.msra.mxu0 0
      %1477 = vmatpush.bf16.msra.mxu0 %v1465
      %1478 = vmatpush.bf16.msra.mxu0 %v1464
      %1479 = vmatmul.bf16.gmra.mxu0 %v1469
      %v1480 = vpop.f32.mrf.mxu0
      %v1481 = vadd.f32 0.0, %v1480
      %v1482 = vpop.f32.mrf.mxu0
      %1483 = vdwg.mxu0
      %v1484 = vld [vmem:[%s13] sm:$0xf]
      %v1485 = vld [vmem:[%s13 + $0x4] sm:$0xf]
      %v1486 = vld [vmem:[%s13 + $0x8] sm:$0xf]
      %v1487 = vld [vmem:[%s13 + $0xc] sm:$0xf]
      %v1492 = vunpack.c.l.b16 %v1484
      %v1493 = vunpack.c.l.b16 %v1485
      %v1494 = vunpack.c.l.b16 %v1486
      %v1495 = vunpack.c.l.b16 %v1487
      %v1496 = vpack.c.b16 %v1493, %v1492
      %v1497 = vpack.c.b16 %v1495, %v1494
      %1500 = vmatpush.bf16.msra.mxu0 0
      %1501 = vmatpush.bf16.msra.mxu0 0
      %1502 = vmatpush.bf16.msra.mxu0 0
      %1503 = vmatpush.bf16.msra.mxu0 0
      %1504 = vmatpush.bf16.msra.mxu0 0
      %1505 = vmatpush.bf16.msra.mxu0 0
      %1506 = vmatpush.bf16.msra.mxu0 %v1497
      %1507 = vmatpush.bf16.msra.mxu0 %v1496
      %1508 = vmatmul.bf16.gmra.mxu0 %v1469
      %v1509 = vpop.f32.mrf.mxu0
      %v1510 = vadd.f32 0.0, %v1509
      %v1511 = vpop.f32.mrf.mxu0
      %1512 = vdwg.mxu0
      %v1513 = vpack.c.bf16 %v1481, %v1481
      %v1515 = vsel %vm991, %v1513, 0
      %1517 = vmatpush.bf16.xpose.msra.mxu0 0
      %1518 = vmatpush.bf16.xpose.msra.mxu0 0
      %1519 = vmatpush.bf16.xpose.msra.mxu0 0
      %1520 = vmatpush.bf16.xpose.msra.mxu0 0
      %1521 = vmatpush.bf16.xpose.msra.mxu0 0
      %1522 = vmatpush.bf16.xpose.msra.mxu0 0
      %1523 = vmatpush.bf16.xpose.msra.mxu0 0
      %1524 = vmatpush.bf16.xpose.msra.mxu0 %v1469
      %1525 = vmatmul.bf16.gmra.mxu0 %v1515
      %v1526 = vpop.f32.mrf.mxu0
      %v1527 = vadd.f32 %v1450, %v1526
      %v1528 = vpop.f32.mrf.mxu0
      %1529 = vdwg.mxu0
      %vm1530 = vcmask 64512
      %v1531 = vsel %vm1530, %v1527, -inf
      %1532 = vmax.xlane.f32.xlu0 %v1531
      %v1533 = vpop.xlane.xlu0 %1532
      %v1534 = vsub.f32 %v1527, %v1533
      %v1535 = vmul.f32 %v1534, 1.442695
      %v1536 = vpow.pop %v1535
      %v1537 = vsel %vm1530, %v1536, 0.0
      %1538 = vadd.xlane.f32.xlu0 %v1537
      %v1539 = vpop.xlane.xlu0 %1538
      %v1540 = vrcp.pop %v1539
      %v1541 = vmul.f32 %v1536, %v1540
      %v1542 = vpack.c.bf16 %v1541, %v1541
      %v1543 = vpack.c.bf16 %v1510, %v1510
      %v1545 = vsel %vm1530, %v1542, 0
      %vm1547 = vcmask 1043456
      %v1549 = vsel %vm1547, %v1543, 0
      %1551 = vmatpush.bf16.msra.mxu0 0
      %1552 = vmatpush.bf16.msra.mxu0 0
      %1553 = vmatpush.bf16.msra.mxu0 0
      %1554 = vmatpush.bf16.msra.mxu0 0
      %1555 = vmatpush.bf16.msra.mxu0 0
      %1556 = vmatpush.bf16.msra.mxu0 0
      %1557 = vmatpush.bf16.msra.mxu0 0
      %1558 = vmatpush.bf16.msra.mxu0 %v1549
      %1559 = vmatmul.bf16.gmra.mxu0 %v1545
      %v1560 = vpop.f32.mrf.mxu0
      %v1561 = vadd.f32 0.0, %v1560
      %v1562 = vpop.f32.mrf.mxu0
      %1563 = vdwg.mxu0
      %v1564 = vxor.u32 %v1561, 2147483648
      %v1565 = vmul.f32 %v1564, 1.442695
      %v1566 = vpow.pop %v1565
      %v1567 = vadd.f32 %v1566, 1.0
      %v1568 = vrcp.pop %v1567
      %v1569 = vmul.f32 %v1567, %v1568
      %v1570 = vsub.f32 1.0, %v1569
      %v1571 = vmul.f32 %v1568, %v1570
      %v1572 = vadd.f32 %v1568, %v1571
      %vm1573 = vweird.f32 %v1567
      %vm1574 = vweird.f32 %v1568
      %vm1575 = vmor %vm1573, %vm1574
      %v1576 = vsel %vm1575, %v1568, %v1572
      %v1577 = vand.u32 2147483647, %v1567
      %vm1578 = vcmp.eq.f32.partialorder %v1577, 8.507059e+37
      %v1579 = vand.u32 %v1567, 2147483648
      %v1580 = vor.u32 1.1754944e-38, %v1579
      %v1581 = vsel %vm1578, %v1580, %v1576
      %v1582 = vmul.f32 1.0, %v1581
      %v1583 = vmul.f32 %v1561, %v1582
      %v1584 = vpack.c.bf16 %v1583, %v1583
      %v1585 = vld [vmem:[%s14] sm:$0xf]
      %v1586 = vld [vmem:[%s14 + $0x4] sm:$0xf]
      %v1587 = vld [vmem:[%s14 + $0x8] sm:$0xf]
      %v1588 = vld [vmem:[%s14 + $0xc] sm:$0xf]
      %v1589 = vld [vmem:[%s15] sm:$0x1]
      %v1591 = vperm.slane %v1589, 0
      %v1597 = vunpack.c.l.b16 %v1585
      %v1598 = vunpack.c.l.b16 %v1586
      %v1599 = vunpack.c.l.b16 %v1587
      %v1600 = vunpack.c.l.b16 %v1588
      %v1601 = vpack.c.b16 %v1598, %v1597
      %v1602 = vpack.c.b16 %v1600, %v1599
      %v1606 = vsel %vm991, %v1584, 0
      %1608 = vmatpush.bf16.msra.mxu0 0
      %1609 = vmatpush.bf16.msra.mxu0 0
      %1610 = vmatpush.bf16.msra.mxu0 0
      %1611 = vmatpush.bf16.msra.mxu0 0
      %1612 = vmatpush.bf16.msra.mxu0 0
      %1613 = vmatpush.bf16.msra.mxu0 0
      %1614 = vmatpush.bf16.msra.mxu0 %v1602
      %1615 = vmatpush.bf16.msra.mxu0 %v1601
      %1616 = vmatmul.bf16.gmra.mxu0 %v1606
      %v1617 = vpop.f32.mrf.mxu0
      %v1618 = vadd.f32 %v1591, %v1617
      %v1619 = vpop.f32.mrf.mxu0
      %1620 = vdwg.mxu0
      %v1621 = vxor.u32 %v1618, 2147483648
      %v1622 = vmul.f32 %v1621, 1.442695
      %v1623 = vpow.pop %v1622
      %v1624 = vadd.f32 %v1623, 1.0
      %v1625 = vrcp.pop %v1624
      %v1626 = vmul.f32 %v1624, %v1625
      %v1627 = vsub.f32 1.0, %v1626
      %v1628 = vmul.f32 %v1625, %v1627
      %v1629 = vadd.f32 %v1625, %v1628
      %vm1630 = vweird.f32 %v1624
      %vm1631 = vweird.f32 %v1625
      %vm1632 = vmor %vm1630, %vm1631
      %v1633 = vsel %vm1632, %v1625, %v1629
      %v1634 = vand.u32 2147483647, %v1624
      %vm1635 = vcmp.eq.f32.partialorder %v1634, 8.507059e+37
      %v1636 = vand.u32 %v1624, 2147483648
      %v1637 = vor.u32 1.1754944e-38, %v1636
      %v1638 = vsel %vm1635, %v1637, %v1633
      %v1639 = vmul.f32 1.0, %v1638
      %v1640 = vmul.f32 %v1618, %v1639
      %v1641 = vpack.c.bf16 %v1640, %v1640
      %v1642 = vld [vmem:[%s16] sm:$0xf]
      %v1643 = vld [vmem:[%s16 + $0x4] sm:$0xf]
      %v1644 = vld [vmem:[%s16 + $0x8] sm:$0xf]
      %v1645 = vld [vmem:[%s16 + $0xc] sm:$0xf]
      %v1646 = vld [vmem:[%s17] sm:$0x1]
      %v1648 = vperm.slane %v1646, 0
      %v1654 = vunpack.c.l.b16 %v1642
      %v1655 = vunpack.c.l.b16 %v1643
      %v1656 = vunpack.c.l.b16 %v1644
      %v1657 = vunpack.c.l.b16 %v1645
      %v1658 = vpack.c.b16 %v1655, %v1654
      %v1659 = vpack.c.b16 %v1657, %v1656
      %v1663 = vsel %vm991, %v1641, 0
      %1665 = vmatpush.bf16.msra.mxu0 0
      %1666 = vmatpush.bf16.msra.mxu0 0
      %1667 = vmatpush.bf16.msra.mxu0 0
      %1668 = vmatpush.bf16.msra.mxu0 0
      %1669 = vmatpush.bf16.msra.mxu0 0
      %1670 = vmatpush.bf16.msra.mxu0 0
      %1671 = vmatpush.bf16.msra.mxu0 %v1659
      %1672 = vmatpush.bf16.msra.mxu0 %v1658
      %1673 = vmatmul.bf16.gmra.mxu0 %v1663
      %v1674 = vpop.f32.mrf.mxu0
      %v1675 = vadd.f32 %v1648, %v1674
      %v1676 = vpop.f32.mrf.mxu0
      %1677 = vdwg.mxu0
      %v1678 = vsel %vm991, %v1675, 0.0
      %1679 = vadd.xlane.f32.xlu0 %v1678
      %v1680 = vpop.xlane.xlu0 %1679
      %v1681 = vrcp.pop 32.0
      %v1682 = vmul.f32 32.0, %v1681
      %v1683 = vsub.f32 1.0, %v1682
      %v1684 = vmul.f32 %v1681, %v1683
      %v1685 = vadd.f32 %v1681, %v1684
      %vm1686 = vweird.f32 %v1681
      %v1687 = vsel %vm1686, %v1681, %v1685
      %v1688 = vmul.f32 %v1680, %v1687
      %v1689 = vsub.f32 %v1675, %v1688
      %v1690 = vmul.f32 %v1689, %v1689
      %v1691 = vsel %vm991, %v1690, 0.0
      %1692 = vadd.xlane.f32.xlu0 %v1691
      %v1693 = vpop.xlane.xlu0 %1692
      %v1694 = vmul.f32 %v1693, %v1687
      %v1695 = vadd.f32 %v1694, 1e-05
      %v1696 = vrsqrt.pop %v1695
      %v1697 = vmul.f32 %v1696, %v1695
      %v1698 = vmul.f32 %v1697, %v1696
      %v1699 = vmul.f32 0.5, %v1698
      %v1700 = vsub.f32 1.5, %v1699
      %v1701 = vmul.f32 %v1696, %v1700
      %vm1702 = vweird.f32 %v1695
      %vm1703 = vweird.f32 %v1696
      %vm1704 = vmor %vm1702, %vm1703
      %v1705 = vsel %vm1704, %v1696, %v1701
      %v1706 = vmul.f32 %v1689, %v1705
      %v1707 = vld [vmem:[%s18] sm:$0x1]
      %v1709 = vperm.slane %v1707, 0
      %v1711 = vmul.f32 %v1706, %v1709
      %v1712 = vld [vmem:[%s19] sm:$0x1]
      %v1714 = vperm.slane %v1712, 0
      %v1716 = vadd.f32 %v1711, %v1714
      %v1717 = vadd.f32 %v1716, 0.0
      %s1718 = scalar_lea.vmem %s12, 16
      %v1719 = vld [vmem:[%s1718] sm:$0xf]
      %v1720 = vld [vmem:[%s1718 + $0x4] sm:$0xf]
      %v1721 = vld [vmem:[%s1718 + $0x8] sm:$0xf]
      %v1722 = vld [vmem:[%s1718 + $0xc] sm:$0xf]
      %v1727 = vunpack.c.l.b16 %v1719
      %v1728 = vunpack.c.l.b16 %v1720
      %v1729 = vunpack.c.l.b16 %v1721
      %v1730 = vunpack.c.l.b16 %v1722
      %v1731 = vpack.c.b16 %v1728, %v1727
      %v1732 = vpack.c.b16 %v1730, %v1729
      %1735 = vmatpush.bf16.msra.mxu0 0
      %1736 = vmatpush.bf16.msra.mxu0 0
      %1737 = vmatpush.bf16.msra.mxu0 0
      %1738 = vmatpush.bf16.msra.mxu0 0
      %1739 = vmatpush.bf16.msra.mxu0 0
      %1740 = vmatpush.bf16.msra.mxu0 0
      %1741 = vmatpush.bf16.msra.mxu0 %v1732
      %1742 = vmatpush.bf16.msra.mxu0 %v1731
      %1743 = vmatmul.bf16.gmra.mxu0 %v1469
      %v1744 = vpop.f32.mrf.mxu0
      %v1745 = vadd.f32 0.0, %v1744
      %v1746 = vpop.f32.mrf.mxu0
      %1747 = vdwg.mxu0
      %s1748 = scalar_lea.vmem %s13, 16
      %v1749 = vld [vmem:[%s1748] sm:$0xf]
      %v1750 = vld [vmem:[%s1748 + $0x4] sm:$0xf]
      %v1751 = vld [vmem:[%s1748 + $0x8] sm:$0xf]
      %v1752 = vld [vmem:[%s1748 + $0xc] sm:$0xf]
      %v1757 = vunpack.c.l.b16 %v1749
      %v1758 = vunpack.c.l.b16 %v1750
      %v1759 = vunpack.c.l.b16 %v1751
      %v1760 = vunpack.c.l.b16 %v1752
      %v1761 = vpack.c.b16 %v1758, %v1757
      %v1762 = vpack.c.b16 %v1760, %v1759
      %1765 = vmatpush.bf16.msra.mxu0 0
      %1766 = vmatpush.bf16.msra.mxu0 0
      %1767 = vmatpush.bf16.msra.mxu0 0
      %1768 = vmatpush.bf16.msra.mxu0 0
      %1769 = vmatpush.bf16.msra.mxu0 0
      %1770 = vmatpush.bf16.msra.mxu0 0
      %1771 = vmatpush.bf16.msra.mxu0 %v1762
      %1772 = vmatpush.bf16.msra.mxu0 %v1761
      %1773 = vmatmul.bf16.gmra.mxu0 %v1469
      %v1774 = vpop.f32.mrf.mxu0
      %v1775 = vadd.f32 0.0, %v1774
      %v1776 = vpop.f32.mrf.mxu0
      %1777 = vdwg.mxu0
      %v1778 = vpack.c.bf16 %v1745, %v1745
      %v1780 = vsel %vm991, %v1778, 0
      %1782 = vmatpush.bf16.xpose.msra.mxu0 0
      %1783 = vmatpush.bf16.xpose.msra.mxu0 0
      %1784 = vmatpush.bf16.xpose.msra.mxu0 0
      %1785 = vmatpush.bf16.xpose.msra.mxu0 0
      %1786 = vmatpush.bf16.xpose.msra.mxu0 0
      %1787 = vmatpush.bf16.xpose.msra.mxu0 0
      %1788 = vmatpush.bf16.xpose.msra.mxu0 0
      %1789 = vmatpush.bf16.xpose.msra.mxu0 %v1469
      %1790 = vmatmul.bf16.gmra.mxu0 %v1780
      %v1791 = vpop.f32.mrf.mxu0
      %v1792 = vadd.f32 %v1450, %v1791
      %v1793 = vpop.f32.mrf.mxu0
      %1794 = vdwg.mxu0
      %v1795 = vsel %vm1530, %v1792, -inf
      %1796 = vmax.xlane.f32.xlu0 %v1795
      %v1797 = vpop.xlane.xlu0 %1796
      %v1798 = vsub.f32 %v1792, %v1797
      %v1799 = vmul.f32 %v1798, 1.442695
      %v1800 = vpow.pop %v1799
      %v1801 = vsel %vm1530, %v1800, 0.0
      %1802 = vadd.xlane.f32.xlu0 %v1801
      %v1803 = vpop.xlane.xlu0 %1802
      %v1804 = vrcp.pop %v1803
      %v1805 = vmul.f32 %v1800, %v1804
      %v1806 = vpack.c.bf16 %v1805, %v1805
      %v1807 = vpack.c.bf16 %v1775, %v1775
      %v1809 = vsel %vm1530, %v1806, 0
      %v1812 = vsel %vm1547, %v1807, 0
      %1814 = vmatpush.bf16.msra.mxu0 0
      %1815 = vmatpush.bf16.msra.mxu0 0
      %1816 = vmatpush.bf16.msra.mxu0 0
      %1817 = vmatpush.bf16.msra.mxu0 0
      %1818 = vmatpush.bf16.msra.mxu0 0
      %1819 = vmatpush.bf16.msra.mxu0 0
      %1820 = vmatpush.bf16.msra.mxu0 0
      %1821 = vmatpush.bf16.msra.mxu0 %v1812
      %1822 = vmatmul.bf16.gmra.mxu0 %v1809
      %v1823 = vpop.f32.mrf.mxu0
      %v1824 = vadd.f32 0.0, %v1823
      %v1825 = vpop.f32.mrf.mxu0
      %1826 = vdwg.mxu0
      %v1827 = vxor.u32 %v1824, 2147483648
      %v1828 = vmul.f32 %v1827, 1.442695
      %v1829 = vpow.pop %v1828
      %v1830 = vadd.f32 %v1829, 1.0
      %v1831 = vrcp.pop %v1830
      %v1832 = vmul.f32 %v1830, %v1831
      %v1833 = vsub.f32 1.0, %v1832
      %v1834 = vmul.f32 %v1831, %v1833
      %v1835 = vadd.f32 %v1831, %v1834
      %vm1836 = vweird.f32 %v1830
      %vm1837 = vweird.f32 %v1831
      %vm1838 = vmor %vm1836, %vm1837
      %v1839 = vsel %vm1838, %v1831, %v1835
      %v1840 = vand.u32 2147483647, %v1830
      %vm1841 = vcmp.eq.f32.partialorder %v1840, 8.507059e+37
      %v1842 = vand.u32 %v1830, 2147483648
      %v1843 = vor.u32 1.1754944e-38, %v1842
      %v1844 = vsel %vm1841, %v1843, %v1839
      %v1845 = vmul.f32 1.0, %v1844
      %v1846 = vmul.f32 %v1824, %v1845
      %v1847 = vpack.c.bf16 %v1846, %v1846
      %s1848 = scalar_lea.vmem %s14, 16
      %v1849 = vld [vmem:[%s1848] sm:$0xf]
      %v1850 = vld [vmem:[%s1848 + $0x4] sm:$0xf]
      %v1851 = vld [vmem:[%s1848 + $0x8] sm:$0xf]
      %v1852 = vld [vmem:[%s1848 + $0xc] sm:$0xf]
      %s1853 = scalar_lea.vmem %s15, 1
      %v1854 = vld [vmem:[%s1853] sm:$0x1]
      %v1856 = vperm.slane %v1854, 0
      %v1862 = vunpack.c.l.b16 %v1849
      %v1863 = vunpack.c.l.b16 %v1850
      %v1864 = vunpack.c.l.b16 %v1851
      %v1865 = vunpack.c.l.b16 %v1852
      %v1866 = vpack.c.b16 %v1863, %v1862
      %v1867 = vpack.c.b16 %v1865, %v1864
      %v1871 = vsel %vm991, %v1847, 0
      %1873 = vmatpush.bf16.msra.mxu0 0
      %1874 = vmatpush.bf16.msra.mxu0 0
      %1875 = vmatpush.bf16.msra.mxu0 0
      %1876 = vmatpush.bf16.msra.mxu0 0
      %1877 = vmatpush.bf16.msra.mxu0 0
      %1878 = vmatpush.bf16.msra.mxu0 0
      %1879 = vmatpush.bf16.msra.mxu0 %v1867
      %1880 = vmatpush.bf16.msra.mxu0 %v1866
      %1881 = vmatmul.bf16.gmra.mxu0 %v1871
      %v1882 = vpop.f32.mrf.mxu0
      %v1883 = vadd.f32 %v1856, %v1882
      %v1884 = vpop.f32.mrf.mxu0
      %1885 = vdwg.mxu0
      %v1886 = vxor.u32 %v1883, 2147483648
      %v1887 = vmul.f32 %v1886, 1.442695
      %v1888 = vpow.pop %v1887
      %v1889 = vadd.f32 %v1888, 1.0
      %v1890 = vrcp.pop %v1889
      %v1891 = vmul.f32 %v1889, %v1890
      %v1892 = vsub.f32 1.0, %v1891
      %v1893 = vmul.f32 %v1890, %v1892
      %v1894 = vadd.f32 %v1890, %v1893
      %vm1895 = vweird.f32 %v1889
      %vm1896 = vweird.f32 %v1890
      %vm1897 = vmor %vm1895, %vm1896
      %v1898 = vsel %vm1897, %v1890, %v1894
      %v1899 = vand.u32 2147483647, %v1889
      %vm1900 = vcmp.eq.f32.partialorder %v1899, 8.507059e+37
      %v1901 = vand.u32 %v1889, 2147483648
      %v1902 = vor.u32 1.1754944e-38, %v1901
      %v1903 = vsel %vm1900, %v1902, %v1898
      %v1904 = vmul.f32 1.0, %v1903
      %v1905 = vmul.f32 %v1883, %v1904
      %v1906 = vpack.c.bf16 %v1905, %v1905
      %s1907 = scalar_lea.vmem %s16, 16
      %v1908 = vld [vmem:[%s1907] sm:$0xf]
      %v1909 = vld [vmem:[%s1907 + $0x4] sm:$0xf]
      %v1910 = vld [vmem:[%s1907 + $0x8] sm:$0xf]
      %v1911 = vld [vmem:[%s1907 + $0xc] sm:$0xf]
      %s1912 = scalar_lea.vmem %s17, 1
      %v1913 = vld [vmem:[%s1912] sm:$0x1]
      %v1915 = vperm.slane %v1913, 0
      %v1921 = vunpack.c.l.b16 %v1908
      %v1922 = vunpack.c.l.b16 %v1909
      %v1923 = vunpack.c.l.b16 %v1910
      %v1924 = vunpack.c.l.b16 %v1911
      %v1925 = vpack.c.b16 %v1922, %v1921
      %v1926 = vpack.c.b16 %v1924, %v1923
      %v1930 = vsel %vm991, %v1906, 0
      %1932 = vmatpush.bf16.msra.mxu0 0
      %1933 = vmatpush.bf16.msra.mxu0 0
      %1934 = vmatpush.bf16.msra.mxu0 0
      %1935 = vmatpush.bf16.msra.mxu0 0
      %1936 = vmatpush.bf16.msra.mxu0 0
      %1937 = vmatpush.bf16.msra.mxu0 0
      %1938 = vmatpush.bf16.msra.mxu0 %v1926
      %1939 = vmatpush.bf16.msra.mxu0 %v1925
      %1940 = vmatmul.bf16.gmra.mxu0 %v1930
      %v1941 = vpop.f32.mrf.mxu0
      %v1942 = vadd.f32 %v1915, %v1941
      %v1943 = vpop.f32.mrf.mxu0
      %1944 = vdwg.mxu0
      %v1945 = vsel %vm991, %v1942, 0.0
      %1946 = vadd.xlane.f32.xlu0 %v1945
      %v1947 = vpop.xlane.xlu0 %1946
      %v1948 = vmul.f32 %v1947, %v1687
      %v1949 = vsub.f32 %v1942, %v1948
      %v1950 = vmul.f32 %v1949, %v1949
      %v1951 = vsel %vm991, %v1950, 0.0
      %1952 = vadd.xlane.f32.xlu0 %v1951
      %v1953 = vpop.xlane.xlu0 %1952
      %v1954 = vmul.f32 %v1953, %v1687
      %v1955 = vadd.f32 %v1954, 1e-05
      %v1956 = vrsqrt.pop %v1955
      %v1957 = vmul.f32 %v1956, %v1955
      %v1958 = vmul.f32 %v1957, %v1956
      %v1959 = vmul.f32 0.5, %v1958
      %v1960 = vsub.f32 1.5, %v1959
      %v1961 = vmul.f32 %v1956, %v1960
      %vm1962 = vweird.f32 %v1955
      %vm1963 = vweird.f32 %v1956
      %vm1964 = vmor %vm1962, %vm1963
      %v1965 = vsel %vm1964, %v1956, %v1961
      %v1966 = vmul.f32 %v1949, %v1965
      %s1967 = scalar_lea.vmem %s18, 1
      %v1968 = vld [vmem:[%s1967] sm:$0x1]
      %v1970 = vperm.slane %v1968, 0
      %v1972 = vmul.f32 %v1966, %v1970
      %s1973 = scalar_lea.vmem %s19, 1
      %v1974 = vld [vmem:[%s1973] sm:$0x1]
      %v1976 = vperm.slane %v1974, 0
      %v1978 = vadd.f32 %v1972, %v1976
      %v1979 = vadd.f32 %v1717, %v1978
      %v1980 = vmul.f32 %v1979, 0.5
      %v1981 = vpack.c.bf16 %v1980, %v1980
      %v1983 = vsel %vm991, %v1981, 0
      %1985 = vmatpush.bf16.msra.mxu0 0
      %1986 = vmatpush.bf16.msra.mxu0 0
      %1987 = vmatpush.bf16.msra.mxu0 0
      %1988 = vmatpush.bf16.msra.mxu0 0
      %1989 = vmatpush.bf16.msra.mxu0 0
      %1990 = vmatpush.bf16.msra.mxu0 0
      %1991 = vmatpush.bf16.msra.mxu0 %v1465
      %1992 = vmatpush.bf16.msra.mxu0 %v1464
      %1993 = vmatmul.bf16.gmra.mxu0 %v1983
      %v1994 = vpop.f32.mrf.mxu0
      %v1995 = vadd.f32 0.0, %v1994
      %v1996 = vpop.f32.mrf.mxu0
      %1997 = vdwg.mxu0
      %1998 = vmatpush.bf16.msra.mxu0 0
      %1999 = vmatpush.bf16.msra.mxu0 0
      %2000 = vmatpush.bf16.msra.mxu0 0
      %2001 = vmatpush.bf16.msra.mxu0 0
      %2002 = vmatpush.bf16.msra.mxu0 0
      %2003 = vmatpush.bf16.msra.mxu0 0
      %2004 = vmatpush.bf16.msra.mxu0 %v1497
      %2005 = vmatpush.bf16.msra.mxu0 %v1496
      %2006 = vmatmul.bf16.gmra.mxu0 %v1983
      %v2007 = vpop.f32.mrf.mxu0
      %v2008 = vadd.f32 0.0, %v2007
      %v2009 = vpop.f32.mrf.mxu0
      %2010 = vdwg.mxu0
      %v2011 = vpack.c.bf16 %v1995, %v1995
      %v2013 = vsel %vm991, %v2011, 0
      %2015 = vmatpush.bf16.xpose.msra.mxu0 0
      %2016 = vmatpush.bf16.xpose.msra.mxu0 0
      %2017 = vmatpush.bf16.xpose.msra.mxu0 0
      %2018 = vmatpush.bf16.xpose.msra.mxu0 0
      %2019 = vmatpush.bf16.xpose.msra.mxu0 0
      %2020 = vmatpush.bf16.xpose.msra.mxu0 0
      %2021 = vmatpush.bf16.xpose.msra.mxu0 0
      %2022 = vmatpush.bf16.xpose.msra.mxu0 %v1983
      %2023 = vmatmul.bf16.gmra.mxu0 %v2013
      %v2024 = vpop.f32.mrf.mxu0
      %v2025 = vadd.f32 %v1450, %v2024
      %v2026 = vpop.f32.mrf.mxu0
      %2027 = vdwg.mxu0
      %v2028 = vsel %vm1530, %v2025, -inf
      %2029 = vmax.xlane.f32.xlu0 %v2028
      %v2030 = vpop.xlane.xlu0 %2029
      %v2031 = vsub.f32 %v2025, %v2030
      %v2032 = vmul.f32 %v2031, 1.442695
      %v2033 = vpow.pop %v2032
      %v2034 = vsel %vm1530, %v2033, 0.0
      %2035 = vadd.xlane.f32.xlu0 %v2034
      %v2036 = vpop.xlane.xlu0 %2035
      %v2037 = vrcp.pop %v2036
      %v2038 = vmul.f32 %v2033, %v2037
      %v2039 = vpack.c.bf16 %v2038, %v2038
      %v2040 = vpack.c.bf16 %v2008, %v2008
      %v2042 = vsel %vm1530, %v2039, 0
      %v2045 = vsel %vm1547, %v2040, 0
      %2047 = vmatpush.bf16.msra.mxu0 0
      %2048 = vmatpush.bf16.msra.mxu0 0
      %2049 = vmatpush.bf16.msra.mxu0 0
      %2050 = vmatpush.bf16.msra.mxu0 0
      %2051 = vmatpush.bf16.msra.mxu0 0
      %2052 = vmatpush.bf16.msra.mxu0 0
      %2053 = vmatpush.bf16.msra.mxu0 0
      %2054 = vmatpush.bf16.msra.mxu0 %v2045
      %2055 = vmatmul.bf16.gmra.mxu0 %v2042
      %v2056 = vpop.f32.mrf.mxu0
      %v2057 = vadd.f32 0.0, %v2056
      %v2058 = vpop.f32.mrf.mxu0
      %2059 = vdwg.mxu0
      %v2060 = vxor.u32 %v2057, 2147483648
      %v2061 = vmul.f32 %v2060, 1.442695
      %v2062 = vpow.pop %v2061
      %v2063 = vadd.f32 %v2062, 1.0
      %v2064 = vrcp.pop %v2063
      %v2065 = vmul.f32 %v2063, %v2064
      %v2066 = vsub.f32 1.0, %v2065
      %v2067 = vmul.f32 %v2064, %v2066
      %v2068 = vadd.f32 %v2064, %v2067
      %vm2069 = vweird.f32 %v2063
      %vm2070 = vweird.f32 %v2064
      %vm2071 = vmor %vm2069, %vm2070
      %v2072 = vsel %vm2071, %v2064, %v2068
      %v2073 = vand.u32 2147483647, %v2063
      %vm2074 = vcmp.eq.f32.partialorder %v2073, 8.507059e+37
      %v2075 = vand.u32 %v2063, 2147483648
      %v2076 = vor.u32 1.1754944e-38, %v2075
      %v2077 = vsel %vm2074, %v2076, %v2072
      %v2078 = vmul.f32 1.0, %v2077
      %v2079 = vmul.f32 %v2057, %v2078
      %v2080 = vpack.c.bf16 %v2079, %v2079
      %v2082 = vsel %vm991, %v2080, 0
      %2084 = vmatpush.bf16.msra.mxu0 0
      %2085 = vmatpush.bf16.msra.mxu0 0
      %2086 = vmatpush.bf16.msra.mxu0 0
      %2087 = vmatpush.bf16.msra.mxu0 0
      %2088 = vmatpush.bf16.msra.mxu0 0
      %2089 = vmatpush.bf16.msra.mxu0 0
      %2090 = vmatpush.bf16.msra.mxu0 %v1602
      %2091 = vmatpush.bf16.msra.mxu0 %v1601
      %2092 = vmatmul.bf16.gmra.mxu0 %v2082
      %v2093 = vpop.f32.mrf.mxu0
      %v2094 = vadd.f32 %v1591, %v2093
      %v2095 = vpop.f32.mrf.mxu0
      %2096 = vdwg.mxu0
      %v2097 = vxor.u32 %v2094, 2147483648
      %v2098 = vmul.f32 %v2097, 1.442695
      %v2099 = vpow.pop %v2098
      %v2100 = vadd.f32 %v2099, 1.0
      %v2101 = vrcp.pop %v2100
      %v2102 = vmul.f32 %v2100, %v2101
      %v2103 = vsub.f32 1.0, %v2102
      %v2104 = vmul.f32 %v2101, %v2103
      %v2105 = vadd.f32 %v2101, %v2104
      %vm2106 = vweird.f32 %v2100
      %vm2107 = vweird.f32 %v2101
      %vm2108 = vmor %vm2106, %vm2107
      %v2109 = vsel %vm2108, %v2101, %v2105
      %v2110 = vand.u32 2147483647, %v2100
      %vm2111 = vcmp.eq.f32.partialorder %v2110, 8.507059e+37
      %v2112 = vand.u32 %v2100, 2147483648
      %v2113 = vor.u32 1.1754944e-38, %v2112
      %v2114 = vsel %vm2111, %v2113, %v2109
      %v2115 = vmul.f32 1.0, %v2114
      %v2116 = vmul.f32 %v2094, %v2115
      %v2117 = vpack.c.bf16 %v2116, %v2116
      %v2119 = vsel %vm991, %v2117, 0
      %2121 = vmatpush.bf16.msra.mxu0 0
      %2122 = vmatpush.bf16.msra.mxu0 0
      %2123 = vmatpush.bf16.msra.mxu0 0
      %2124 = vmatpush.bf16.msra.mxu0 0
      %2125 = vmatpush.bf16.msra.mxu0 0
      %2126 = vmatpush.bf16.msra.mxu0 0
      %2127 = vmatpush.bf16.msra.mxu0 %v1659
      %2128 = vmatpush.bf16.msra.mxu0 %v1658
      %2129 = vmatmul.bf16.gmra.mxu0 %v2119
      %v2130 = vpop.f32.mrf.mxu0
      %v2131 = vadd.f32 %v1648, %v2130
      %v2132 = vpop.f32.mrf.mxu0
      %2133 = vdwg.mxu0
      %v2134 = vsel %vm991, %v2131, 0.0
      %2135 = vadd.xlane.f32.xlu0 %v2134
      %v2136 = vpop.xlane.xlu0 %2135
      %v2137 = vmul.f32 %v2136, %v1687
      %v2138 = vsub.f32 %v2131, %v2137
      %v2139 = vmul.f32 %v2138, %v2138
      %v2140 = vsel %vm991, %v2139, 0.0
      %2141 = vadd.xlane.f32.xlu0 %v2140
      %v2142 = vpop.xlane.xlu0 %2141
      %v2143 = vmul.f32 %v2142, %v1687
      %v2144 = vadd.f32 %v2143, 1e-05
      %v2145 = vrsqrt.pop %v2144
      %v2146 = vmul.f32 %v2145, %v2144
      %v2147 = vmul.f32 %v2146, %v2145
      %v2148 = vmul.f32 0.5, %v2147
      %v2149 = vsub.f32 1.5, %v2148
      %v2150 = vmul.f32 %v2145, %v2149
      %vm2151 = vweird.f32 %v2144
      %vm2152 = vweird.f32 %v2145
      %vm2153 = vmor %vm2151, %vm2152
      %v2154 = vsel %vm2153, %v2145, %v2150
      %v2155 = vmul.f32 %v2138, %v2154
      %v2156 = vmul.f32 %v2155, %v1709
      %v2157 = vadd.f32 %v2156, %v1714
      %v2158 = vadd.f32 %v2157, 0.0
      %2159 = vmatpush.bf16.msra.mxu0 0
      %2160 = vmatpush.bf16.msra.mxu0 0
      %2161 = vmatpush.bf16.msra.mxu0 0
      %2162 = vmatpush.bf16.msra.mxu0 0
      %2163 = vmatpush.bf16.msra.mxu0 0
      %2164 = vmatpush.bf16.msra.mxu0 0
      %2165 = vmatpush.bf16.msra.mxu0 %v1732
      %2166 = vmatpush.bf16.msra.mxu0 %v1731
      %2167 = vmatmul.bf16.gmra.mxu0 %v1983
      %v2168 = vpop.f32.mrf.mxu0
      %v2169 = vadd.f32 0.0, %v2168
      %v2170 = vpop.f32.mrf.mxu0
      %2171 = vdwg.mxu0
      %2172 = vmatpush.bf16.msra.mxu0 0
      %2173 = vmatpush.bf16.msra.mxu0 0
      %2174 = vmatpush.bf16.msra.mxu0 0
      %2175 = vmatpush.bf16.msra.mxu0 0
      %2176 = vmatpush.bf16.msra.mxu0 0
      %2177 = vmatpush.bf16.msra.mxu0 0
      %2178 = vmatpush.bf16.msra.mxu0 %v1762
      %2179 = vmatpush.bf16.msra.mxu0 %v1761
      %2180 = vmatmul.bf16.gmra.mxu0 %v1983
      %v2181 = vpop.f32.mrf.mxu0
      %v2182 = vadd.f32 0.0, %v2181
      %v2183 = vpop.f32.mrf.mxu0
      %2184 = vdwg.mxu0
      %v2185 = vpack.c.bf16 %v2169, %v2169
      %v2187 = vsel %vm991, %v2185, 0
      %2189 = vmatpush.bf16.xpose.msra.mxu0 0
      %2190 = vmatpush.bf16.xpose.msra.mxu0 0
      %2191 = vmatpush.bf16.xpose.msra.mxu0 0
      %2192 = vmatpush.bf16.xpose.msra.mxu0 0
      %2193 = vmatpush.bf16.xpose.msra.mxu0 0
      %2194 = vmatpush.bf16.xpose.msra.mxu0 0
      %2195 = vmatpush.bf16.xpose.msra.mxu0 0
      %2196 = vmatpush.bf16.xpose.msra.mxu0 %v1983
      %2197 = vmatmul.bf16.gmra.mxu0 %v2187
      %v2198 = vpop.f32.mrf.mxu0
      %v2199 = vadd.f32 %v1450, %v2198
      %v2200 = vpop.f32.mrf.mxu0
      %2201 = vdwg.mxu0
      %v2202 = vsel %vm1530, %v2199, -inf
      %2203 = vmax.xlane.f32.xlu0 %v2202
      %v2204 = vpop.xlane.xlu0 %2203
      %v2205 = vsub.f32 %v2199, %v2204
      %v2206 = vmul.f32 %v2205, 1.442695
      %v2207 = vpow.pop %v2206
      %v2208 = vsel %vm1530, %v2207, 0.0
      %2209 = vadd.xlane.f32.xlu0 %v2208
      %v2210 = vpop.xlane.xlu0 %2209
      %v2211 = vrcp.pop %v2210
      %v2212 = vmul.f32 %v2207, %v2211
      %v2213 = vpack.c.bf16 %v2212, %v2212
      %v2214 = vpack.c.bf16 %v2182, %v2182
      %v2216 = vsel %vm1530, %v2213, 0
      %v2219 = vsel %vm1547, %v2214, 0
      %2221 = vmatpush.bf16.msra.mxu0 0
      %2222 = vmatpush.bf16.msra.mxu0 0
      %2223 = vmatpush.bf16.msra.mxu0 0
      %2224 = vmatpush.bf16.msra.mxu0 0
      %2225 = vmatpush.bf16.msra.mxu0 0
      %2226 = vmatpush.bf16.msra.mxu0 0
      %2227 = vmatpush.bf16.msra.mxu0 0
      %2228 = vmatpush.bf16.msra.mxu0 %v2219
      %2229 = vmatmul.bf16.gmra.mxu0 %v2216
      %v2230 = vpop.f32.mrf.mxu0
      %v2231 = vadd.f32 0.0, %v2230
      %v2232 = vpop.f32.mrf.mxu0
      %2233 = vdwg.mxu0
      %v2234 = vxor.u32 %v2231, 2147483648
      %v2235 = vmul.f32 %v2234, 1.442695
      %v2236 = vpow.pop %v2235
      %v2237 = vadd.f32 %v2236, 1.0
      %v2238 = vrcp.pop %v2237
      %v2239 = vmul.f32 %v2237, %v2238
      %v2240 = vsub.f32 1.0, %v2239
      %v2241 = vmul.f32 %v2238, %v2240
      %v2242 = vadd.f32 %v2238, %v2241
      %vm2243 = vweird.f32 %v2237
      %vm2244 = vweird.f32 %v2238
      %vm2245 = vmor %vm2243, %vm2244
      %v2246 = vsel %vm2245, %v2238, %v2242
      %v2247 = vand.u32 2147483647, %v2237
      %vm2248 = vcmp.eq.f32.partialorder %v2247, 8.507059e+37
      %v2249 = vand.u32 %v2237, 2147483648
      %v2250 = vor.u32 1.1754944e-38, %v2249
      %v2251 = vsel %vm2248, %v2250, %v2246
      %v2252 = vmul.f32 1.0, %v2251
      %v2253 = vmul.f32 %v2231, %v2252
      %v2254 = vpack.c.bf16 %v2253, %v2253
      %v2256 = vsel %vm991, %v2254, 0
      %2258 = vmatpush.bf16.msra.mxu0 0
      %2259 = vmatpush.bf16.msra.mxu0 0
      %2260 = vmatpush.bf16.msra.mxu0 0
      %2261 = vmatpush.bf16.msra.mxu0 0
      %2262 = vmatpush.bf16.msra.mxu0 0
      %2263 = vmatpush.bf16.msra.mxu0 0
      %2264 = vmatpush.bf16.msra.mxu0 %v1867
      %2265 = vmatpush.bf16.msra.mxu0 %v1866
      %2266 = vmatmul.bf16.gmra.mxu0 %v2256
      %v2267 = vpop.f32.mrf.mxu0
      %v2268 = vadd.f32 %v1856, %v2267
      %v2269 = vpop.f32.mrf.mxu0
      %2270 = vdwg.mxu0
      %v2271 = vxor.u32 %v2268, 2147483648
      %v2272 = vmul.f32 %v2271, 1.442695
      %v2273 = vpow.pop %v2272
      %v2274 = vadd.f32 %v2273, 1.0
      %v2275 = vrcp.pop %v2274
      %v2276 = vmul.f32 %v2274, %v2275
      %v2277 = vsub.f32 1.0, %v2276
      %v2278 = vmul.f32 %v2275, %v2277
      %v2279 = vadd.f32 %v2275, %v2278
      %vm2280 = vweird.f32 %v2274
      %vm2281 = vweird.f32 %v2275
      %vm2282 = vmor %vm2280, %vm2281
      %v2283 = vsel %vm2282, %v2275, %v2279
      %v2284 = vand.u32 2147483647, %v2274
      %vm2285 = vcmp.eq.f32.partialorder %v2284, 8.507059e+37
      %v2286 = vand.u32 %v2274, 2147483648
      %v2287 = vor.u32 1.1754944e-38, %v2286
      %v2288 = vsel %vm2285, %v2287, %v2283
      %v2289 = vmul.f32 1.0, %v2288
      %v2290 = vmul.f32 %v2268, %v2289
      %v2291 = vpack.c.bf16 %v2290, %v2290
      %v2293 = vsel %vm991, %v2291, 0
      %2295 = vmatpush.bf16.msra.mxu0 0
      %2296 = vmatpush.bf16.msra.mxu0 0
      %2297 = vmatpush.bf16.msra.mxu0 0
      %2298 = vmatpush.bf16.msra.mxu0 0
      %2299 = vmatpush.bf16.msra.mxu0 0
      %2300 = vmatpush.bf16.msra.mxu0 0
      %2301 = vmatpush.bf16.msra.mxu0 %v1926
      %2302 = vmatpush.bf16.msra.mxu0 %v1925
      %2303 = vmatmul.bf16.gmra.mxu0 %v2293
      %v2304 = vpop.f32.mrf.mxu0
      %v2305 = vadd.f32 %v1915, %v2304
      %v2306 = vpop.f32.mrf.mxu0
      %2307 = vdwg.mxu0
      %v2308 = vsel %vm991, %v2305, 0.0
      %2309 = vadd.xlane.f32.xlu0 %v2308
      %v2310 = vpop.xlane.xlu0 %2309
      %v2311 = vmul.f32 %v2310, %v1687
      %v2312 = vsub.f32 %v2305, %v2311
      %v2313 = vmul.f32 %v2312, %v2312
      %v2314 = vsel %vm991, %v2313, 0.0
      %2315 = vadd.xlane.f32.xlu0 %v2314
      %v2316 = vpop.xlane.xlu0 %2315
      %v2317 = vmul.f32 %v2316, %v1687
      %v2318 = vadd.f32 %v2317, 1e-05
      %v2319 = vrsqrt.pop %v2318
      %v2320 = vmul.f32 %v2319, %v2318
      %v2321 = vmul.f32 %v2320, %v2319
      %v2322 = vmul.f32 0.5, %v2321
      %v2323 = vsub.f32 1.5, %v2322
      %v2324 = vmul.f32 %v2319, %v2323
      %vm2325 = vweird.f32 %v2318
      %vm2326 = vweird.f32 %v2319
      %vm2327 = vmor %vm2325, %vm2326
      %v2328 = vsel %vm2327, %v2319, %v2324
      %v2329 = vmul.f32 %v2312, %v2328
      %v2330 = vmul.f32 %v2329, %v1970
      %v2331 = vadd.f32 %v2330, %v1976
      %v2332 = vadd.f32 %v2158, %v2331
      %v2333 = vmul.f32 %v2332, 0.5
      %v2334 = vpack.c.bf16 %v2333, %v2333
      %v2336 = vsel %vm991, %v2334, 0
      %2338 = vmatpush.bf16.msra.mxu0 0
      %2339 = vmatpush.bf16.msra.mxu0 0
      %2340 = vmatpush.bf16.msra.mxu0 0
      %2341 = vmatpush.bf16.msra.mxu0 0
      %2342 = vmatpush.bf16.msra.mxu0 0
      %2343 = vmatpush.bf16.msra.mxu0 0
      %2344 = vmatpush.bf16.msra.mxu0 %v1465
      %2345 = vmatpush.bf16.msra.mxu0 %v1464
      %2346 = vmatmul.bf16.gmra.mxu0 %v2336
      %v2347 = vpop.f32.mrf.mxu0
      %v2348 = vadd.f32 0.0, %v2347
      %v2349 = vpop.f32.mrf.mxu0
      %2350 = vdwg.mxu0
      %2351 = vmatpush.bf16.msra.mxu0 0
      %2352 = vmatpush.bf16.msra.mxu0 0
      %2353 = vmatpush.bf16.msra.mxu0 0
      %2354 = vmatpush.bf16.msra.mxu0 0
      %2355 = vmatpush.bf16.msra.mxu0 0
      %2356 = vmatpush.bf16.msra.mxu0 0
      %2357 = vmatpush.bf16.msra.mxu0 %v1497
      %2358 = vmatpush.bf16.msra.mxu0 %v1496
      %2359 = vmatmul.bf16.gmra.mxu0 %v2336
      %v2360 = vpop.f32.mrf.mxu0
      %v2361 = vadd.f32 0.0, %v2360
      %v2362 = vpop.f32.mrf.mxu0
      %2363 = vdwg.mxu0
      %v2364 = vpack.c.bf16 %v2348, %v2348
      %v2366 = vsel %vm991, %v2364, 0
      %2368 = vmatpush.bf16.xpose.msra.mxu0 0
      %2369 = vmatpush.bf16.xpose.msra.mxu0 0
      %2370 = vmatpush.bf16.xpose.msra.mxu0 0
      %2371 = vmatpush.bf16.xpose.msra.mxu0 0
      %2372 = vmatpush.bf16.xpose.msra.mxu0 0
      %2373 = vmatpush.bf16.xpose.msra.mxu0 0
      %2374 = vmatpush.bf16.xpose.msra.mxu0 0
      %2375 = vmatpush.bf16.xpose.msra.mxu0 %v2336
      %2376 = vmatmul.bf16.gmra.mxu0 %v2366
      %v2377 = vpop.f32.mrf.mxu0
      %v2378 = vadd.f32 %v1450, %v2377
      %v2379 = vpop.f32.mrf.mxu0
      %2380 = vdwg.mxu0
      %v2381 = vsel %vm1530, %v2378, -inf
      %2382 = vmax.xlane.f32.xlu0 %v2381
      %v2383 = vpop.xlane.xlu0 %2382
      %v2384 = vsub.f32 %v2378, %v2383
      %v2385 = vmul.f32 %v2384, 1.442695
      %v2386 = vpow.pop %v2385
      %v2387 = vsel %vm1530, %v2386, 0.0
      %2388 = vadd.xlane.f32.xlu0 %v2387
      %v2389 = vpop.xlane.xlu0 %2388
      %v2390 = vrcp.pop %v2389
      %v2391 = vmul.f32 %v2386, %v2390
      %v2392 = vpack.c.bf16 %v2391, %v2391
      %v2393 = vpack.c.bf16 %v2361, %v2361
      %v2395 = vsel %vm1530, %v2392, 0
      %v2398 = vsel %vm1547, %v2393, 0
      %2400 = vmatpush.bf16.msra.mxu0 0
      %2401 = vmatpush.bf16.msra.mxu0 0
      %2402 = vmatpush.bf16.msra.mxu0 0
      %2403 = vmatpush.bf16.msra.mxu0 0
      %2404 = vmatpush.bf16.msra.mxu0 0
      %2405 = vmatpush.bf16.msra.mxu0 0
      %2406 = vmatpush.bf16.msra.mxu0 0
      %2407 = vmatpush.bf16.msra.mxu0 %v2398
      %2408 = vmatmul.bf16.gmra.mxu0 %v2395
      %v2409 = vpop.f32.mrf.mxu0
      %v2410 = vadd.f32 0.0, %v2409
      %v2411 = vpop.f32.mrf.mxu0
      %2412 = vdwg.mxu0
      %v2413 = vxor.u32 %v2410, 2147483648
      %v2414 = vmul.f32 %v2413, 1.442695
      %v2415 = vpow.pop %v2414
      %v2416 = vadd.f32 %v2415, 1.0
      %v2417 = vrcp.pop %v2416
      %v2418 = vmul.f32 %v2416, %v2417
      %v2419 = vsub.f32 1.0, %v2418
      %v2420 = vmul.f32 %v2417, %v2419
      %v2421 = vadd.f32 %v2417, %v2420
      %vm2422 = vweird.f32 %v2416
      %vm2423 = vweird.f32 %v2417
      %vm2424 = vmor %vm2422, %vm2423
      %v2425 = vsel %vm2424, %v2417, %v2421
      %v2426 = vand.u32 2147483647, %v2416
      %vm2427 = vcmp.eq.f32.partialorder %v2426, 8.507059e+37
      %v2428 = vand.u32 %v2416, 2147483648
      %v2429 = vor.u32 1.1754944e-38, %v2428
      %v2430 = vsel %vm2427, %v2429, %v2425
      %v2431 = vmul.f32 1.0, %v2430
      %v2432 = vmul.f32 %v2410, %v2431
      %v2433 = vpack.c.bf16 %v2432, %v2432
      %v2435 = vsel %vm991, %v2433, 0
      %2437 = vmatpush.bf16.msra.mxu0 0
      %2438 = vmatpush.bf16.msra.mxu0 0
      %2439 = vmatpush.bf16.msra.mxu0 0
      %2440 = vmatpush.bf16.msra.mxu0 0
      %2441 = vmatpush.bf16.msra.mxu0 0
      %2442 = vmatpush.bf16.msra.mxu0 0
      %2443 = vmatpush.bf16.msra.mxu0 %v1602
      %2444 = vmatpush.bf16.msra.mxu0 %v1601
      %2445 = vmatmul.bf16.gmra.mxu0 %v2435
      %v2446 = vpop.f32.mrf.mxu0
      %v2447 = vadd.f32 %v1591, %v2446
      %v2448 = vpop.f32.mrf.mxu0
      %2449 = vdwg.mxu0
      %v2450 = vxor.u32 %v2447, 2147483648
      %v2451 = vmul.f32 %v2450, 1.442695
      %v2452 = vpow.pop %v2451
      %v2453 = vadd.f32 %v2452, 1.0
      %v2454 = vrcp.pop %v2453
      %v2455 = vmul.f32 %v2453, %v2454
      %v2456 = vsub.f32 1.0, %v2455
      %v2457 = vmul.f32 %v2454, %v2456
      %v2458 = vadd.f32 %v2454, %v2457
      %vm2459 = vweird.f32 %v2453
      %vm2460 = vweird.f32 %v2454
      %vm2461 = vmor %vm2459, %vm2460
      %v2462 = vsel %vm2461, %v2454, %v2458
      %v2463 = vand.u32 2147483647, %v2453
      %vm2464 = vcmp.eq.f32.partialorder %v2463, 8.507059e+37
      %v2465 = vand.u32 %v2453, 2147483648
      %v2466 = vor.u32 1.1754944e-38, %v2465
      %v2467 = vsel %vm2464, %v2466, %v2462
      %v2468 = vmul.f32 1.0, %v2467
      %v2469 = vmul.f32 %v2447, %v2468
      %v2470 = vpack.c.bf16 %v2469, %v2469
      %v2472 = vsel %vm991, %v2470, 0
      %2474 = vmatpush.bf16.msra.mxu0 0
      %2475 = vmatpush.bf16.msra.mxu0 0
      %2476 = vmatpush.bf16.msra.mxu0 0
      %2477 = vmatpush.bf16.msra.mxu0 0
      %2478 = vmatpush.bf16.msra.mxu0 0
      %2479 = vmatpush.bf16.msra.mxu0 0
      %2480 = vmatpush.bf16.msra.mxu0 %v1659
      %2481 = vmatpush.bf16.msra.mxu0 %v1658
      %2482 = vmatmul.bf16.gmra.mxu0 %v2472
      %v2483 = vpop.f32.mrf.mxu0
      %v2484 = vadd.f32 %v1648, %v2483
      %v2485 = vpop.f32.mrf.mxu0
      %2486 = vdwg.mxu0
      %v2487 = vsel %vm991, %v2484, 0.0
      %2488 = vadd.xlane.f32.xlu0 %v2487
      %v2489 = vpop.xlane.xlu0 %2488
      %v2490 = vmul.f32 %v2489, %v1687
      %v2491 = vsub.f32 %v2484, %v2490
      %v2492 = vmul.f32 %v2491, %v2491
      %v2493 = vsel %vm991, %v2492, 0.0
      %2494 = vadd.xlane.f32.xlu0 %v2493
      %v2495 = vpop.xlane.xlu0 %2494
      %v2496 = vmul.f32 %v2495, %v1687
      %v2497 = vadd.f32 %v2496, 1e-05
      %v2498 = vrsqrt.pop %v2497
      %v2499 = vmul.f32 %v2498, %v2497
      %v2500 = vmul.f32 %v2499, %v2498
      %v2501 = vmul.f32 0.5, %v2500
      %v2502 = vsub.f32 1.5, %v2501
      %v2503 = vmul.f32 %v2498, %v2502
      %vm2504 = vweird.f32 %v2497
      %vm2505 = vweird.f32 %v2498
      %vm2506 = vmor %vm2504, %vm2505
      %v2507 = vsel %vm2506, %v2498, %v2503
      %v2508 = vmul.f32 %v2491, %v2507
      %v2509 = vmul.f32 %v2508, %v1709
      %v2510 = vadd.f32 %v2509, %v1714
      %v2511 = vadd.f32 %v2510, 0.0
      %2512 = vmatpush.bf16.msra.mxu0 0
      %2513 = vmatpush.bf16.msra.mxu0 0
      %2514 = vmatpush.bf16.msra.mxu0 0
      %2515 = vmatpush.bf16.msra.mxu0 0
      %2516 = vmatpush.bf16.msra.mxu0 0
      %2517 = vmatpush.bf16.msra.mxu0 0
      %2518 = vmatpush.bf16.msra.mxu0 %v1732
      %2519 = vmatpush.bf16.msra.mxu0 %v1731
      %2520 = vmatmul.bf16.gmra.mxu0 %v2336
      %v2521 = vpop.f32.mrf.mxu0
      %v2522 = vadd.f32 0.0, %v2521
      %v2523 = vpop.f32.mrf.mxu0
      %2524 = vdwg.mxu0
      %2525 = vmatpush.bf16.msra.mxu0 0
      %2526 = vmatpush.bf16.msra.mxu0 0
      %2527 = vmatpush.bf16.msra.mxu0 0
      %2528 = vmatpush.bf16.msra.mxu0 0
      %2529 = vmatpush.bf16.msra.mxu0 0
      %2530 = vmatpush.bf16.msra.mxu0 0
      %2531 = vmatpush.bf16.msra.mxu0 %v1762
      %2532 = vmatpush.bf16.msra.mxu0 %v1761
      %2533 = vmatmul.bf16.gmra.mxu0 %v2336
      %v2534 = vpop.f32.mrf.mxu0
      %v2535 = vadd.f32 0.0, %v2534
      %v2536 = vpop.f32.mrf.mxu0
      %2537 = vdwg.mxu0
      %v2538 = vpack.c.bf16 %v2522, %v2522
      %v2540 = vsel %vm991, %v2538, 0
      %2542 = vmatpush.bf16.xpose.msra.mxu0 0
      %2543 = vmatpush.bf16.xpose.msra.mxu0 0
      %2544 = vmatpush.bf16.xpose.msra.mxu0 0
      %2545 = vmatpush.bf16.xpose.msra.mxu0 0
      %2546 = vmatpush.bf16.xpose.msra.mxu0 0
      %2547 = vmatpush.bf16.xpose.msra.mxu0 0
      %2548 = vmatpush.bf16.xpose.msra.mxu0 0
      %2549 = vmatpush.bf16.xpose.msra.mxu0 %v2336
      %2550 = vmatmul.bf16.gmra.mxu0 %v2540
      %v2551 = vpop.f32.mrf.mxu0
      %v2552 = vadd.f32 %v1450, %v2551
      %v2553 = vpop.f32.mrf.mxu0
      %2554 = vdwg.mxu0
      %v2555 = vsel %vm1530, %v2552, -inf
      %2556 = vmax.xlane.f32.xlu0 %v2555
      %v2557 = vpop.xlane.xlu0 %2556
      %v2558 = vsub.f32 %v2552, %v2557
      %v2559 = vmul.f32 %v2558, 1.442695
      %v2560 = vpow.pop %v2559
      %v2561 = vsel %vm1530, %v2560, 0.0
      %2562 = vadd.xlane.f32.xlu0 %v2561
      %v2563 = vpop.xlane.xlu0 %2562
      %v2564 = vrcp.pop %v2563
      %v2565 = vmul.f32 %v2560, %v2564
      %v2566 = vpack.c.bf16 %v2565, %v2565
      %v2567 = vpack.c.bf16 %v2535, %v2535
      %v2569 = vsel %vm1530, %v2566, 0
      %v2572 = vsel %vm1547, %v2567, 0
      %2574 = vmatpush.bf16.msra.mxu0 0
      %2575 = vmatpush.bf16.msra.mxu0 0
      %2576 = vmatpush.bf16.msra.mxu0 0
      %2577 = vmatpush.bf16.msra.mxu0 0
      %2578 = vmatpush.bf16.msra.mxu0 0
      %2579 = vmatpush.bf16.msra.mxu0 0
      %2580 = vmatpush.bf16.msra.mxu0 0
      %2581 = vmatpush.bf16.msra.mxu0 %v2572
      %2582 = vmatmul.bf16.gmra.mxu0 %v2569
      %v2583 = vpop.f32.mrf.mxu0
      %v2584 = vadd.f32 0.0, %v2583
      %v2585 = vpop.f32.mrf.mxu0
      %2586 = vdwg.mxu0
      %v2587 = vxor.u32 %v2584, 2147483648
      %v2588 = vmul.f32 %v2587, 1.442695
      %v2589 = vpow.pop %v2588
      %v2590 = vadd.f32 %v2589, 1.0
      %v2591 = vrcp.pop %v2590
      %v2592 = vmul.f32 %v2590, %v2591
      %v2593 = vsub.f32 1.0, %v2592
      %v2594 = vmul.f32 %v2591, %v2593
      %v2595 = vadd.f32 %v2591, %v2594
      %vm2596 = vweird.f32 %v2590
      %vm2597 = vweird.f32 %v2591
      %vm2598 = vmor %vm2596, %vm2597
      %v2599 = vsel %vm2598, %v2591, %v2595
      %v2600 = vand.u32 2147483647, %v2590
      %vm2601 = vcmp.eq.f32.partialorder %v2600, 8.507059e+37
      %v2602 = vand.u32 %v2590, 2147483648
      %v2603 = vor.u32 1.1754944e-38, %v2602
      %v2604 = vsel %vm2601, %v2603, %v2599
      %v2605 = vmul.f32 1.0, %v2604
      %v2606 = vmul.f32 %v2584, %v2605
      %v2607 = vpack.c.bf16 %v2606, %v2606
      %v2609 = vsel %vm991, %v2607, 0
      %2611 = vmatpush.bf16.msra.mxu0 0
      %2612 = vmatpush.bf16.msra.mxu0 0
      %2613 = vmatpush.bf16.msra.mxu0 0
      %2614 = vmatpush.bf16.msra.mxu0 0
      %2615 = vmatpush.bf16.msra.mxu0 0
      %2616 = vmatpush.bf16.msra.mxu0 0
      %2617 = vmatpush.bf16.msra.mxu0 %v1867
      %2618 = vmatpush.bf16.msra.mxu0 %v1866
      %2619 = vmatmul.bf16.gmra.mxu0 %v2609
      %v2620 = vpop.f32.mrf.mxu0
      %v2621 = vadd.f32 %v1856, %v2620
      %v2622 = vpop.f32.mrf.mxu0
      %2623 = vdwg.mxu0
      %v2624 = vxor.u32 %v2621, 2147483648
      %v2625 = vmul.f32 %v2624, 1.442695
      %v2626 = vpow.pop %v2625
      %v2627 = vadd.f32 %v2626, 1.0
      %v2628 = vrcp.pop %v2627
      %v2629 = vmul.f32 %v2627, %v2628
      %v2630 = vsub.f32 1.0, %v2629
      %v2631 = vmul.f32 %v2628, %v2630
      %v2632 = vadd.f32 %v2628, %v2631
      %vm2633 = vweird.f32 %v2627
      %vm2634 = vweird.f32 %v2628
      %vm2635 = vmor %vm2633, %vm2634
      %v2636 = vsel %vm2635, %v2628, %v2632
      %v2637 = vand.u32 2147483647, %v2627
      %vm2638 = vcmp.eq.f32.partialorder %v2637, 8.507059e+37
      %v2639 = vand.u32 %v2627, 2147483648
      %v2640 = vor.u32 1.1754944e-38, %v2639
      %v2641 = vsel %vm2638, %v2640, %v2636
      %v2642 = vmul.f32 1.0, %v2641
      %v2643 = vmul.f32 %v2621, %v2642
      %v2644 = vpack.c.bf16 %v2643, %v2643
      %v2646 = vsel %vm991, %v2644, 0
      %2648 = vmatpush.bf16.msra.mxu0 0
      %2649 = vmatpush.bf16.msra.mxu0 0
      %2650 = vmatpush.bf16.msra.mxu0 0
      %2651 = vmatpush.bf16.msra.mxu0 0
      %2652 = vmatpush.bf16.msra.mxu0 0
      %2653 = vmatpush.bf16.msra.mxu0 0
      %2654 = vmatpush.bf16.msra.mxu0 %v1926
      %2655 = vmatpush.bf16.msra.mxu0 %v1925
      %2656 = vmatmul.bf16.gmra.mxu0 %v2646
      %v2657 = vpop.f32.mrf.mxu0
      %v2658 = vadd.f32 %v1915, %v2657
      %v2659 = vpop.f32.mrf.mxu0
      %2660 = vdwg.mxu0
      %v2661 = vsel %vm991, %v2658, 0.0
      %2662 = vadd.xlane.f32.xlu0 %v2661
      %v2663 = vpop.xlane.xlu0 %2662
      %v2664 = vmul.f32 %v2663, %v1687
      %v2665 = vsub.f32 %v2658, %v2664
      %v2666 = vmul.f32 %v2665, %v2665
      %v2667 = vsel %vm991, %v2666, 0.0
      %2668 = vadd.xlane.f32.xlu0 %v2667
      %v2669 = vpop.xlane.xlu0 %2668
      %v2670 = vmul.f32 %v2669, %v1687
      %v2671 = vadd.f32 %v2670, 1e-05
      %v2672 = vrsqrt.pop %v2671
      %v2673 = vmul.f32 %v2672, %v2671
      %v2674 = vmul.f32 %v2673, %v2672
      %v2675 = vmul.f32 0.5, %v2674
      %v2676 = vsub.f32 1.5, %v2675
      %v2677 = vmul.f32 %v2672, %v2676
      %vm2678 = vweird.f32 %v2671
      %vm2679 = vweird.f32 %v2672
      %vm2680 = vmor %vm2678, %vm2679
      %v2681 = vsel %vm2680, %v2672, %v2677
      %v2682 = vmul.f32 %v2665, %v2681
      %v2683 = vmul.f32 %v2682, %v1970
      %v2684 = vadd.f32 %v2683, %v1976
      %v2685 = vadd.f32 %v2511, %v2684
      %v2686 = vmul.f32 %v2685, 0.5
      %v2687 = vpack.c.bf16 %v2686, %v2686
      %v2688 = vld [vmem:[%s20] sm:$0xf]
      %v2689 = vld [vmem:[%s20 + $0x4] sm:$0xf]
      %v2690 = vld [vmem:[%s20 + $0x8] sm:$0xf]
      %v2691 = vld [vmem:[%s20 + $0xc] sm:$0xf]
      %v2692 = vld [vmem:[%s21] sm:$0x1]
      %v2694 = vperm.slane %v2692, 0
      %v2700 = vunpack.c.l.b16 %v2688
      %v2701 = vunpack.c.l.b16 %v2689
      %v2702 = vunpack.c.l.b16 %v2690
      %v2703 = vunpack.c.l.b16 %v2691
      %v2704 = vpack.c.b16 %v2701, %v2700
      %v2705 = vpack.c.b16 %v2703, %v2702
      %v2709 = vsel %vm991, %v2687, 0
      %2711 = vmatpush.bf16.msra.mxu0 0
      %2712 = vmatpush.bf16.msra.mxu0 0
      %2713 = vmatpush.bf16.msra.mxu0 0
      %2714 = vmatpush.bf16.msra.mxu0 0
      %2715 = vmatpush.bf16.msra.mxu0 0
      %2716 = vmatpush.bf16.msra.mxu0 0
      %2717 = vmatpush.bf16.msra.mxu0 %v2705
      %2718 = vmatpush.bf16.msra.mxu0 %v2704
      %2719 = vmatmul.bf16.gmra.mxu0 %v2709
      %v2720 = vpop.f32.mrf.mxu0
      %v2721 = vadd.f32 %v2694, %v2720
      %v2722 = vpop.f32.mrf.mxu0
      %2723 = vdwg.mxu0
      %2724 = vst [vmem:[%s705] sm:$0xff] %v2721
      %p2725 = scmp.lt.s32.totalorder %s33, 1
      %s2726 = scalar_select %p2725, %s33, 1
      %s2727 = smul.addr %s2726, 8
      %s2728 = scalar_lea.vmem %s22, %s2727
      // Predicated region
      $region109: #{distributed_dot_gat_forward.1} parent=107 // pred_check
        %p2729 = pneg %p523
      $region110: #{distributed_dot_gat_forward.1} parent=107 // pred_check_branch
        %2731 = sbr.rel (%p2729) target = $region112
      $region111: #{distributed_dot_gat_forward.1} parent=107 // pred_region
        _
      $region112: #{distributed_dot_gat_forward.1} parent=107 // pred_fallthru
        _
    $region108: #{distributed_dot_gat_forward.1} parent=5 // pred_fallthru
      _
    %p2732 = scmp.le.s32.totalorder 2, %s28
    // Predicated region
    $region113: #{distributed_dot_gat_forward.1} parent=5 // pred_check
      %p2733 = pneg %p2732
    $region114: #{distributed_dot_gat_forward.1} parent=5 // pred_check_branch
      %2735 = sbr.rel (%p2733) target = $region116
    $region115: #{distributed_dot_gat_forward.1} parent=5 // pred_region
      %s2736 = ssub.s32 %s28, 2
      // Predicated region
      $region117: #{distributed_dot_gat_forward.1} parent=115 // pred_check
        %p2737 = pneg %p529
      $region118: #{distributed_dot_gat_forward.1} parent=115 // pred_check_branch
        %2739 = sbr.rel (%p2737) target = $region120
      $region119: #{distributed_dot_gat_forward.1} parent=115 // pred_region
        %p2740 = scmp.lt.s32.totalorder %s34, 1
        %s2741 = scalar_select %p2740, %s34, 1
        %s2742 = smul.addr %s2741, 8
        %s2743 = scalar_lea.vmem %s22, %s2742
      $region120: #{distributed_dot_gat_forward.1} parent=115 // pred_fallthru
        _
    $region116: #{distributed_dot_gat_forward.1} parent=5 // pred_fallthru
      _
  $region6: #{distributed_dot_gat_forward.1} parent=0 // loop_footer
    %s32 = sadd.s32 1, %s28
  $region7: #{distributed_dot_gat_forward.1} parent=0 // loop_footer_branch
    %27 = sbr.rel target = $region3
  $region8: #{distributed_dot_gat_forward.1} parent=0 // loop_exit
    _

</llo_original>
